<compile_context>
chip_gen: v6e
topology: v6e:2x2x1
jax: 0.10.0
libtpu: 0.0.40
codegen_flags: <defaults>
</compile_context>

<pallas_src>
import functools
import math

import jax
import jax.numpy as jnp
from jax.experimental import pallas as pl
from jax.experimental.pallas import tpu as pltpu

CHANNELS = 1
IMG_SIZE = 32
IMG_FLAT = CHANNELS * IMG_SIZE * IMG_SIZE  # 1024
HIDDEN = 512
LATENT_DIM = 10
HEAD_PAD = 128            # lane-padded width of each head (mu / logvar)
HEAD_W = 2 * HEAD_PAD     # packed (mu | logvar) head width
BN_EPS = 1e-5
LRELU_SLOPE = 0.2


def _leaky_relu(x, slope=LRELU_SLOPE):
    # slope < 1  =>  max(x, slope*x) == leaky_relu(x); mul+max beats cmp+select.
    return jnp.maximum(x, slope * x)


# --------------------------------------------------------------------------
# Stage 1: hidden activations + BatchNorm batch statistics (cross-tile accum)
# --------------------------------------------------------------------------
def _stage1_kernel(x_ref, w1_ref, b1_ref, w2_ref, h2_ref, sum_ref, sq_ref):
    i = pl.program_id(0)

    x = x_ref[...].astype(jnp.bfloat16)                                # (TB, 1024)
    h = jnp.dot(x, w1_ref[...], preferred_element_type=jnp.float32)
    h = _leaky_relu(h + b1_ref[...])
    # b2 intentionally omitted: BatchNorm with batch statistics makes a
    # per-feature constant shift a no-op on the normalized output.
    h2 = jnp.dot(h.astype(jnp.bfloat16), w2_ref[...],
                 preferred_element_type=jnp.float32)                   # (TB, 512)
    h2_ref[...] = h2

    @pl.when(i == 0)
    def _():
        sum_ref[...] = jnp.zeros_like(sum_ref)
        sq_ref[...] = jnp.zeros_like(sq_ref)

    # Single-pass sum / sum-of-squares (f32); fine at these activation scales.
    sum_ref[...] += jnp.sum(h2, axis=0, keepdims=True)
    sq_ref[...] += jnp.sum(h2 * h2, axis=0, keepdims=True)


# --------------------------------------------------------------------------
# Stage 2: BN (fused scale/shift) + LeakyReLU + fused head + reparameterization
# --------------------------------------------------------------------------
def _stage2_kernel(h2_ref, sum_ref, sq_ref, gamma_ref, beta_ref,
                   wh_ref, bh_ref, eps_ref, z_ref, *, batch):
    inv_b = 1.0 / batch
    mean = sum_ref[...] * inv_b                                        # (1, 512)
    var = jnp.maximum(sq_ref[...] * inv_b - mean * mean, 0.0)          # biased var
    scale = gamma_ref[...] * jax.lax.rsqrt(var + BN_EPS)               # gamma folded
    shift = beta_ref[...] - mean * scale

    h = _leaky_relu(h2_ref[...] * scale + shift)                       # (TB, 512)

    # One fused, lane-padded head matmul: lanes 0:128 -> mu, 128:256 -> logvar.
    y = jnp.dot(h.astype(jnp.bfloat16), wh_ref[...],
                preferred_element_type=jnp.float32) + bh_ref[...]      # (TB, 256)
    mu = y[:, :HEAD_PAD]
    logvar = y[:, HEAD_PAD:]

    # z = eps * exp(logvar / 2) + mu  (lane-dense (TB, 128) store)
    z_ref[...] = eps_ref[...] * jnp.exp(logvar * 0.5) + mu


# --------------------------------------------------------------------------
# Wrapper
# --------------------------------------------------------------------------
def _pick_batch_tile(batch):
    for tb in (256, 128, 64, 32, 16, 8):
        if batch % tb == 0:
            return tb
    return batch  # small / odd batch: single whole-batch tile


def _pack_params(params):
    """bf16 weights + fused, lane-padded (mu | logvar) head."""
    w_head = jnp.zeros((HIDDEN, HEAD_W), jnp.float32)
    w_head = w_head.at[:, :LATENT_DIM].set(params["wmu"])
    w_head = w_head.at[:, HEAD_PAD:HEAD_PAD + LATENT_DIM].set(params["wlv"])
    b_head = jnp.zeros((1, HEAD_W), jnp.float32)
    b_head = b_head.at[:, :LATENT_DIM].set(params["bmu"])
    b_head = b_head.at[:, HEAD_PAD:HEAD_PAD + LATENT_DIM].set(params["blv"])
    return dict(
        w1=params["w1"].astype(jnp.bfloat16),
        b1=params["b1"],
        w2=params["w2"].astype(jnp.bfloat16),
        gamma=params["gamma"],
        beta=params["beta"],
        w_head=w_head.astype(jnp.bfloat16),
        b_head=b_head,
    )


@functools.partial(jax.jit, static_argnames=("batch_tile",))
def encoder_forward(img, params, eps, batch_tile=None):
    """img: (B, 1, 32, 32) float32.  eps: (B, LATENT_DIM) N(0,1).  Returns z (B, 10)."""
    batch = img.shape[0]
    tb = batch_tile if batch_tile is not None else _pick_batch_tile(batch)
    assert batch % tb == 0, "batch tile must divide batch (BatchNorm statistics)"
    n_tiles = batch // tb

    x = img.reshape(batch, IMG_FLAT)  # row-major flatten, same as torch .view
    eps_pad = jnp.pad(eps.astype(jnp.float32),
                      ((0, 0), (0, HEAD_PAD - LATENT_DIM)))
    p = _pack_params(params)

    const = lambda shape: pl.BlockSpec(shape, lambda i: (0, 0))  # VMEM-resident
    tiled = lambda shape: pl.BlockSpec(shape, lambda i: (i, 0))  # per batch tile

    # ---- stage 1: hidden activations + BN statistics ----
    h2, ssum, ssq = pl.pallas_call(
        _stage1_kernel,
        grid=(n_tiles,),
        in_specs=[
            tiled((tb, IMG_FLAT)),
            const((IMG_FLAT, HIDDEN)),   # W1 resident across the whole grid
            const((1, HIDDEN)),
            const((HIDDEN, HIDDEN)),     # W2 resident across the whole grid
        ],
        out_specs=[
            tiled((tb, HIDDEN)),
            const((1, HIDDEN)),          # cross-tile sum accumulator
            const((1, HIDDEN)),          # cross-tile sum-of-squares accumulator
        ],
        out_shape=[
            jax.ShapeDtypeStruct((batch, HIDDEN), jnp.float32),
            jax.ShapeDtypeStruct((1, HIDDEN), jnp.float32),
            jax.ShapeDtypeStruct((1, HIDDEN), jnp.float32),
        ],
        compiler_params=pltpu.CompilerParams(
            dimension_semantics=("arbitrary",)),  # accumulator -> not parallel
    )(x, p["w1"], p["b1"], p["w2"])

    # ---- stage 2: BN + LeakyReLU + fused head + reparameterization ----
    z_pad = pl.pallas_call(
        functools.partial(_stage2_kernel, batch=batch),
        grid=(n_tiles,),
        in_specs=[
            tiled((tb, HIDDEN)),
            const((1, HIDDEN)),
            const((1, HIDDEN)),
            const((1, HIDDEN)),
            const((1, HIDDEN)),
            const((HIDDEN, HEAD_W)),
            const((1, HEAD_W)),
            tiled((tb, HEAD_PAD)),
        ],
        out_specs=tiled((tb, HEAD_PAD)),
        out_shape=jax.ShapeDtypeStruct((batch, HEAD_PAD), jnp.float32),
        compiler_params=pltpu.CompilerParams(
            dimension_semantics=("parallel",)),   # independent tiles -> megacore
    )(h2, ssum, ssq, p["gamma"], p["beta"], p["w_head"], p["b_head"], eps_pad)

    return z_pad[:, :LATENT_DIM]


# --------------------------------------------------------------------------
# Parameter init (matches PyTorch defaults) and pure-JAX f32 reference
# --------------------------------------------------------------------------
def _linear_init(key, fan_in, fan_out):
    """nn.Linear default: U(-1/sqrt(fan_in), 1/sqrt(fan_in)); stored (in, out)."""
    kw, kb = jax.random.split(key)
    bound = 1.0 / math.sqrt(fan_in)
    w = jax.random.uniform(kw, (fan_in, fan_out), jnp.float32, -bound, bound)
    b = jax.random.uniform(kb, (1, fan_out), jnp.float32, -bound, bound)
    return w, b


def init_params(key):
    k1, k2, k3, k4 = jax.random.split(key, 4)
    w1, b1 = _linear_init(k1, IMG_FLAT, HIDDEN)
    w2, b2 = _linear_init(k2, HIDDEN, HIDDEN)
    wmu, bmu = _linear_init(k3, HIDDEN, LATENT_DIM)
    wlv, blv = _linear_init(k4, HIDDEN, LATENT_DIM)
    return {
        "w1": w1, "b1": b1,
        "w2": w2, "b2": b2,
        "gamma": jnp.ones((1, HIDDEN), jnp.float32),   # BatchNorm1d defaults
        "beta": jnp.zeros((1, HIDDEN), jnp.float32),
        "wmu": wmu, "bmu": bmu,
        "wlv": wlv, "blv": blv,
    }


def encoder_reference(img, params, eps):
    """f32 reference mirroring the PyTorch module (training-mode BatchNorm)."""
    x = img.reshape(img.shape[0], -1)
    h = x @ params["w1"] + params["b1"]
    h = jnp.where(h > 0, h, LRELU_SLOPE * h)
    h = h @ params["w2"] + params["b2"]
    mean = jnp.mean(h, axis=0, keepdims=True)
    var = jnp.mean((h - mean) ** 2, axis=0, keepdims=True)
    h = (h - mean) * jax.lax.rsqrt(var + BN_EPS)
    h = h * params["gamma"] + params["beta"]
    h = jnp.where(h > 0, h, LRELU_SLOPE * h)
    mu = h @ params["wmu"] + params["bmu"]
    logvar = h @ params["wlv"] + params["blv"]
    return eps * jnp.exp(logvar * 0.5) + mu


if __name__ == "__main__":
    key = jax.random.PRNGKey(0)
    k_img1, k_eps1, k_img2, k_eps2, k_params = jax.random.split(key, 5)
    params = init_params(k_params)

    # Small single-tile case (B=4 -> whole batch in one block).
    B1 = 4
    img1 = jax.random.normal(k_img1, (B1, CHANNELS, IMG_SIZE, IMG_SIZE), jnp.float32)
    eps1 = jax.random.normal(k_eps1, (B1, LATENT_DIM), jnp.float32)
    z1 = jax.block_until_ready(encoder_forward(img1, params, eps1))
    assert z1.shape == (B1, LATENT_DIM) and z1.dtype == jnp.float32
    assert bool(jnp.isfinite(z1).all())

    # Multi-tile case exercising the cross-tile BatchNorm accumulator (4 tiles of 8).
    B2 = 32
    img2 = jax.random.normal(k_img2, (B2, CHANNELS, IMG_SIZE, IMG_SIZE), jnp.float32)
    eps2 = jax.random.normal(k_eps2, (B2, LATENT_DIM), jnp.float32)
    z2 = jax.block_until_ready(encoder_forward(img2, params, eps2, batch_tile=8))
    assert z2.shape == (B2, LATENT_DIM)
    assert bool(jnp.isfinite(z2).all())

    # Sanity check against the f32 reference (loose tolerance: bf16 weights/activations).
    err = max(
        float(jnp.max(jnp.abs(z1 - encoder_reference(img1, params, eps1)))),
        float(jnp.max(jnp.abs(z2 - encoder_reference(img2, params, eps2)))),
    )
    assert err < 0.1, f"kernel vs reference mismatch: {err}"

    print("KERNEL_OK")
</pallas_src>

<mosaic_0001>
module attributes {stable_mosaic.version = 11 : i64} {
  func.func @_stage1_kernel(%arg0: i32, %arg1: memref<4x1024xf32, #tpu.memory_space<vmem>>, %arg2: memref<1024x512xbf16, #tpu.memory_space<vmem>>, %arg3: memref<1x512xf32, #tpu.memory_space<vmem>>, %arg4: memref<512x512xbf16, #tpu.memory_space<vmem>>, %arg5: memref<4x512xf32, #tpu.memory_space<vmem>>, %arg6: memref<1x512xf32, #tpu.memory_space<vmem>>, %arg7: memref<1x512xf32, #tpu.memory_space<vmem>>) attributes {dimension_semantics = [#tpu.dimension_semantics<arbitrary>], iteration_bounds = array<i64: 1>, scalar_prefetch = 0 : i64, scratch_operands = 0 : i64, tpu.core_type = #tpu.core_type<tc>, window_params = [{transform_indices = @transform_0, window_bounds = array<i64: 4, 1024>}, {pipeline_mode = #tpu.pipeline_mode<synchronous>, transform_indices = @transform_1, window_bounds = array<i64: 1024, 512>}, {pipeline_mode = #tpu.pipeline_mode<synchronous>, transform_indices = @transform_2, window_bounds = array<i64: 1, 512>}, {pipeline_mode = #tpu.pipeline_mode<synchronous>, transform_indices = @transform_3, window_bounds = array<i64: 512, 512>}, {transform_indices = @transform_4, window_bounds = array<i64: 4, 512>}, {pipeline_mode = #tpu.pipeline_mode<synchronous>, transform_indices = @transform_5, window_bounds = array<i64: 1, 512>}, {pipeline_mode = #tpu.pipeline_mode<synchronous>, transform_indices = @transform_6, window_bounds = array<i64: 1, 512>}]} {
    %c0 = arith.constant 0 : index
    %c0_0 = arith.constant 0 : index
    %0 = vector.load %arg1[%c0, %c0_0] : memref<4x1024xf32, #tpu.memory_space<vmem>>, vector<4x1024xf32>
    %1 = arith.truncf %0 : vector<4x1024xf32> to vector<4x1024xbf16>
    %c0_1 = arith.constant 0 : index
    %c0_2 = arith.constant 0 : index
    %2 = vector.load %arg2[%c0_1, %c0_2] : memref<1024x512xbf16, #tpu.memory_space<vmem>>, vector<1024x512xbf16>
    %cst = arith.constant dense<0.000000e+00> : vector<4x512xf32>
    %3 = tpu.matmul %1, %2, %cst {dimension_numbers = #tpu.dot_dimension_numbers<[1], [0], [0], [1], [0, 0, 1, 1], [], []>} : vector<4x1024xbf16>, vector<1024x512xbf16>, vector<4x512xf32> -> vector<4x512xf32>
    %c0_3 = arith.constant 0 : index
    %c0_4 = arith.constant 0 : index
    %4 = vector.load %arg3[%c0_3, %c0_4] : memref<1x512xf32, #tpu.memory_space<vmem>>, vector<1x512xf32>
    %5 = vector.broadcast %4 : vector<1x512xf32> to vector<4x512xf32>
    %6 = arith.addf %3, %5 : vector<4x512xf32>
    %cst_5 = arith.constant 2.000000e-01 : f32
    %7 = vector.broadcast %cst_5 : f32 to vector<4x512xf32>
    %8 = arith.mulf %7, %6 : vector<4x512xf32>
    %9 = arith.maximumf %6, %8 : vector<4x512xf32>
    %10 = arith.truncf %9 : vector<4x512xf32> to vector<4x512xbf16>
    %c0_6 = arith.constant 0 : index
    %c0_7 = arith.constant 0 : index
    %11 = vector.load %arg4[%c0_6, %c0_7] : memref<512x512xbf16, #tpu.memory_space<vmem>>, vector<512x512xbf16>
    %cst_8 = arith.constant dense<0.000000e+00> : vector<4x512xf32>
    %12 = tpu.matmul %10, %11, %cst_8 {dimension_numbers = #tpu.dot_dimension_numbers<[1], [0], [0], [1], [0, 0, 1, 1], [], []>} : vector<4x512xbf16>, vector<512x512xbf16>, vector<4x512xf32> -> vector<4x512xf32>
    %c0_9 = arith.constant 0 : index
    %c0_10 = arith.constant 0 : index
    %13 = vector.load %arg5[%c0_9, %c0_10] : memref<4x512xf32, #tpu.memory_space<vmem>>, vector<4x512xf32>
    tpu.vector_store %arg5[%c0_9, %c0_10], %12 {strides = array<i32>} : memref<4x512xf32, #tpu.memory_space<vmem>>, vector<4x512xf32>,
    %c0_i32 = arith.constant 0 : i32
    %14 = arith.cmpi eq, %arg0, %c0_i32 : i32
    %15 = arith.extui %14 : i1 to i32
    %c0_i32_11 = arith.constant 0 : i32
    %16 = arith.cmpi ne, %15, %c0_i32_11 : i32
    scf.if %16 {
      %cst_22 = arith.constant 0.000000e+00 : f32
      %28 = vector.broadcast %cst_22 : f32 to vector<1x512xf32>
      %c0_23 = arith.constant 0 : index
      %c0_24 = arith.constant 0 : index
      %29 = vector.load %arg6[%c0_23, %c0_24] : memref<1x512xf32, #tpu.memory_space<vmem>>, vector<1x512xf32>
      tpu.vector_store %arg6[%c0_23, %c0_24], %28 {strides = array<i32>} : memref<1x512xf32, #tpu.memory_space<vmem>>, vector<1x512xf32>,
      %cst_25 = arith.constant 0.000000e+00 : f32
      %30 = vector.broadcast %cst_25 : f32 to vector<1x512xf32>
      %c0_26 = arith.constant 0 : index
      %c0_27 = arith.constant 0 : index
      %31 = vector.load %arg7[%c0_26, %c0_27] : memref<1x512xf32, #tpu.memory_space<vmem>>, vector<1x512xf32>
      tpu.vector_store %arg7[%c0_26, %c0_27], %30 {strides = array<i32>} : memref<1x512xf32, #tpu.memory_space<vmem>>, vector<1x512xf32>,
    } else {
    }
    %c0_12 = arith.constant 0 : index
    %c0_13 = arith.constant 0 : index
    %17 = vector.load %arg6[%c0_12, %c0_13] : memref<1x512xf32, #tpu.memory_space<vmem>>, vector<1x512xf32>
    %cst_14 = arith.constant dense<0.000000e+00> : vector<512xf32>
    %18 = vector.multi_reduction <add>, %12, %cst_14 [0] : vector<4x512xf32> to vector<512xf32>
    %19 = vector.shape_cast %18 : vector<512xf32> to vector<1x512xf32>
    %20 = arith.addf %17, %19 : vector<1x512xf32>
    %c0_15 = arith.constant 0 : index
    %c0_16 = arith.constant 0 : index
    %21 = vector.load %arg6[%c0_15, %c0_16] : memref<1x512xf32, #tpu.memory_space<vmem>>, vector<1x512xf32>
    tpu.vector_store %arg6[%c0_15, %c0_16], %20 {strides = array<i32>} : memref<1x512xf32, #tpu.memory_space<vmem>>, vector<1x512xf32>,
    %c0_17 = arith.constant 0 : index
    %c0_18 = arith.constant 0 : index
    %22 = vector.load %arg7[%c0_17, %c0_18] : memref<1x512xf32, #tpu.memory_space<vmem>>, vector<1x512xf32>
    %23 = arith.mulf %12, %12 : vector<4x512xf32>
    %cst_19 = arith.constant dense<0.000000e+00> : vector<512xf32>
    %24 = vector.multi_reduction <add>, %23, %cst_19 [0] : vector<4x512xf32> to vector<512xf32>
    %25 = vector.shape_cast %24 : vector<512xf32> to vector<1x512xf32>
    %26 = arith.addf %22, %25 : vector<1x512xf32>
    %c0_20 = arith.constant 0 : index
    %c0_21 = arith.constant 0 : index
    %27 = vector.load %arg7[%c0_20, %c0_21] : memref<1x512xf32, #tpu.memory_space<vmem>>, vector<1x512xf32>
    tpu.vector_store %arg7[%c0_20, %c0_21], %26 {strides = array<i32>} : memref<1x512xf32, #tpu.memory_space<vmem>>, vector<1x512xf32>,
    return
  }
  func.func @transform_0(%arg0: i32) -> (i32, i32) {
    %c0_i32 = arith.constant 0 : i32
    %c0_i32_0 = arith.constant 0 : i32
    return %arg0, %c0_i32 : i32, i32
  }
  func.func @transform_1(%arg0: i32) -> (i32, i32) {
    %c0_i32 = arith.constant 0 : i32
    %c0_i32_0 = arith.constant 0 : i32
    %c0_i32_1 = arith.constant 0 : i32
    return %c0_i32, %c0_i32_0 : i32, i32
  }
  func.func @transform_2(%arg0: i32) -> (i32, i32) {
    %c0_i32 = arith.constant 0 : i32
    %c0_i32_0 = arith.constant 0 : i32
    %c0_i32_1 = arith.constant 0 : i32
    return %c0_i32, %c0_i32_0 : i32, i32
  }
  func.func @transform_3(%arg0: i32) -> (i32, i32) {
    %c0_i32 = arith.constant 0 : i32
    %c0_i32_0 = arith.constant 0 : i32
    %c0_i32_1 = arith.constant 0 : i32
    return %c0_i32, %c0_i32_0 : i32, i32
  }
  func.func @transform_4(%arg0: i32) -> (i32, i32) {
    %c0_i32 = arith.constant 0 : i32
    %c0_i32_0 = arith.constant 0 : i32
    return %arg0, %c0_i32 : i32, i32
  }
  func.func @transform_5(%arg0: i32) -> (i32, i32) {
    %c0_i32 = arith.constant 0 : i32
    %c0_i32_0 = arith.constant 0 : i32
    %c0_i32_1 = arith.constant 0 : i32
    return %c0_i32, %c0_i32_0 : i32, i32
  }
  func.func @transform_6(%arg0: i32) -> (i32, i32) {
    %c0_i32 = arith.constant 0 : i32
    %c0_i32_0 = arith.constant 0 : i32
    %c0_i32_1 = arith.constant 0 : i32
    return %c0_i32, %c0_i32_0 : i32, i32
  }
}

module attributes {stable_mosaic.version = 11 : i64} {
  func.func @_stage2_kernel(%arg0: i32, %arg1: memref<4x512xf32, #tpu.memory_space<vmem>>, %arg2: memref<1x512xf32, #tpu.memory_space<vmem>>, %arg3: memref<1x512xf32, #tpu.memory_space<vmem>>, %arg4: memref<1x512xf32, #tpu.memory_space<vmem>>, %arg5: memref<1x512xf32, #tpu.memory_space<vmem>>, %arg6: memref<512x256xbf16, #tpu.memory_space<vmem>>, %arg7: memref<1x256xf32, #tpu.memory_space<vmem>>, %arg8: memref<4x128xf32, #tpu.memory_space<vmem>>, %arg9: memref<4x128xf32, #tpu.memory_space<vmem>>) attributes {dimension_semantics = [#tpu.dimension_semantics<parallel>], iteration_bounds = array<i64: 1>, scalar_prefetch = 0 : i64, scratch_operands = 0 : i64, tpu.core_type = #tpu.core_type<tc>, window_params = [{transform_indices = @transform_0, window_bounds = array<i64: 4, 512>}, {pipeline_mode = #tpu.pipeline_mode<synchronous>, transform_indices = @transform_1, window_bounds = array<i64: 1, 512>}, {pipeline_mode = #tpu.pipeline_mode<synchronous>, transform_indices = @transform_2, window_bounds = array<i64: 1, 512>}, {pipeline_mode = #tpu.pipeline_mode<synchronous>, transform_indices = @transform_3, window_bounds = array<i64: 1, 512>}, {pipeline_mode = #tpu.pipeline_mode<synchronous>, transform_indices = @transform_4, window_bounds = array<i64: 1, 512>}, {pipeline_mode = #tpu.pipeline_mode<synchronous>, transform_indices = @transform_5, window_bounds = array<i64: 512, 256>}, {pipeline_mode = #tpu.pipeline_mode<synchronous>, transform_indices = @transform_6, window_bounds = array<i64: 1, 256>}, {transform_indices = @transform_7, window_bounds = array<i64: 4, 128>}, {transform_indices = @transform_8, window_bounds = array<i64: 4, 128>}]} {
    %c0 = arith.constant 0 : index
    %c0_0 = arith.constant 0 : index
    %0 = vector.load %arg2[%c0, %c0_0] : memref<1x512xf32, #tpu.memory_space<vmem>>, vector<1x512xf32>
    %cst = arith.constant 2.500000e-01 : f32
    %1 = vector.broadcast %cst : f32 to vector<1x512xf32>
    %2 = arith.mulf %0, %1 : vector<1x512xf32>
    %c0_1 = arith.constant 0 : index
    %c0_2 = arith.constant 0 : index
    %3 = vector.load %arg3[%c0_1, %c0_2] : memref<1x512xf32, #tpu.memory_space<vmem>>, vector<1x512xf32>
    %cst_3 = arith.constant 2.500000e-01 : f32
    %4 = vector.broadcast %cst_3 : f32 to vector<1x512xf32>
    %5 = arith.mulf %3, %4 : vector<1x512xf32>
    %6 = arith.mulf %2, %2 : vector<1x512xf32>
    %7 = arith.subf %5, %6 : vector<1x512xf32>
    %cst_4 = arith.constant 0.000000e+00 : f32
    %8 = vector.broadcast %cst_4 : f32 to vector<1x512xf32>
    %9 = arith.maximumf %7, %8 : vector<1x512xf32>
    %c0_5 = arith.constant 0 : index
    %c0_6 = arith.constant 0 : index
    %10 = vector.load %arg4[%c0_5, %c0_6] : memref<1x512xf32, #tpu.memory_space<vmem>>, vector<1x512xf32>
    %cst_7 = arith.constant 9.99999974E-6 : f32
    %11 = vector.broadcast %cst_7 : f32 to vector<1x512xf32>
    %12 = arith.addf %9, %11 : vector<1x512xf32>
    %13 = math.rsqrt %12 : vector<1x512xf32>
    %14 = arith.mulf %10, %13 : vector<1x512xf32>
    %c0_8 = arith.constant 0 : index
    %c0_9 = arith.constant 0 : index
    %15 = vector.load %arg5[%c0_8, %c0_9] : memref<1x512xf32, #tpu.memory_space<vmem>>, vector<1x512xf32>
    %16 = arith.mulf %2, %14 : vector<1x512xf32>
    %17 = arith.subf %15, %16 : vector<1x512xf32>
    %c0_10 = arith.constant 0 : index
    %c0_11 = arith.constant 0 : index
    %18 = vector.load %arg1[%c0_10, %c0_11] : memref<4x512xf32, #tpu.memory_space<vmem>>, vector<4x512xf32>
    %19 = vector.broadcast %14 : vector<1x512xf32> to vector<4x512xf32>
    %20 = arith.mulf %18, %19 : vector<4x512xf32>
    %21 = vector.broadcast %17 : vector<1x512xf32> to vector<4x512xf32>
    %22 = arith.addf %20, %21 : vector<4x512xf32>
    %cst_12 = arith.constant 2.000000e-01 : f32
    %23 = vector.broadcast %cst_12 : f32 to vector<4x512xf32>
    %24 = arith.mulf %23, %22 : vector<4x512xf32>
    %25 = arith.maximumf %22, %24 : vector<4x512xf32>
    %26 = arith.truncf %25 : vector<4x512xf32> to vector<4x512xbf16>
    %c0_13 = arith.constant 0 : index
    %c0_14 = arith.constant 0 : index
    %27 = vector.load %arg6[%c0_13, %c0_14] : memref<512x256xbf16, #tpu.memory_space<vmem>>, vector<512x256xbf16>
    %cst_15 = arith.constant dense<0.000000e+00> : vector<4x256xf32>
    %28 = tpu.matmul %26, %27, %cst_15 {dimension_numbers = #tpu.dot_dimension_numbers<[1], [0], [0], [1], [0, 0, 1, 1], [], []>} : vector<4x512xbf16>, vector<512x256xbf16>, vector<4x256xf32> -> vector<4x256xf32>
    %c0_16 = arith.constant 0 : index
    %c0_17 = arith.constant 0 : index
    %29 = vector.load %arg7[%c0_16, %c0_17] : memref<1x256xf32, #tpu.memory_space<vmem>>, vector<1x256xf32>
    %30 = vector.broadcast %29 : vector<1x256xf32> to vector<4x256xf32>
    %31 = arith.addf %28, %30 : vector<4x256xf32>
    %32 = vector.extract_strided_slice %31 {offsets = [0, 0], sizes = [4, 128], strides = [1, 1]} : vector<4x256xf32> to vector<4x128xf32>
    %33 = vector.extract_strided_slice %31 {offsets = [0, 128], sizes = [4, 128], strides = [1, 1]} : vector<4x256xf32> to vector<4x128xf32>
    %c0_18 = arith.constant 0 : index
    %c0_19 = arith.constant 0 : index
    %34 = vector.load %arg8[%c0_18, %c0_19] : memref<4x128xf32, #tpu.memory_space<vmem>>, vector<4x128xf32>
    %cst_20 = arith.constant 5.000000e-01 : f32
    %35 = vector.broadcast %cst_20 : f32 to vector<4x128xf32>
    %36 = arith.mulf %33, %35 : vector<4x128xf32>
    %37 = math.exp %36 : vector<4x128xf32>
    %38 = arith.mulf %34, %37 : vector<4x128xf32>
    %39 = arith.addf %38, %32 : vector<4x128xf32>
    %c0_21 = arith.constant 0 : index
    %c0_22 = arith.constant 0 : index
    %40 = vector.load %arg9[%c0_21, %c0_22] : memref<4x128xf32, #tpu.memory_space<vmem>>, vector<4x128xf32>
    tpu.vector_store %arg9[%c0_21, %c0_22], %39 {strides = array<i32>} : memref<4x128xf32, #tpu.memory_space<vmem>>, vector<4x128xf32>,
    return
  }
  func.func @transform_0(%arg0: i32) -> (i32, i32) {
    %c0_i32 = arith.constant 0 : i32
    %c0_i32_0 = arith.constant 0 : i32
    return %arg0, %c0_i32 : i32, i32
  }
  func.func @transform_1(%arg0: i32) -> (i32, i32) {
    %c0_i32 = arith.constant 0 : i32
    %c0_i32_0 = arith.constant 0 : i32
    %c0_i32_1 = arith.constant 0 : i32
    return %c0_i32, %c0_i32_0 : i32, i32
  }
  func.func @transform_2(%arg0: i32) -> (i32, i32) {
    %c0_i32 = arith.constant 0 : i32
    %c0_i32_0 = arith.constant 0 : i32
    %c0_i32_1 = arith.constant 0 : i32
    return %c0_i32, %c0_i32_0 : i32, i32
  }
  func.func @transform_3(%arg0: i32) -> (i32, i32) {
    %c0_i32 = arith.constant 0 : i32
    %c0_i32_0 = arith.constant 0 : i32
    %c0_i32_1 = arith.constant 0 : i32
    return %c0_i32, %c0_i32_0 : i32, i32
  }
  func.func @transform_4(%arg0: i32) -> (i32, i32) {
    %c0_i32 = arith.constant 0 : i32
    %c0_i32_0 = arith.constant 0 : i32
    %c0_i32_1 = arith.constant 0 : i32
    return %c0_i32, %c0_i32_0 : i32, i32
  }
  func.func @transform_5(%arg0: i32) -> (i32, i32) {
    %c0_i32 = arith.constant 0 : i32
    %c0_i32_0 = arith.constant 0 : i32
    %c0_i32_1 = arith.constant 0 : i32
    return %c0_i32, %c0_i32_0 : i32, i32
  }
  func.func @transform_6(%arg0: i32) -> (i32, i32) {
    %c0_i32 = arith.constant 0 : i32
    %c0_i32_0 = arith.constant 0 : i32
    %c0_i32_1 = arith.constant 0 : i32
    return %c0_i32, %c0_i32_0 : i32, i32
  }
  func.func @transform_7(%arg0: i32) -> (i32, i32) {
    %c0_i32 = arith.constant 0 : i32
    %c0_i32_0 = arith.constant 0 : i32
    return %arg0, %c0_i32 : i32, i32
  }
  func.func @transform_8(%arg0: i32) -> (i32, i32) {
    %c0_i32 = arith.constant 0 : i32
    %c0_i32_0 = arith.constant 0 : i32
    return %arg0, %c0_i32 : i32, i32
  }
}

</mosaic_0001>

<llo_original>
// kernel: encoder_forward.2
$region0: #{encoder_forward.2}
  #allocation0 [shape = 'u32[]', space=smem, size = 0x4, offset = 0x4, fixed_abs, tag = 'smem constant byte address 0x4 - core index']
  #allocation1 [shape = 'u32[144,128]{1,0:T(1,128)}', space=vmem, size = 0x12000, scoped, tag = 'internal scratch']
  %s0 = inlined_call_operand.vmem [shape: f32[4,1024], index: 0, kind: input, shape index: {}]
  %s1 = inlined_call_operand.vmem [shape: bf16[1024,512], index: 1, kind: input, shape index: {}]
  %s2 = inlined_call_operand.vmem [shape: f32[1,512], index: 2, kind: input, shape index: {}]
  %s3 = inlined_call_operand.vmem [shape: bf16[512,512], index: 3, kind: input, shape index: {}]
  %s4 = inlined_call_operand.vmem [shape: f32[4,512], index: 4, kind: output, shape index: {0}]
  %s5 = inlined_call_operand.vmem [shape: f32[1,512], index: 5, kind: output, shape index: {1}]
  %s6 = inlined_call_operand.vmem [shape: f32[1,512], index: 6, kind: output, shape index: {2}]
  %7 = xla_tuple %s4, %s5, %s6
  %s8 = sld [smem:[#allocation0]]
  $region46: #{encoder_forward.2} parent=0
    _
  %s10 = ssub.s32 1, %s8
  %s11 = scalar_select 0, %s10, %s8
  // Predicated region
  $region2: #{encoder_forward.2} parent=0 // pred_check
    _
  $region3: #{encoder_forward.2} parent=0 // pred_check_branch
    %13 = sbr.rel (0) target = $region5
  $region4: #{encoder_forward.2} parent=0 // pred_region
    _
  $region5: #{encoder_forward.2} parent=0 // pred_fallthru
    _
  // Predicated region
  $region6: #{encoder_forward.2} parent=0 // pred_check
    _
  $region7: #{encoder_forward.2} parent=0 // pred_check_branch
    %15 = sbr.rel (0) target = $region9
  $region8: #{encoder_forward.2} parent=0 // pred_region
    _
  $region9: #{encoder_forward.2} parent=0 // pred_fallthru
    _
  // Predicated region
  $region10: #{encoder_forward.2} parent=0 // pred_check
    _
  $region11: #{encoder_forward.2} parent=0 // pred_check_branch
    %17 = sbr.rel (0) target = $region13
  $region12: #{encoder_forward.2} parent=0 // pred_region
    _
  $region13: #{encoder_forward.2} parent=0 // pred_fallthru
    _
  // Predicated region
  $region14: #{encoder_forward.2} parent=0 // pred_check
    _
  $region15: #{encoder_forward.2} parent=0 // pred_check_branch
    %19 = sbr.rel (0) target = $region17
  $region16: #{encoder_forward.2} parent=0 // pred_region
    _
  $region17: #{encoder_forward.2} parent=0 // pred_fallthru
    _
  %v20 = vld [vmem:[%s0] sm:$0xff]
  %v21 = vld [vmem:[%s0 + $0x8] sm:$0xff]
  %v22 = vld [vmem:[%s0 + $0x10] sm:$0xff]
  %v23 = vld [vmem:[%s0 + $0x18] sm:$0xff]
  %v28 = vcombine.high %v20, %v20
  %v29 = vcombine.high %v21, %v21
  %v30 = vcombine.high %v22, %v22
  %v31 = vcombine.high %v23, %v23
  %v36 = vpack.c.bf16 %v20, %v20
  %v37 = vpack.c.bf16 %v28, %v28
  %v38 = vpack.c.bf16 %v21, %v21
  %v39 = vpack.c.bf16 %v29, %v29
  %v40 = vpack.c.bf16 %v22, %v22
  %v41 = vpack.c.bf16 %v30, %v30
  %v42 = vpack.c.bf16 %v23, %v23
  %v43 = vpack.c.bf16 %v31, %v31
  %v44 = vld [vmem:[%s1] sm:$0xff]
  %v45 = vld [vmem:[%s1 + $0x8] sm:$0xff]
  %v46 = vld [vmem:[%s1 + $0x10] sm:$0xff]
  %v47 = vld [vmem:[%s1 + $0x18] sm:$0xff]
  %v48 = vld [vmem:[%s1 + $0x20] sm:$0xff]
  %v49 = vld [vmem:[%s1 + $0x28] sm:$0xff]
  %v50 = vld [vmem:[%s1 + $0x30] sm:$0xff]
  %v51 = vld [vmem:[%s1 + $0x38] sm:$0xff]
  %v52 = vld [vmem:[%s1 + $0x40] sm:$0xff]
  %v53 = vld [vmem:[%s1 + $0x48] sm:$0xff]
  %v54 = vld [vmem:[%s1 + $0x50] sm:$0xff]
  %v55 = vld [vmem:[%s1 + $0x58] sm:$0xff]
  %v56 = vld [vmem:[%s1 + $0x60] sm:$0xff]
  %v57 = vld [vmem:[%s1 + $0x68] sm:$0xff]
  %v58 = vld [vmem:[%s1 + $0x70] sm:$0xff]
  %v59 = vld [vmem:[%s1 + $0x78] sm:$0xff]
  %v60 = vld [vmem:[%s1 + $0x80] sm:$0xff]
  %v61 = vld [vmem:[%s1 + $0x88] sm:$0xff]
  %v62 = vld [vmem:[%s1 + $0x90] sm:$0xff]
  %v63 = vld [vmem:[%s1 + $0x98] sm:$0xff]
  %v64 = vld [vmem:[%s1 + $0xa0] sm:$0xff]
  %v65 = vld [vmem:[%s1 + $0xa8] sm:$0xff]
  %v66 = vld [vmem:[%s1 + $0xb0] sm:$0xff]
  %v67 = vld [vmem:[%s1 + $0xb8] sm:$0xff]
  %v68 = vld [vmem:[%s1 + $0xc0] sm:$0xff]
  %v69 = vld [vmem:[%s1 + $0xc8] sm:$0xff]
  %v70 = vld [vmem:[%s1 + $0xd0] sm:$0xff]
  %v71 = vld [vmem:[%s1 + $0xd8] sm:$0xff]
  %v72 = vld [vmem:[%s1 + $0xe0] sm:$0xff]
  %v73 = vld [vmem:[%s1 + $0xe8] sm:$0xff]
  %v74 = vld [vmem:[%s1 + $0xf0] sm:$0xff]
  %v75 = vld [vmem:[%s1 + $0xf8] sm:$0xff]
  %v76 = vld [vmem:[%s1 + $0x100] sm:$0xff]
  %v77 = vld [vmem:[%s1 + $0x108] sm:$0xff]
  %v78 = vld [vmem:[%s1 + $0x110] sm:$0xff]
  %v79 = vld [vmem:[%s1 + $0x118] sm:$0xff]
  %v80 = vld [vmem:[%s1 + $0x120] sm:$0xff]
  %v81 = vld [vmem:[%s1 + $0x128] sm:$0xff]
  %v82 = vld [vmem:[%s1 + $0x130] sm:$0xff]
  %v83 = vld [vmem:[%s1 + $0x138] sm:$0xff]
  %v84 = vld [vmem:[%s1 + $0x140] sm:$0xff]
  %v85 = vld [vmem:[%s1 + $0x148] sm:$0xff]
  %v86 = vld [vmem:[%s1 + $0x150] sm:$0xff]
  %v87 = vld [vmem:[%s1 + $0x158] sm:$0xff]
  %v88 = vld [vmem:[%s1 + $0x160] sm:$0xff]
  %v89 = vld [vmem:[%s1 + $0x168] sm:$0xff]
  %v90 = vld [vmem:[%s1 + $0x170] sm:$0xff]
  %v91 = vld [vmem:[%s1 + $0x178] sm:$0xff]
  %v92 = vld [vmem:[%s1 + $0x180] sm:$0xff]
  %v93 = vld [vmem:[%s1 + $0x188] sm:$0xff]
  %v94 = vld [vmem:[%s1 + $0x190] sm:$0xff]
  %v95 = vld [vmem:[%s1 + $0x198] sm:$0xff]
  %v96 = vld [vmem:[%s1 + $0x1a0] sm:$0xff]
  %v97 = vld [vmem:[%s1 + $0x1a8] sm:$0xff]
  %v98 = vld [vmem:[%s1 + $0x1b0] sm:$0xff]
  %v99 = vld [vmem:[%s1 + $0x1b8] sm:$0xff]
  %v100 = vld [vmem:[%s1 + $0x1c0] sm:$0xff]
  %v101 = vld [vmem:[%s1 + $0x1c8] sm:$0xff]
  %v102 = vld [vmem:[%s1 + $0x1d0] sm:$0xff]
  %v103 = vld [vmem:[%s1 + $0x1d8] sm:$0xff]
  %v104 = vld [vmem:[%s1 + $0x1e0] sm:$0xff]
  %v105 = vld [vmem:[%s1 + $0x1e8] sm:$0xff]
  %v106 = vld [vmem:[%s1 + $0x1f0] sm:$0xff]
  %v107 = vld [vmem:[%s1 + $0x1f8] sm:$0xff]
  %v108 = vld [vmem:[%s1 + $0x200] sm:$0xff]
  %v109 = vld [vmem:[%s1 + $0x208] sm:$0xff]
  %v110 = vld [vmem:[%s1 + $0x210] sm:$0xff]
  %v111 = vld [vmem:[%s1 + $0x218] sm:$0xff]
  %v112 = vld [vmem:[%s1 + $0x220] sm:$0xff]
  %v113 = vld [vmem:[%s1 + $0x228] sm:$0xff]
  %v114 = vld [vmem:[%s1 + $0x230] sm:$0xff]
  %v115 = vld [vmem:[%s1 + $0x238] sm:$0xff]
  %v116 = vld [vmem:[%s1 + $0x240] sm:$0xff]
  %v117 = vld [vmem:[%s1 + $0x248] sm:$0xff]
  %v118 = vld [vmem:[%s1 + $0x250] sm:$0xff]
  %v119 = vld [vmem:[%s1 + $0x258] sm:$0xff]
  %v120 = vld [vmem:[%s1 + $0x260] sm:$0xff]
  %v121 = vld [vmem:[%s1 + $0x268] sm:$0xff]
  %v122 = vld [vmem:[%s1 + $0x270] sm:$0xff]
  %v123 = vld [vmem:[%s1 + $0x278] sm:$0xff]
  %v124 = vld [vmem:[%s1 + $0x280] sm:$0xff]
  %v125 = vld [vmem:[%s1 + $0x288] sm:$0xff]
  %v126 = vld [vmem:[%s1 + $0x290] sm:$0xff]
  %v127 = vld [vmem:[%s1 + $0x298] sm:$0xff]
  %v128 = vld [vmem:[%s1 + $0x2a0] sm:$0xff]
  %v129 = vld [vmem:[%s1 + $0x2a8] sm:$0xff]
  %v130 = vld [vmem:[%s1 + $0x2b0] sm:$0xff]
  %v131 = vld [vmem:[%s1 + $0x2b8] sm:$0xff]
  %v132 = vld [vmem:[%s1 + $0x2c0] sm:$0xff]
  %v133 = vld [vmem:[%s1 + $0x2c8] sm:$0xff]
  %v134 = vld [vmem:[%s1 + $0x2d0] sm:$0xff]
  %v135 = vld [vmem:[%s1 + $0x2d8] sm:$0xff]
  %v136 = vld [vmem:[%s1 + $0x2e0] sm:$0xff]
  %v137 = vld [vmem:[%s1 + $0x2e8] sm:$0xff]
  %v138 = vld [vmem:[%s1 + $0x2f0] sm:$0xff]
  %v139 = vld [vmem:[%s1 + $0x2f8] sm:$0xff]
  %v140 = vld [vmem:[%s1 + $0x300] sm:$0xff]
  %v141 = vld [vmem:[%s1 + $0x308] sm:$0xff]
  %v142 = vld [vmem:[%s1 + $0x310] sm:$0xff]
  %v143 = vld [vmem:[%s1 + $0x318] sm:$0xff]
  %v144 = vld [vmem:[%s1 + $0x320] sm:$0xff]
  %v145 = vld [vmem:[%s1 + $0x328] sm:$0xff]
  %v146 = vld [vmem:[%s1 + $0x330] sm:$0xff]
  %v147 = vld [vmem:[%s1 + $0x338] sm:$0xff]
  %v148 = vld [vmem:[%s1 + $0x340] sm:$0xff]
  %v149 = vld [vmem:[%s1 + $0x348] sm:$0xff]
  %v150 = vld [vmem:[%s1 + $0x350] sm:$0xff]
  %v151 = vld [vmem:[%s1 + $0x358] sm:$0xff]
  %v152 = vld [vmem:[%s1 + $0x360] sm:$0xff]
  %v153 = vld [vmem:[%s1 + $0x368] sm:$0xff]
  %v154 = vld [vmem:[%s1 + $0x370] sm:$0xff]
  %v155 = vld [vmem:[%s1 + $0x378] sm:$0xff]
  %v156 = vld [vmem:[%s1 + $0x380] sm:$0xff]
  %v157 = vld [vmem:[%s1 + $0x388] sm:$0xff]
  %v158 = vld [vmem:[%s1 + $0x390] sm:$0xff]
  %v159 = vld [vmem:[%s1 + $0x398] sm:$0xff]
  %v160 = vld [vmem:[%s1 + $0x3a0] sm:$0xff]
  %v161 = vld [vmem:[%s1 + $0x3a8] sm:$0xff]
  %v162 = vld [vmem:[%s1 + $0x3b0] sm:$0xff]
  %v163 = vld [vmem:[%s1 + $0x3b8] sm:$0xff]
  %v164 = vld [vmem:[%s1 + $0x3c0] sm:$0xff]
  %v165 = vld [vmem:[%s1 + $0x3c8] sm:$0xff]
  %v166 = vld [vmem:[%s1 + $0x3d0] sm:$0xff]
  %v167 = vld [vmem:[%s1 + $0x3d8] sm:$0xff]
  %v168 = vld [vmem:[%s1 + $0x3e0] sm:$0xff]
  %v169 = vld [vmem:[%s1 + $0x3e8] sm:$0xff]
  %v170 = vld [vmem:[%s1 + $0x3f0] sm:$0xff]
  %v171 = vld [vmem:[%s1 + $0x3f8] sm:$0xff]
  %v172 = vld [vmem:[%s1 + $0x400] sm:$0xff]
  %v173 = vld [vmem:[%s1 + $0x408] sm:$0xff]
  %v174 = vld [vmem:[%s1 + $0x410] sm:$0xff]
  %v175 = vld [vmem:[%s1 + $0x418] sm:$0xff]
  %v176 = vld [vmem:[%s1 + $0x420] sm:$0xff]
  %v177 = vld [vmem:[%s1 + $0x428] sm:$0xff]
  %v178 = vld [vmem:[%s1 + $0x430] sm:$0xff]
  %v179 = vld [vmem:[%s1 + $0x438] sm:$0xff]
  %v180 = vld [vmem:[%s1 + $0x440] sm:$0xff]
  %v181 = vld [vmem:[%s1 + $0x448] sm:$0xff]
  %v182 = vld [vmem:[%s1 + $0x450] sm:$0xff]
  %v183 = vld [vmem:[%s1 + $0x458] sm:$0xff]
  %v184 = vld [vmem:[%s1 + $0x460] sm:$0xff]
  %v185 = vld [vmem:[%s1 + $0x468] sm:$0xff]
  %v186 = vld [vmem:[%s1 + $0x470] sm:$0xff]
  %v187 = vld [vmem:[%s1 + $0x478] sm:$0xff]
  %v188 = vld [vmem:[%s1 + $0x480] sm:$0xff]
  %v189 = vld [vmem:[%s1 + $0x488] sm:$0xff]
  %v190 = vld [vmem:[%s1 + $0x490] sm:$0xff]
  %v191 = vld [vmem:[%s1 + $0x498] sm:$0xff]
  %v192 = vld [vmem:[%s1 + $0x4a0] sm:$0xff]
  %v193 = vld [vmem:[%s1 + $0x4a8] sm:$0xff]
  %v194 = vld [vmem:[%s1 + $0x4b0] sm:$0xff]
  %v195 = vld [vmem:[%s1 + $0x4b8] sm:$0xff]
  %v196 = vld [vmem:[%s1 + $0x4c0] sm:$0xff]
  %v197 = vld [vmem:[%s1 + $0x4c8] sm:$0xff]
  %v198 = vld [vmem:[%s1 + $0x4d0] sm:$0xff]
  %v199 = vld [vmem:[%s1 + $0x4d8] sm:$0xff]
  %v200 = vld [vmem:[%s1 + $0x4e0] sm:$0xff]
  %v201 = vld [vmem:[%s1 + $0x4e8] sm:$0xff]
  %v202 = vld [vmem:[%s1 + $0x4f0] sm:$0xff]
  %v203 = vld [vmem:[%s1 + $0x4f8] sm:$0xff]
  %v204 = vld [vmem:[%s1 + $0x500] sm:$0xff]
  %v205 = vld [vmem:[%s1 + $0x508] sm:$0xff]
  %v206 = vld [vmem:[%s1 + $0x510] sm:$0xff]
  %v207 = vld [vmem:[%s1 + $0x518] sm:$0xff]
  %v208 = vld [vmem:[%s1 + $0x520] sm:$0xff]
  %v209 = vld [vmem:[%s1 + $0x528] sm:$0xff]
  %v210 = vld [vmem:[%s1 + $0x530] sm:$0xff]
  %v211 = vld [vmem:[%s1 + $0x538] sm:$0xff]
  %v212 = vld [vmem:[%s1 + $0x540] sm:$0xff]
  %v213 = vld [vmem:[%s1 + $0x548] sm:$0xff]
  %v214 = vld [vmem:[%s1 + $0x550] sm:$0xff]
  %v215 = vld [vmem:[%s1 + $0x558] sm:$0xff]
  %v216 = vld [vmem:[%s1 + $0x560] sm:$0xff]
  %v217 = vld [vmem:[%s1 + $0x568] sm:$0xff]
  %v218 = vld [vmem:[%s1 + $0x570] sm:$0xff]
  %v219 = vld [vmem:[%s1 + $0x578] sm:$0xff]
  %v220 = vld [vmem:[%s1 + $0x580] sm:$0xff]
  %v221 = vld [vmem:[%s1 + $0x588] sm:$0xff]
  %v222 = vld [vmem:[%s1 + $0x590] sm:$0xff]
  %v223 = vld [vmem:[%s1 + $0x598] sm:$0xff]
  %v224 = vld [vmem:[%s1 + $0x5a0] sm:$0xff]
  %v225 = vld [vmem:[%s1 + $0x5a8] sm:$0xff]
  %v226 = vld [vmem:[%s1 + $0x5b0] sm:$0xff]
  %v227 = vld [vmem:[%s1 + $0x5b8] sm:$0xff]
  %v228 = vld [vmem:[%s1 + $0x5c0] sm:$0xff]
  %v229 = vld [vmem:[%s1 + $0x5c8] sm:$0xff]
  %v230 = vld [vmem:[%s1 + $0x5d0] sm:$0xff]
  %v231 = vld [vmem:[%s1 + $0x5d8] sm:$0xff]
  %v232 = vld [vmem:[%s1 + $0x5e0] sm:$0xff]
  %v233 = vld [vmem:[%s1 + $0x5e8] sm:$0xff]
  %v234 = vld [vmem:[%s1 + $0x5f0] sm:$0xff]
  %v235 = vld [vmem:[%s1 + $0x5f8] sm:$0xff]
  %v236 = vld [vmem:[%s1 + $0x600] sm:$0xff]
  %v237 = vld [vmem:[%s1 + $0x608] sm:$0xff]
  %v238 = vld [vmem:[%s1 + $0x610] sm:$0xff]
  %v239 = vld [vmem:[%s1 + $0x618] sm:$0xff]
  %v240 = vld [vmem:[%s1 + $0x620] sm:$0xff]
  %v241 = vld [vmem:[%s1 + $0x628] sm:$0xff]
  %v242 = vld [vmem:[%s1 + $0x630] sm:$0xff]
  %v243 = vld [vmem:[%s1 + $0x638] sm:$0xff]
  %v244 = vld [vmem:[%s1 + $0x640] sm:$0xff]
  %v245 = vld [vmem:[%s1 + $0x648] sm:$0xff]
  %v246 = vld [vmem:[%s1 + $0x650] sm:$0xff]
  %v247 = vld [vmem:[%s1 + $0x658] sm:$0xff]
  %v248 = vld [vmem:[%s1 + $0x660] sm:$0xff]
  %v249 = vld [vmem:[%s1 + $0x668] sm:$0xff]
  %v250 = vld [vmem:[%s1 + $0x670] sm:$0xff]
  %v251 = vld [vmem:[%s1 + $0x678] sm:$0xff]
  %v252 = vld [vmem:[%s1 + $0x680] sm:$0xff]
  %v253 = vld [vmem:[%s1 + $0x688] sm:$0xff]
  %v254 = vld [vmem:[%s1 + $0x690] sm:$0xff]
  %v255 = vld [vmem:[%s1 + $0x698] sm:$0xff]
  %v256 = vld [vmem:[%s1 + $0x6a0] sm:$0xff]
  %v257 = vld [vmem:[%s1 + $0x6a8] sm:$0xff]
  %v258 = vld [vmem:[%s1 + $0x6b0] sm:$0xff]
  %v259 = vld [vmem:[%s1 + $0x6b8] sm:$0xff]
  %v260 = vld [vmem:[%s1 + $0x6c0] sm:$0xff]
  %v261 = vld [vmem:[%s1 + $0x6c8] sm:$0xff]
  %v262 = vld [vmem:[%s1 + $0x6d0] sm:$0xff]
  %v263 = vld [vmem:[%s1 + $0x6d8] sm:$0xff]
  %v264 = vld [vmem:[%s1 + $0x6e0] sm:$0xff]
  %v265 = vld [vmem:[%s1 + $0x6e8] sm:$0xff]
  %v266 = vld [vmem:[%s1 + $0x6f0] sm:$0xff]
  %v267 = vld [vmem:[%s1 + $0x6f8] sm:$0xff]
  %v268 = vld [vmem:[%s1 + $0x700] sm:$0xff]
  %v269 = vld [vmem:[%s1 + $0x708] sm:$0xff]
  %v270 = vld [vmem:[%s1 + $0x710] sm:$0xff]
  %v271 = vld [vmem:[%s1 + $0x718] sm:$0xff]
  %v272 = vld [vmem:[%s1 + $0x720] sm:$0xff]
  %v273 = vld [vmem:[%s1 + $0x728] sm:$0xff]
  %v274 = vld [vmem:[%s1 + $0x730] sm:$0xff]
  %v275 = vld [vmem:[%s1 + $0x738] sm:$0xff]
  %v276 = vld [vmem:[%s1 + $0x740] sm:$0xff]
  %v277 = vld [vmem:[%s1 + $0x748] sm:$0xff]
  %v278 = vld [vmem:[%s1 + $0x750] sm:$0xff]
  %v279 = vld [vmem:[%s1 + $0x758] sm:$0xff]
  %v280 = vld [vmem:[%s1 + $0x760] sm:$0xff]
  %v281 = vld [vmem:[%s1 + $0x768] sm:$0xff]
  %v282 = vld [vmem:[%s1 + $0x770] sm:$0xff]
  %v283 = vld [vmem:[%s1 + $0x778] sm:$0xff]
  %v284 = vld [vmem:[%s1 + $0x780] sm:$0xff]
  %v285 = vld [vmem:[%s1 + $0x788] sm:$0xff]
  %v286 = vld [vmem:[%s1 + $0x790] sm:$0xff]
  %v287 = vld [vmem:[%s1 + $0x798] sm:$0xff]
  %v288 = vld [vmem:[%s1 + $0x7a0] sm:$0xff]
  %v289 = vld [vmem:[%s1 + $0x7a8] sm:$0xff]
  %v290 = vld [vmem:[%s1 + $0x7b0] sm:$0xff]
  %v291 = vld [vmem:[%s1 + $0x7b8] sm:$0xff]
  %v292 = vld [vmem:[%s1 + $0x7c0] sm:$0xff]
  %v293 = vld [vmem:[%s1 + $0x7c8] sm:$0xff]
  %v294 = vld [vmem:[%s1 + $0x7d0] sm:$0xff]
  %v295 = vld [vmem:[%s1 + $0x7d8] sm:$0xff]
  %v296 = vld [vmem:[%s1 + $0x7e0] sm:$0xff]
  %v297 = vld [vmem:[%s1 + $0x7e8] sm:$0xff]
  %v298 = vld [vmem:[%s1 + $0x7f0] sm:$0xff]
  %v299 = vld [vmem:[%s1 + $0x7f8] sm:$0xff]
  %v300 = vld [vmem:[%s2] sm:$0xf]
  %v302 = vlaneseq
  %v303 = vshrl.u32 %v302, 7
  %v304 = vsub.s32 0, %v303
  %v305 = vrot.slane %v300, %v304
  %v306 = vlaneseq
  %v307 = vshrl.u32 %v306, 7
  %v308 = vsub.s32 1, %v307
  %v309 = vrot.slane %v300, %v308
  %v310 = vlaneseq
  %v311 = vshrl.u32 %v310, 7
  %v312 = vsub.s32 2, %v311
  %v313 = vrot.slane %v300, %v312
  %v314 = vlaneseq
  %v315 = vshrl.u32 %v314, 7
  %v316 = vsub.s32 3, %v315
  %v317 = vrot.slane %v300, %v316
  %v578 = vunpack.c.l.b16 %v44
  %v579 = vunpack.c.h.b16 %v44
  %v580 = vunpack.c.l.b16 %v45
  %v581 = vunpack.c.h.b16 %v45
  %v582 = vunpack.c.l.b16 %v46
  %v583 = vunpack.c.h.b16 %v46
  %v584 = vunpack.c.l.b16 %v47
  %v585 = vunpack.c.h.b16 %v47
  %v586 = vunpack.c.l.b16 %v48
  %v587 = vunpack.c.h.b16 %v48
  %v588 = vunpack.c.l.b16 %v49
  %v589 = vunpack.c.h.b16 %v49
  %v590 = vunpack.c.l.b16 %v50
  %v591 = vunpack.c.h.b16 %v50
  %v592 = vunpack.c.l.b16 %v51
  %v593 = vunpack.c.h.b16 %v51
  %v594 = vunpack.c.l.b16 %v52
  %v595 = vunpack.c.h.b16 %v52
  %v596 = vunpack.c.l.b16 %v53
  %v597 = vunpack.c.h.b16 %v53
  %v598 = vunpack.c.l.b16 %v54
  %v599 = vunpack.c.h.b16 %v54
  %v600 = vunpack.c.l.b16 %v55
  %v601 = vunpack.c.h.b16 %v55
  %v602 = vunpack.c.l.b16 %v56
  %v603 = vunpack.c.h.b16 %v56
  %v604 = vunpack.c.l.b16 %v57
  %v605 = vunpack.c.h.b16 %v57
  %v606 = vunpack.c.l.b16 %v58
  %v607 = vunpack.c.h.b16 %v58
  %v608 = vunpack.c.l.b16 %v59
  %v609 = vunpack.c.h.b16 %v59
  %v610 = vunpack.c.l.b16 %v60
  %v611 = vunpack.c.h.b16 %v60
  %v612 = vunpack.c.l.b16 %v61
  %v613 = vunpack.c.h.b16 %v61
  %v614 = vunpack.c.l.b16 %v62
  %v615 = vunpack.c.h.b16 %v62
  %v616 = vunpack.c.l.b16 %v63
  %v617 = vunpack.c.h.b16 %v63
  %v618 = vunpack.c.l.b16 %v64
  %v619 = vunpack.c.h.b16 %v64
  %v620 = vunpack.c.l.b16 %v65
  %v621 = vunpack.c.h.b16 %v65
  %v622 = vunpack.c.l.b16 %v66
  %v623 = vunpack.c.h.b16 %v66
  %v624 = vunpack.c.l.b16 %v67
  %v625 = vunpack.c.h.b16 %v67
  %v626 = vunpack.c.l.b16 %v68
  %v627 = vunpack.c.h.b16 %v68
  %v628 = vunpack.c.l.b16 %v69
  %v629 = vunpack.c.h.b16 %v69
  %v630 = vunpack.c.l.b16 %v70
  %v631 = vunpack.c.h.b16 %v70
  %v632 = vunpack.c.l.b16 %v71
  %v633 = vunpack.c.h.b16 %v71
  %v634 = vunpack.c.l.b16 %v72
  %v635 = vunpack.c.h.b16 %v72
  %v636 = vunpack.c.l.b16 %v73
  %v637 = vunpack.c.h.b16 %v73
  %v638 = vunpack.c.l.b16 %v74
  %v639 = vunpack.c.h.b16 %v74
  %v640 = vunpack.c.l.b16 %v75
  %v641 = vunpack.c.h.b16 %v75
  %v642 = vunpack.c.l.b16 %v76
  %v643 = vunpack.c.h.b16 %v76
  %v644 = vunpack.c.l.b16 %v77
  %v645 = vunpack.c.h.b16 %v77
  %v646 = vunpack.c.l.b16 %v78
  %v647 = vunpack.c.h.b16 %v78
  %v648 = vunpack.c.l.b16 %v79
  %v649 = vunpack.c.h.b16 %v79
  %v650 = vunpack.c.l.b16 %v80
  %v651 = vunpack.c.h.b16 %v80
  %v652 = vunpack.c.l.b16 %v81
  %v653 = vunpack.c.h.b16 %v81
  %v654 = vunpack.c.l.b16 %v82
  %v655 = vunpack.c.h.b16 %v82
  %v656 = vunpack.c.l.b16 %v83
  %v657 = vunpack.c.h.b16 %v83
  %v658 = vunpack.c.l.b16 %v84
  %v659 = vunpack.c.h.b16 %v84
  %v660 = vunpack.c.l.b16 %v85
  %v661 = vunpack.c.h.b16 %v85
  %v662 = vunpack.c.l.b16 %v86
  %v663 = vunpack.c.h.b16 %v86
  %v664 = vunpack.c.l.b16 %v87
  %v665 = vunpack.c.h.b16 %v87
  %v666 = vunpack.c.l.b16 %v88
  %v667 = vunpack.c.h.b16 %v88
  %v668 = vunpack.c.l.b16 %v89
  %v669 = vunpack.c.h.b16 %v89
  %v670 = vunpack.c.l.b16 %v90
  %v671 = vunpack.c.h.b16 %v90
  %v672 = vunpack.c.l.b16 %v91
  %v673 = vunpack.c.h.b16 %v91
  %v674 = vunpack.c.l.b16 %v92
  %v675 = vunpack.c.h.b16 %v92
  %v676 = vunpack.c.l.b16 %v93
  %v677 = vunpack.c.h.b16 %v93
  %v678 = vunpack.c.l.b16 %v94
  %v679 = vunpack.c.h.b16 %v94
  %v680 = vunpack.c.l.b16 %v95
  %v681 = vunpack.c.h.b16 %v95
  %v682 = vunpack.c.l.b16 %v96
  %v683 = vunpack.c.h.b16 %v96
  %v684 = vunpack.c.l.b16 %v97
  %v685 = vunpack.c.h.b16 %v97
  %v686 = vunpack.c.l.b16 %v98
  %v687 = vunpack.c.h.b16 %v98
  %v688 = vunpack.c.l.b16 %v99
  %v689 = vunpack.c.h.b16 %v99
  %v690 = vunpack.c.l.b16 %v100
  %v691 = vunpack.c.h.b16 %v100
  %v692 = vunpack.c.l.b16 %v101
  %v693 = vunpack.c.h.b16 %v101
  %v694 = vunpack.c.l.b16 %v102
  %v695 = vunpack.c.h.b16 %v102
  %v696 = vunpack.c.l.b16 %v103
  %v697 = vunpack.c.h.b16 %v103
  %v698 = vunpack.c.l.b16 %v104
  %v699 = vunpack.c.h.b16 %v104
  %v700 = vunpack.c.l.b16 %v105
  %v701 = vunpack.c.h.b16 %v105
  %v702 = vunpack.c.l.b16 %v106
  %v703 = vunpack.c.h.b16 %v106
  %v704 = vunpack.c.l.b16 %v107
  %v705 = vunpack.c.h.b16 %v107
  %v706 = vunpack.c.l.b16 %v108
  %v707 = vunpack.c.h.b16 %v108
  %v708 = vunpack.c.l.b16 %v109
  %v709 = vunpack.c.h.b16 %v109
  %v710 = vunpack.c.l.b16 %v110
  %v711 = vunpack.c.h.b16 %v110
  %v712 = vunpack.c.l.b16 %v111
  %v713 = vunpack.c.h.b16 %v111
  %v714 = vunpack.c.l.b16 %v112
  %v715 = vunpack.c.h.b16 %v112
  %v716 = vunpack.c.l.b16 %v113
  %v717 = vunpack.c.h.b16 %v113
  %v718 = vunpack.c.l.b16 %v114
  %v719 = vunpack.c.h.b16 %v114
  %v720 = vunpack.c.l.b16 %v115
  %v721 = vunpack.c.h.b16 %v115
  %v722 = vunpack.c.l.b16 %v116
  %v723 = vunpack.c.h.b16 %v116
  %v724 = vunpack.c.l.b16 %v117
  %v725 = vunpack.c.h.b16 %v117
  %v726 = vunpack.c.l.b16 %v118
  %v727 = vunpack.c.h.b16 %v118
  %v728 = vunpack.c.l.b16 %v119
  %v729 = vunpack.c.h.b16 %v119
  %v730 = vunpack.c.l.b16 %v120
  %v731 = vunpack.c.h.b16 %v120
  %v732 = vunpack.c.l.b16 %v121
  %v733 = vunpack.c.h.b16 %v121
  %v734 = vunpack.c.l.b16 %v122
  %v735 = vunpack.c.h.b16 %v122
  %v736 = vunpack.c.l.b16 %v123
  %v737 = vunpack.c.h.b16 %v123
  %v738 = vunpack.c.l.b16 %v124
  %v739 = vunpack.c.h.b16 %v124
  %v740 = vunpack.c.l.b16 %v125
  %v741 = vunpack.c.h.b16 %v125
  %v742 = vunpack.c.l.b16 %v126
  %v743 = vunpack.c.h.b16 %v126
  %v744 = vunpack.c.l.b16 %v127
  %v745 = vunpack.c.h.b16 %v127
  %v746 = vunpack.c.l.b16 %v128
  %v747 = vunpack.c.h.b16 %v128
  %v748 = vunpack.c.l.b16 %v129
  %v749 = vunpack.c.h.b16 %v129
  %v750 = vunpack.c.l.b16 %v130
  %v751 = vunpack.c.h.b16 %v130
  %v752 = vunpack.c.l.b16 %v131
  %v753 = vunpack.c.h.b16 %v131
  %v754 = vunpack.c.l.b16 %v132
  %v755 = vunpack.c.h.b16 %v132
  %v756 = vunpack.c.l.b16 %v133
  %v757 = vunpack.c.h.b16 %v133
  %v758 = vunpack.c.l.b16 %v134
  %v759 = vunpack.c.h.b16 %v134
  %v760 = vunpack.c.l.b16 %v135
  %v761 = vunpack.c.h.b16 %v135
  %v762 = vunpack.c.l.b16 %v136
  %v763 = vunpack.c.h.b16 %v136
  %v764 = vunpack.c.l.b16 %v137
  %v765 = vunpack.c.h.b16 %v137
  %v766 = vunpack.c.l.b16 %v138
  %v767 = vunpack.c.h.b16 %v138
  %v768 = vunpack.c.l.b16 %v139
  %v769 = vunpack.c.h.b16 %v139
  %v770 = vunpack.c.l.b16 %v140
  %v771 = vunpack.c.h.b16 %v140
  %v772 = vunpack.c.l.b16 %v141
  %v773 = vunpack.c.h.b16 %v141
  %v774 = vunpack.c.l.b16 %v142
  %v775 = vunpack.c.h.b16 %v142
  %v776 = vunpack.c.l.b16 %v143
  %v777 = vunpack.c.h.b16 %v143
  %v778 = vunpack.c.l.b16 %v144
  %v779 = vunpack.c.h.b16 %v144
  %v780 = vunpack.c.l.b16 %v145
  %v781 = vunpack.c.h.b16 %v145
  %v782 = vunpack.c.l.b16 %v146
  %v783 = vunpack.c.h.b16 %v146
  %v784 = vunpack.c.l.b16 %v147
  %v785 = vunpack.c.h.b16 %v147
  %v786 = vunpack.c.l.b16 %v148
  %v787 = vunpack.c.h.b16 %v148
  %v788 = vunpack.c.l.b16 %v149
  %v789 = vunpack.c.h.b16 %v149
  %v790 = vunpack.c.l.b16 %v150
  %v791 = vunpack.c.h.b16 %v150
  %v792 = vunpack.c.l.b16 %v151
  %v793 = vunpack.c.h.b16 %v151
  %v794 = vunpack.c.l.b16 %v152
  %v795 = vunpack.c.h.b16 %v152
  %v796 = vunpack.c.l.b16 %v153
  %v797 = vunpack.c.h.b16 %v153
  %v798 = vunpack.c.l.b16 %v154
  %v799 = vunpack.c.h.b16 %v154
  %v800 = vunpack.c.l.b16 %v155
  %v801 = vunpack.c.h.b16 %v155
  %v802 = vunpack.c.l.b16 %v156
  %v803 = vunpack.c.h.b16 %v156
  %v804 = vunpack.c.l.b16 %v157
  %v805 = vunpack.c.h.b16 %v157
  %v806 = vunpack.c.l.b16 %v158
  %v807 = vunpack.c.h.b16 %v158
  %v808 = vunpack.c.l.b16 %v159
  %v809 = vunpack.c.h.b16 %v159
  %v810 = vunpack.c.l.b16 %v160
  %v811 = vunpack.c.h.b16 %v160
  %v812 = vunpack.c.l.b16 %v161
  %v813 = vunpack.c.h.b16 %v161
  %v814 = vunpack.c.l.b16 %v162
  %v815 = vunpack.c.h.b16 %v162
  %v816 = vunpack.c.l.b16 %v163
  %v817 = vunpack.c.h.b16 %v163
  %v818 = vunpack.c.l.b16 %v164
  %v819 = vunpack.c.h.b16 %v164
  %v820 = vunpack.c.l.b16 %v165
  %v821 = vunpack.c.h.b16 %v165
  %v822 = vunpack.c.l.b16 %v166
  %v823 = vunpack.c.h.b16 %v166
  %v824 = vunpack.c.l.b16 %v167
  %v825 = vunpack.c.h.b16 %v167
  %v826 = vunpack.c.l.b16 %v168
  %v827 = vunpack.c.h.b16 %v168
  %v828 = vunpack.c.l.b16 %v169
  %v829 = vunpack.c.h.b16 %v169
  %v830 = vunpack.c.l.b16 %v170
  %v831 = vunpack.c.h.b16 %v170
  %v832 = vunpack.c.l.b16 %v171
  %v833 = vunpack.c.h.b16 %v171
  %v834 = vunpack.c.l.b16 %v172
  %v835 = vunpack.c.h.b16 %v172
  %v836 = vunpack.c.l.b16 %v173
  %v837 = vunpack.c.h.b16 %v173
  %v838 = vunpack.c.l.b16 %v174
  %v839 = vunpack.c.h.b16 %v174
  %v840 = vunpack.c.l.b16 %v175
  %v841 = vunpack.c.h.b16 %v175
  %v842 = vunpack.c.l.b16 %v176
  %v843 = vunpack.c.h.b16 %v176
  %v844 = vunpack.c.l.b16 %v177
  %v845 = vunpack.c.h.b16 %v177
  %v846 = vunpack.c.l.b16 %v178
  %v847 = vunpack.c.h.b16 %v178
  %v848 = vunpack.c.l.b16 %v179
  %v849 = vunpack.c.h.b16 %v179
  %v850 = vunpack.c.l.b16 %v180
  %v851 = vunpack.c.h.b16 %v180
  %v852 = vunpack.c.l.b16 %v181
  %v853 = vunpack.c.h.b16 %v181
  %v854 = vunpack.c.l.b16 %v182
  %v855 = vunpack.c.h.b16 %v182
  %v856 = vunpack.c.l.b16 %v183
  %v857 = vunpack.c.h.b16 %v183
  %v858 = vunpack.c.l.b16 %v184
  %v859 = vunpack.c.h.b16 %v184
  %v860 = vunpack.c.l.b16 %v185
  %v861 = vunpack.c.h.b16 %v185
  %v862 = vunpack.c.l.b16 %v186
  %v863 = vunpack.c.h.b16 %v186
  %v864 = vunpack.c.l.b16 %v187
  %v865 = vunpack.c.h.b16 %v187
  %v866 = vunpack.c.l.b16 %v188
  %v867 = vunpack.c.h.b16 %v188
  %v868 = vunpack.c.l.b16 %v189
  %v869 = vunpack.c.h.b16 %v189
  %v870 = vunpack.c.l.b16 %v190
  %v871 = vunpack.c.h.b16 %v190
  %v872 = vunpack.c.l.b16 %v191
  %v873 = vunpack.c.h.b16 %v191
  %v874 = vunpack.c.l.b16 %v192
  %v875 = vunpack.c.h.b16 %v192
  %v876 = vunpack.c.l.b16 %v193
  %v877 = vunpack.c.h.b16 %v193
  %v878 = vunpack.c.l.b16 %v194
  %v879 = vunpack.c.h.b16 %v194
  %v880 = vunpack.c.l.b16 %v195
  %v881 = vunpack.c.h.b16 %v195
  %v882 = vunpack.c.l.b16 %v196
  %v883 = vunpack.c.h.b16 %v196
  %v884 = vunpack.c.l.b16 %v197
  %v885 = vunpack.c.h.b16 %v197
  %v886 = vunpack.c.l.b16 %v198
  %v887 = vunpack.c.h.b16 %v198
  %v888 = vunpack.c.l.b16 %v199
  %v889 = vunpack.c.h.b16 %v199
  %v890 = vunpack.c.l.b16 %v200
  %v891 = vunpack.c.h.b16 %v200
  %v892 = vunpack.c.l.b16 %v201
  %v893 = vunpack.c.h.b16 %v201
  %v894 = vunpack.c.l.b16 %v202
  %v895 = vunpack.c.h.b16 %v202
  %v896 = vunpack.c.l.b16 %v203
  %v897 = vunpack.c.h.b16 %v203
  %v898 = vunpack.c.l.b16 %v204
  %v899 = vunpack.c.h.b16 %v204
  %v900 = vunpack.c.l.b16 %v205
  %v901 = vunpack.c.h.b16 %v205
  %v902 = vunpack.c.l.b16 %v206
  %v903 = vunpack.c.h.b16 %v206
  %v904 = vunpack.c.l.b16 %v207
  %v905 = vunpack.c.h.b16 %v207
  %v906 = vunpack.c.l.b16 %v208
  %v907 = vunpack.c.h.b16 %v208
  %v908 = vunpack.c.l.b16 %v209
  %v909 = vunpack.c.h.b16 %v209
  %v910 = vunpack.c.l.b16 %v210
  %v911 = vunpack.c.h.b16 %v210
  %v912 = vunpack.c.l.b16 %v211
  %v913 = vunpack.c.h.b16 %v211
  %v914 = vunpack.c.l.b16 %v212
  %v915 = vunpack.c.h.b16 %v212
  %v916 = vunpack.c.l.b16 %v213
  %v917 = vunpack.c.h.b16 %v213
  %v918 = vunpack.c.l.b16 %v214
  %v919 = vunpack.c.h.b16 %v214
  %v920 = vunpack.c.l.b16 %v215
  %v921 = vunpack.c.h.b16 %v215
  %v922 = vunpack.c.l.b16 %v216
  %v923 = vunpack.c.h.b16 %v216
  %v924 = vunpack.c.l.b16 %v217
  %v925 = vunpack.c.h.b16 %v217
  %v926 = vunpack.c.l.b16 %v218
  %v927 = vunpack.c.h.b16 %v218
  %v928 = vunpack.c.l.b16 %v219
  %v929 = vunpack.c.h.b16 %v219
  %v930 = vunpack.c.l.b16 %v220
  %v931 = vunpack.c.h.b16 %v220
  %v932 = vunpack.c.l.b16 %v221
  %v933 = vunpack.c.h.b16 %v221
  %v934 = vunpack.c.l.b16 %v222
  %v935 = vunpack.c.h.b16 %v222
  %v936 = vunpack.c.l.b16 %v223
  %v937 = vunpack.c.h.b16 %v223
  %v938 = vunpack.c.l.b16 %v224
  %v939 = vunpack.c.h.b16 %v224
  %v940 = vunpack.c.l.b16 %v225
  %v941 = vunpack.c.h.b16 %v225
  %v942 = vunpack.c.l.b16 %v226
  %v943 = vunpack.c.h.b16 %v226
  %v944 = vunpack.c.l.b16 %v227
  %v945 = vunpack.c.h.b16 %v227
  %v946 = vunpack.c.l.b16 %v228
  %v947 = vunpack.c.h.b16 %v228
  %v948 = vunpack.c.l.b16 %v229
  %v949 = vunpack.c.h.b16 %v229
  %v950 = vunpack.c.l.b16 %v230
  %v951 = vunpack.c.h.b16 %v230
  %v952 = vunpack.c.l.b16 %v231
  %v953 = vunpack.c.h.b16 %v231
  %v954 = vunpack.c.l.b16 %v232
  %v955 = vunpack.c.h.b16 %v232
  %v956 = vunpack.c.l.b16 %v233
  %v957 = vunpack.c.h.b16 %v233
  %v958 = vunpack.c.l.b16 %v234
  %v959 = vunpack.c.h.b16 %v234
  %v960 = vunpack.c.l.b16 %v235
  %v961 = vunpack.c.h.b16 %v235
  %v962 = vunpack.c.l.b16 %v236
  %v963 = vunpack.c.h.b16 %v236
  %v964 = vunpack.c.l.b16 %v237
  %v965 = vunpack.c.h.b16 %v237
  %v966 = vunpack.c.l.b16 %v238
  %v967 = vunpack.c.h.b16 %v238
  %v968 = vunpack.c.l.b16 %v239
  %v969 = vunpack.c.h.b16 %v239
  %v970 = vunpack.c.l.b16 %v240
  %v971 = vunpack.c.h.b16 %v240
  %v972 = vunpack.c.l.b16 %v241
  %v973 = vunpack.c.h.b16 %v241
  %v974 = vunpack.c.l.b16 %v242
  %v975 = vunpack.c.h.b16 %v242
  %v976 = vunpack.c.l.b16 %v243
  %v977 = vunpack.c.h.b16 %v243
  %v978 = vunpack.c.l.b16 %v244
  %v979 = vunpack.c.h.b16 %v244
  %v980 = vunpack.c.l.b16 %v245
  %v981 = vunpack.c.h.b16 %v245
  %v982 = vunpack.c.l.b16 %v246
  %v983 = vunpack.c.h.b16 %v246
  %v984 = vunpack.c.l.b16 %v247
  %v985 = vunpack.c.h.b16 %v247
  %v986 = vunpack.c.l.b16 %v248
  %v987 = vunpack.c.h.b16 %v248
  %v988 = vunpack.c.l.b16 %v249
  %v989 = vunpack.c.h.b16 %v249
  %v990 = vunpack.c.l.b16 %v250
  %v991 = vunpack.c.h.b16 %v250
  %v992 = vunpack.c.l.b16 %v251
  %v993 = vunpack.c.h.b16 %v251
  %v994 = vunpack.c.l.b16 %v252
  %v995 = vunpack.c.h.b16 %v252
  %v996 = vunpack.c.l.b16 %v253
  %v997 = vunpack.c.h.b16 %v253
  %v998 = vunpack.c.l.b16 %v254
  %v999 = vunpack.c.h.b16 %v254
  %v1000 = vunpack.c.l.b16 %v255
  %v1001 = vunpack.c.h.b16 %v255
  %v1002 = vunpack.c.l.b16 %v256
  %v1003 = vunpack.c.h.b16 %v256
  %v1004 = vunpack.c.l.b16 %v257
  %v1005 = vunpack.c.h.b16 %v257
  %v1006 = vunpack.c.l.b16 %v258
  %v1007 = vunpack.c.h.b16 %v258
  %v1008 = vunpack.c.l.b16 %v259
  %v1009 = vunpack.c.h.b16 %v259
  %v1010 = vunpack.c.l.b16 %v260
  %v1011 = vunpack.c.h.b16 %v260
  %v1012 = vunpack.c.l.b16 %v261
  %v1013 = vunpack.c.h.b16 %v261
  %v1014 = vunpack.c.l.b16 %v262
  %v1015 = vunpack.c.h.b16 %v262
  %v1016 = vunpack.c.l.b16 %v263
  %v1017 = vunpack.c.h.b16 %v263
  %v1018 = vunpack.c.l.b16 %v264
  %v1019 = vunpack.c.h.b16 %v264
  %v1020 = vunpack.c.l.b16 %v265
  %v1021 = vunpack.c.h.b16 %v265
  %v1022 = vunpack.c.l.b16 %v266
  %v1023 = vunpack.c.h.b16 %v266
  %v1024 = vunpack.c.l.b16 %v267
  %v1025 = vunpack.c.h.b16 %v267
  %v1026 = vunpack.c.l.b16 %v268
  %v1027 = vunpack.c.h.b16 %v268
  %v1028 = vunpack.c.l.b16 %v269
  %v1029 = vunpack.c.h.b16 %v269
  %v1030 = vunpack.c.l.b16 %v270
  %v1031 = vunpack.c.h.b16 %v270
  %v1032 = vunpack.c.l.b16 %v271
  %v1033 = vunpack.c.h.b16 %v271
  %v1034 = vunpack.c.l.b16 %v272
  %v1035 = vunpack.c.h.b16 %v272
  %v1036 = vunpack.c.l.b16 %v273
  %v1037 = vunpack.c.h.b16 %v273
  %v1038 = vunpack.c.l.b16 %v274
  %v1039 = vunpack.c.h.b16 %v274
  %v1040 = vunpack.c.l.b16 %v275
  %v1041 = vunpack.c.h.b16 %v275
  %v1042 = vunpack.c.l.b16 %v276
  %v1043 = vunpack.c.h.b16 %v276
  %v1044 = vunpack.c.l.b16 %v277
  %v1045 = vunpack.c.h.b16 %v277
  %v1046 = vunpack.c.l.b16 %v278
  %v1047 = vunpack.c.h.b16 %v278
  %v1048 = vunpack.c.l.b16 %v279
  %v1049 = vunpack.c.h.b16 %v279
  %v1050 = vunpack.c.l.b16 %v280
  %v1051 = vunpack.c.h.b16 %v280
  %v1052 = vunpack.c.l.b16 %v281
  %v1053 = vunpack.c.h.b16 %v281
  %v1054 = vunpack.c.l.b16 %v282
  %v1055 = vunpack.c.h.b16 %v282
  %v1056 = vunpack.c.l.b16 %v283
  %v1057 = vunpack.c.h.b16 %v283
  %v1058 = vunpack.c.l.b16 %v284
  %v1059 = vunpack.c.h.b16 %v284
  %v1060 = vunpack.c.l.b16 %v285
  %v1061 = vunpack.c.h.b16 %v285
  %v1062 = vunpack.c.l.b16 %v286
  %v1063 = vunpack.c.h.b16 %v286
  %v1064 = vunpack.c.l.b16 %v287
  %v1065 = vunpack.c.h.b16 %v287
  %v1066 = vunpack.c.l.b16 %v288
  %v1067 = vunpack.c.h.b16 %v288
  %v1068 = vunpack.c.l.b16 %v289
  %v1069 = vunpack.c.h.b16 %v289
  %v1070 = vunpack.c.l.b16 %v290
  %v1071 = vunpack.c.h.b16 %v290
  %v1072 = vunpack.c.l.b16 %v291
  %v1073 = vunpack.c.h.b16 %v291
  %v1074 = vunpack.c.l.b16 %v292
  %v1075 = vunpack.c.h.b16 %v292
  %v1076 = vunpack.c.l.b16 %v293
  %v1077 = vunpack.c.h.b16 %v293
  %v1078 = vunpack.c.l.b16 %v294
  %v1079 = vunpack.c.h.b16 %v294
  %v1080 = vunpack.c.l.b16 %v295
  %v1081 = vunpack.c.h.b16 %v295
  %v1082 = vunpack.c.l.b16 %v296
  %v1083 = vunpack.c.h.b16 %v296
  %v1084 = vunpack.c.l.b16 %v297
  %v1085 = vunpack.c.h.b16 %v297
  %v1086 = vunpack.c.l.b16 %v298
  %v1087 = vunpack.c.h.b16 %v298
  %v1088 = vunpack.c.l.b16 %v299
  %v1089 = vunpack.c.h.b16 %v299
  %v1090 = vpack.c.b16 %v582, %v578
  %v1091 = vpack.c.b16 %v583, %v579
  %v1092 = vpack.c.b16 %v584, %v580
  %v1093 = vpack.c.b16 %v585, %v581
  %v1094 = vpack.c.b16 %v590, %v586
  %v1095 = vpack.c.b16 %v591, %v587
  %v1096 = vpack.c.b16 %v592, %v588
  %v1097 = vpack.c.b16 %v593, %v589
  %v1098 = vpack.c.b16 %v598, %v594
  %v1099 = vpack.c.b16 %v599, %v595
  %v1100 = vpack.c.b16 %v600, %v596
  %v1101 = vpack.c.b16 %v601, %v597
  %v1102 = vpack.c.b16 %v606, %v602
  %v1103 = vpack.c.b16 %v607, %v603
  %v1104 = vpack.c.b16 %v608, %v604
  %v1105 = vpack.c.b16 %v609, %v605
  %v1106 = vpack.c.b16 %v614, %v610
  %v1107 = vpack.c.b16 %v615, %v611
  %v1108 = vpack.c.b16 %v616, %v612
  %v1109 = vpack.c.b16 %v617, %v613
  %v1110 = vpack.c.b16 %v622, %v618
  %v1111 = vpack.c.b16 %v623, %v619
  %v1112 = vpack.c.b16 %v624, %v620
  %v1113 = vpack.c.b16 %v625, %v621
  %v1114 = vpack.c.b16 %v630, %v626
  %v1115 = vpack.c.b16 %v631, %v627
  %v1116 = vpack.c.b16 %v632, %v628
  %v1117 = vpack.c.b16 %v633, %v629
  %v1118 = vpack.c.b16 %v638, %v634
  %v1119 = vpack.c.b16 %v639, %v635
  %v1120 = vpack.c.b16 %v640, %v636
  %v1121 = vpack.c.b16 %v641, %v637
  %v1122 = vpack.c.b16 %v646, %v642
  %v1123 = vpack.c.b16 %v647, %v643
  %v1124 = vpack.c.b16 %v648, %v644
  %v1125 = vpack.c.b16 %v649, %v645
  %v1126 = vpack.c.b16 %v654, %v650
  %v1127 = vpack.c.b16 %v655, %v651
  %v1128 = vpack.c.b16 %v656, %v652
  %v1129 = vpack.c.b16 %v657, %v653
  %v1130 = vpack.c.b16 %v662, %v658
  %v1131 = vpack.c.b16 %v663, %v659
  %v1132 = vpack.c.b16 %v664, %v660
  %v1133 = vpack.c.b16 %v665, %v661
  %v1134 = vpack.c.b16 %v670, %v666
  %v1135 = vpack.c.b16 %v671, %v667
  %v1136 = vpack.c.b16 %v672, %v668
  %v1137 = vpack.c.b16 %v673, %v669
  %v1138 = vpack.c.b16 %v678, %v674
  %v1139 = vpack.c.b16 %v679, %v675
  %v1140 = vpack.c.b16 %v680, %v676
  %v1141 = vpack.c.b16 %v681, %v677
  %v1142 = vpack.c.b16 %v686, %v682
  %v1143 = vpack.c.b16 %v687, %v683
  %v1144 = vpack.c.b16 %v688, %v684
  %v1145 = vpack.c.b16 %v689, %v685
  %v1146 = vpack.c.b16 %v694, %v690
  %v1147 = vpack.c.b16 %v695, %v691
  %v1148 = vpack.c.b16 %v696, %v692
  %v1149 = vpack.c.b16 %v697, %v693
  %v1150 = vpack.c.b16 %v702, %v698
  %v1151 = vpack.c.b16 %v703, %v699
  %v1152 = vpack.c.b16 %v704, %v700
  %v1153 = vpack.c.b16 %v705, %v701
  %v1154 = vpack.c.b16 %v710, %v706
  %v1155 = vpack.c.b16 %v711, %v707
  %v1156 = vpack.c.b16 %v712, %v708
  %v1157 = vpack.c.b16 %v713, %v709
  %v1158 = vpack.c.b16 %v718, %v714
  %v1159 = vpack.c.b16 %v719, %v715
  %v1160 = vpack.c.b16 %v720, %v716
  %v1161 = vpack.c.b16 %v721, %v717
  %v1162 = vpack.c.b16 %v726, %v722
  %v1163 = vpack.c.b16 %v727, %v723
  %v1164 = vpack.c.b16 %v728, %v724
  %v1165 = vpack.c.b16 %v729, %v725
  %v1166 = vpack.c.b16 %v734, %v730
  %v1167 = vpack.c.b16 %v735, %v731
  %v1168 = vpack.c.b16 %v736, %v732
  %v1169 = vpack.c.b16 %v737, %v733
  %v1170 = vpack.c.b16 %v742, %v738
  %v1171 = vpack.c.b16 %v743, %v739
  %v1172 = vpack.c.b16 %v744, %v740
  %v1173 = vpack.c.b16 %v745, %v741
  %v1174 = vpack.c.b16 %v750, %v746
  %v1175 = vpack.c.b16 %v751, %v747
  %v1176 = vpack.c.b16 %v752, %v748
  %v1177 = vpack.c.b16 %v753, %v749
  %v1178 = vpack.c.b16 %v758, %v754
  %v1179 = vpack.c.b16 %v759, %v755
  %v1180 = vpack.c.b16 %v760, %v756
  %v1181 = vpack.c.b16 %v761, %v757
  %v1182 = vpack.c.b16 %v766, %v762
  %v1183 = vpack.c.b16 %v767, %v763
  %v1184 = vpack.c.b16 %v768, %v764
  %v1185 = vpack.c.b16 %v769, %v765
  %v1186 = vpack.c.b16 %v774, %v770
  %v1187 = vpack.c.b16 %v775, %v771
  %v1188 = vpack.c.b16 %v776, %v772
  %v1189 = vpack.c.b16 %v777, %v773
  %v1190 = vpack.c.b16 %v782, %v778
  %v1191 = vpack.c.b16 %v783, %v779
  %v1192 = vpack.c.b16 %v784, %v780
  %v1193 = vpack.c.b16 %v785, %v781
  %v1194 = vpack.c.b16 %v790, %v786
  %v1195 = vpack.c.b16 %v791, %v787
  %v1196 = vpack.c.b16 %v792, %v788
  %v1197 = vpack.c.b16 %v793, %v789
  %v1198 = vpack.c.b16 %v798, %v794
  %v1199 = vpack.c.b16 %v799, %v795
  %v1200 = vpack.c.b16 %v800, %v796
  %v1201 = vpack.c.b16 %v801, %v797
  %v1202 = vpack.c.b16 %v806, %v802
  %v1203 = vpack.c.b16 %v807, %v803
  %v1204 = vpack.c.b16 %v808, %v804
  %v1205 = vpack.c.b16 %v809, %v805
  %v1206 = vpack.c.b16 %v814, %v810
  %v1207 = vpack.c.b16 %v815, %v811
  %v1208 = vpack.c.b16 %v816, %v812
  %v1209 = vpack.c.b16 %v817, %v813
  %v1210 = vpack.c.b16 %v822, %v818
  %v1211 = vpack.c.b16 %v823, %v819
  %v1212 = vpack.c.b16 %v824, %v820
  %v1213 = vpack.c.b16 %v825, %v821
  %v1214 = vpack.c.b16 %v830, %v826
  %v1215 = vpack.c.b16 %v831, %v827
  %v1216 = vpack.c.b16 %v832, %v828
  %v1217 = vpack.c.b16 %v833, %v829
  %v1218 = vpack.c.b16 %v838, %v834
  %v1219 = vpack.c.b16 %v839, %v835
  %v1220 = vpack.c.b16 %v840, %v836
  %v1221 = vpack.c.b16 %v841, %v837
  %v1222 = vpack.c.b16 %v846, %v842
  %v1223 = vpack.c.b16 %v847, %v843
  %v1224 = vpack.c.b16 %v848, %v844
  %v1225 = vpack.c.b16 %v849, %v845
  %v1226 = vpack.c.b16 %v854, %v850
  %v1227 = vpack.c.b16 %v855, %v851
  %v1228 = vpack.c.b16 %v856, %v852
  %v1229 = vpack.c.b16 %v857, %v853
  %v1230 = vpack.c.b16 %v862, %v858
  %v1231 = vpack.c.b16 %v863, %v859
  %v1232 = vpack.c.b16 %v864, %v860
  %v1233 = vpack.c.b16 %v865, %v861
  %v1234 = vpack.c.b16 %v870, %v866
  %v1235 = vpack.c.b16 %v871, %v867
  %v1236 = vpack.c.b16 %v872, %v868
  %v1237 = vpack.c.b16 %v873, %v869
  %v1238 = vpack.c.b16 %v878, %v874
  %v1239 = vpack.c.b16 %v879, %v875
  %v1240 = vpack.c.b16 %v880, %v876
  %v1241 = vpack.c.b16 %v881, %v877
  %v1242 = vpack.c.b16 %v886, %v882
  %v1243 = vpack.c.b16 %v887, %v883
  %v1244 = vpack.c.b16 %v888, %v884
  %v1245 = vpack.c.b16 %v889, %v885
  %v1246 = vpack.c.b16 %v894, %v890
  %v1247 = vpack.c.b16 %v895, %v891
  %v1248 = vpack.c.b16 %v896, %v892
  %v1249 = vpack.c.b16 %v897, %v893
  %v1250 = vpack.c.b16 %v902, %v898
  %v1251 = vpack.c.b16 %v903, %v899
  %v1252 = vpack.c.b16 %v904, %v900
  %v1253 = vpack.c.b16 %v905, %v901
  %v1254 = vpack.c.b16 %v910, %v906
  %v1255 = vpack.c.b16 %v911, %v907
  %v1256 = vpack.c.b16 %v912, %v908
  %v1257 = vpack.c.b16 %v913, %v909
  %v1258 = vpack.c.b16 %v918, %v914
  %v1259 = vpack.c.b16 %v919, %v915
  %v1260 = vpack.c.b16 %v920, %v916
  %v1261 = vpack.c.b16 %v921, %v917
  %v1262 = vpack.c.b16 %v926, %v922
  %v1263 = vpack.c.b16 %v927, %v923
  %v1264 = vpack.c.b16 %v928, %v924
  %v1265 = vpack.c.b16 %v929, %v925
  %v1266 = vpack.c.b16 %v934, %v930
  %v1267 = vpack.c.b16 %v935, %v931
  %v1268 = vpack.c.b16 %v936, %v932
  %v1269 = vpack.c.b16 %v937, %v933
  %v1270 = vpack.c.b16 %v942, %v938
  %v1271 = vpack.c.b16 %v943, %v939
  %v1272 = vpack.c.b16 %v944, %v940
  %v1273 = vpack.c.b16 %v945, %v941
  %v1274 = vpack.c.b16 %v950, %v946
  %v1275 = vpack.c.b16 %v951, %v947
  %v1276 = vpack.c.b16 %v952, %v948
  %v1277 = vpack.c.b16 %v953, %v949
  %v1278 = vpack.c.b16 %v958, %v954
  %v1279 = vpack.c.b16 %v959, %v955
  %v1280 = vpack.c.b16 %v960, %v956
  %v1281 = vpack.c.b16 %v961, %v957
  %v1282 = vpack.c.b16 %v966, %v962
  %v1283 = vpack.c.b16 %v967, %v963
  %v1284 = vpack.c.b16 %v968, %v964
  %v1285 = vpack.c.b16 %v969, %v965
  %v1286 = vpack.c.b16 %v974, %v970
  %v1287 = vpack.c.b16 %v975, %v971
  %v1288 = vpack.c.b16 %v976, %v972
  %v1289 = vpack.c.b16 %v977, %v973
  %v1290 = vpack.c.b16 %v982, %v978
  %v1291 = vpack.c.b16 %v983, %v979
  %v1292 = vpack.c.b16 %v984, %v980
  %v1293 = vpack.c.b16 %v985, %v981
  %v1294 = vpack.c.b16 %v990, %v986
  %v1295 = vpack.c.b16 %v991, %v987
  %v1296 = vpack.c.b16 %v992, %v988
  %v1297 = vpack.c.b16 %v993, %v989
  %v1298 = vpack.c.b16 %v998, %v994
  %v1299 = vpack.c.b16 %v999, %v995
  %v1300 = vpack.c.b16 %v1000, %v996
  %v1301 = vpack.c.b16 %v1001, %v997
  %v1302 = vpack.c.b16 %v1006, %v1002
  %v1303 = vpack.c.b16 %v1007, %v1003
  %v1304 = vpack.c.b16 %v1008, %v1004
  %v1305 = vpack.c.b16 %v1009, %v1005
  %v1306 = vpack.c.b16 %v1014, %v1010
  %v1307 = vpack.c.b16 %v1015, %v1011
  %v1308 = vpack.c.b16 %v1016, %v1012
  %v1309 = vpack.c.b16 %v1017, %v1013
  %v1310 = vpack.c.b16 %v1022, %v1018
  %v1311 = vpack.c.b16 %v1023, %v1019
  %v1312 = vpack.c.b16 %v1024, %v1020
  %v1313 = vpack.c.b16 %v1025, %v1021
  %v1314 = vpack.c.b16 %v1030, %v1026
  %v1315 = vpack.c.b16 %v1031, %v1027
  %v1316 = vpack.c.b16 %v1032, %v1028
  %v1317 = vpack.c.b16 %v1033, %v1029
  %v1318 = vpack.c.b16 %v1038, %v1034
  %v1319 = vpack.c.b16 %v1039, %v1035
  %v1320 = vpack.c.b16 %v1040, %v1036
  %v1321 = vpack.c.b16 %v1041, %v1037
  %v1322 = vpack.c.b16 %v1046, %v1042
  %v1323 = vpack.c.b16 %v1047, %v1043
  %v1324 = vpack.c.b16 %v1048, %v1044
  %v1325 = vpack.c.b16 %v1049, %v1045
  %v1326 = vpack.c.b16 %v1054, %v1050
  %v1327 = vpack.c.b16 %v1055, %v1051
  %v1328 = vpack.c.b16 %v1056, %v1052
  %v1329 = vpack.c.b16 %v1057, %v1053
  %v1330 = vpack.c.b16 %v1062, %v1058
  %v1331 = vpack.c.b16 %v1063, %v1059
  %v1332 = vpack.c.b16 %v1064, %v1060
  %v1333 = vpack.c.b16 %v1065, %v1061
  %v1334 = vpack.c.b16 %v1070, %v1066
  %v1335 = vpack.c.b16 %v1071, %v1067
  %v1336 = vpack.c.b16 %v1072, %v1068
  %v1337 = vpack.c.b16 %v1073, %v1069
  %v1338 = vpack.c.b16 %v1078, %v1074
  %v1339 = vpack.c.b16 %v1079, %v1075
  %v1340 = vpack.c.b16 %v1080, %v1076
  %v1341 = vpack.c.b16 %v1081, %v1077
  %v1342 = vpack.c.b16 %v1086, %v1082
  %v1343 = vpack.c.b16 %v1087, %v1083
  %v1344 = vpack.c.b16 %v1088, %v1084
  %v1345 = vpack.c.b16 %v1089, %v1085
  %1602 = vmatprep.subr.bf16.mxu0 %v1119
  %1603 = vmatpush1.bf16.msra.mxu0 %v1118
  %1604 = vmatprep.subr.bf16.mxu0 %v1115
  %1605 = vmatpush1.bf16.msra.mxu0 %v1114
  %1606 = vmatprep.subr.bf16.mxu0 %v1111
  %1607 = vmatpush1.bf16.msra.mxu0 %v1110
  %1608 = vmatprep.subr.bf16.mxu0 %v1107
  %1609 = vmatpush1.bf16.msra.mxu0 %v1106
  %1610 = vmatprep.subr.bf16.mxu0 %v1103
  %1611 = vmatpush1.bf16.msra.mxu0 %v1102
  %1612 = vmatprep.subr.bf16.mxu0 %v1099
  %1613 = vmatpush1.bf16.msra.mxu0 %v1098
  %1614 = vmatprep.subr.bf16.mxu0 %v1095
  %1615 = vmatpush1.bf16.msra.mxu0 %v1094
  %1616 = vmatprep.subr.bf16.mxu0 %v1091
  %1617 = vmatpush1.bf16.msra.mxu0 %v1090
  %1618 = vmatprep.subr.bf16.mxu0 %v1151
  %1619 = vmatpush2.bf16.msra.mxu0 %v1150
  %1620 = vmatprep.subr.bf16.mxu0 %v1147
  %1621 = vmatpush2.bf16.msra.mxu0 %v1146
  %1622 = vmatprep.subr.bf16.mxu0 %v1143
  %1623 = vmatpush2.bf16.msra.mxu0 %v1142
  %1624 = vmatprep.subr.bf16.mxu0 %v1139
  %1625 = vmatpush2.bf16.msra.mxu0 %v1138
  %1626 = vmatprep.subr.bf16.mxu0 %v1135
  %1627 = vmatpush2.bf16.msra.mxu0 %v1134
  %1628 = vmatprep.subr.bf16.mxu0 %v1131
  %1629 = vmatpush2.bf16.msra.mxu0 %v1130
  %1630 = vmatprep.subr.bf16.mxu0 %v1127
  %1631 = vmatpush2.bf16.msra.mxu0 %v1126
  %1632 = vmatprep.subr.bf16.mxu0 %v1123
  %1633 = vmatpush2.bf16.msra.mxu0 %v1122
  %1634 = vmatprep.mubr.bf16.mxu0 %v37
  %1635 = vmatmul.mubr.bf16.gmra.mxu0 %v36
  %v1636 = vpop.f32.mrf.mxu0
  %v1637 = vadd.f32 %v305, %v1636
  %v1638 = vpop.f32.mrf.mxu0
  %v1639 = vadd.f32 %v309, %v1638
  %v1640 = vpop.f32.mrf.mxu0
  %v1641 = vpop.f32.mrf.mxu0
  %1642 = vdwg.mxu0
  %1643 = vmatprep.subr.bf16.mxu0 %v1183
  %1644 = vmatpush1.bf16.msra.mxu0 %v1182
  %1645 = vmatprep.subr.bf16.mxu0 %v1179
  %1646 = vmatpush1.bf16.msra.mxu0 %v1178
  %1647 = vmatprep.subr.bf16.mxu0 %v1175
  %1648 = vmatpush1.bf16.msra.mxu0 %v1174
  %1649 = vmatprep.subr.bf16.mxu0 %v1171
  %1650 = vmatpush1.bf16.msra.mxu0 %v1170
  %1651 = vmatprep.subr.bf16.mxu0 %v1167
  %1652 = vmatpush1.bf16.msra.mxu0 %v1166
  %1653 = vmatprep.subr.bf16.mxu0 %v1163
  %1654 = vmatpush1.bf16.msra.mxu0 %v1162
  %1655 = vmatprep.subr.bf16.mxu0 %v1159
  %1656 = vmatpush1.bf16.msra.mxu0 %v1158
  %1657 = vmatprep.subr.bf16.mxu0 %v1155
  %1658 = vmatpush1.bf16.msra.mxu0 %v1154
  %1659 = vmatprep.subr.bf16.mxu0 %v1215
  %1660 = vmatpush2.bf16.msra.mxu0 %v1214
  %1661 = vmatprep.subr.bf16.mxu0 %v1211
  %1662 = vmatpush2.bf16.msra.mxu0 %v1210
  %1663 = vmatprep.subr.bf16.mxu0 %v1207
  %1664 = vmatpush2.bf16.msra.mxu0 %v1206
  %1665 = vmatprep.subr.bf16.mxu0 %v1203
  %1666 = vmatpush2.bf16.msra.mxu0 %v1202
  %1667 = vmatprep.subr.bf16.mxu0 %v1199
  %1668 = vmatpush2.bf16.msra.mxu0 %v1198
  %1669 = vmatprep.subr.bf16.mxu0 %v1195
  %1670 = vmatpush2.bf16.msra.mxu0 %v1194
  %1671 = vmatprep.subr.bf16.mxu0 %v1191
  %1672 = vmatpush2.bf16.msra.mxu0 %v1190
  %1673 = vmatprep.subr.bf16.mxu0 %v1187
  %1674 = vmatpush2.bf16.msra.mxu0 %v1186
  %1675 = vmatprep.mubr.bf16.mxu0 %v39
  %1676 = vmatmul.mubr.bf16.gmra.mxu0 %v38
  %v1677 = vpop.f32.mrf.mxu0
  %v1678 = vadd.f32 %v1637, %v1677
  %v1679 = vpop.f32.mrf.mxu0
  %v1680 = vadd.f32 %v1639, %v1679
  %v1681 = vpop.f32.mrf.mxu0
  %v1682 = vpop.f32.mrf.mxu0
  %1683 = vdwg.mxu0
  %1684 = vmatprep.subr.bf16.mxu0 %v1247
  %1685 = vmatpush1.bf16.msra.mxu0 %v1246
  %1686 = vmatprep.subr.bf16.mxu0 %v1243
  %1687 = vmatpush1.bf16.msra.mxu0 %v1242
  %1688 = vmatprep.subr.bf16.mxu0 %v1239
  %1689 = vmatpush1.bf16.msra.mxu0 %v1238
  %1690 = vmatprep.subr.bf16.mxu0 %v1235
  %1691 = vmatpush1.bf16.msra.mxu0 %v1234
  %1692 = vmatprep.subr.bf16.mxu0 %v1231
  %1693 = vmatpush1.bf16.msra.mxu0 %v1230
  %1694 = vmatprep.subr.bf16.mxu0 %v1227
  %1695 = vmatpush1.bf16.msra.mxu0 %v1226
  %1696 = vmatprep.subr.bf16.mxu0 %v1223
  %1697 = vmatpush1.bf16.msra.mxu0 %v1222
  %1698 = vmatprep.subr.bf16.mxu0 %v1219
  %1699 = vmatpush1.bf16.msra.mxu0 %v1218
  %1700 = vmatprep.subr.bf16.mxu0 %v1279
  %1701 = vmatpush2.bf16.msra.mxu0 %v1278
  %1702 = vmatprep.subr.bf16.mxu0 %v1275
  %1703 = vmatpush2.bf16.msra.mxu0 %v1274
  %1704 = vmatprep.subr.bf16.mxu0 %v1271
  %1705 = vmatpush2.bf16.msra.mxu0 %v1270
  %1706 = vmatprep.subr.bf16.mxu0 %v1267
  %1707 = vmatpush2.bf16.msra.mxu0 %v1266
  %1708 = vmatprep.subr.bf16.mxu0 %v1263
  %1709 = vmatpush2.bf16.msra.mxu0 %v1262
  %1710 = vmatprep.subr.bf16.mxu0 %v1259
  %1711 = vmatpush2.bf16.msra.mxu0 %v1258
  %1712 = vmatprep.subr.bf16.mxu0 %v1255
  %1713 = vmatpush2.bf16.msra.mxu0 %v1254
  %1714 = vmatprep.subr.bf16.mxu0 %v1251
  %1715 = vmatpush2.bf16.msra.mxu0 %v1250
  %1716 = vmatprep.mubr.bf16.mxu0 %v41
  %1717 = vmatmul.mubr.bf16.gmra.mxu0 %v40
  %v1718 = vpop.f32.mrf.mxu0
  %v1719 = vadd.f32 %v1678, %v1718
  %v1720 = vpop.f32.mrf.mxu0
  %v1721 = vadd.f32 %v1680, %v1720
  %v1722 = vpop.f32.mrf.mxu0
  %v1723 = vpop.f32.mrf.mxu0
  %1724 = vdwg.mxu0
  %1725 = vmatprep.subr.bf16.mxu0 %v1311
  %1726 = vmatpush1.bf16.msra.mxu0 %v1310
  %1727 = vmatprep.subr.bf16.mxu0 %v1307
  %1728 = vmatpush1.bf16.msra.mxu0 %v1306
  %1729 = vmatprep.subr.bf16.mxu0 %v1303
  %1730 = vmatpush1.bf16.msra.mxu0 %v1302
  %1731 = vmatprep.subr.bf16.mxu0 %v1299
  %1732 = vmatpush1.bf16.msra.mxu0 %v1298
  %1733 = vmatprep.subr.bf16.mxu0 %v1295
  %1734 = vmatpush1.bf16.msra.mxu0 %v1294
  %1735 = vmatprep.subr.bf16.mxu0 %v1291
  %1736 = vmatpush1.bf16.msra.mxu0 %v1290
  %1737 = vmatprep.subr.bf16.mxu0 %v1287
  %1738 = vmatpush1.bf16.msra.mxu0 %v1286
  %1739 = vmatprep.subr.bf16.mxu0 %v1283
  %1740 = vmatpush1.bf16.msra.mxu0 %v1282
  %1741 = vmatprep.subr.bf16.mxu0 %v1343
  %1742 = vmatpush2.bf16.msra.mxu0 %v1342
  %1743 = vmatprep.subr.bf16.mxu0 %v1339
  %1744 = vmatpush2.bf16.msra.mxu0 %v1338
  %1745 = vmatprep.subr.bf16.mxu0 %v1335
  %1746 = vmatpush2.bf16.msra.mxu0 %v1334
  %1747 = vmatprep.subr.bf16.mxu0 %v1331
  %1748 = vmatpush2.bf16.msra.mxu0 %v1330
  %1749 = vmatprep.subr.bf16.mxu0 %v1327
  %1750 = vmatpush2.bf16.msra.mxu0 %v1326
  %1751 = vmatprep.subr.bf16.mxu0 %v1323
  %1752 = vmatpush2.bf16.msra.mxu0 %v1322
  %1753 = vmatprep.subr.bf16.mxu0 %v1319
  %1754 = vmatpush2.bf16.msra.mxu0 %v1318
  %1755 = vmatprep.subr.bf16.mxu0 %v1315
  %1756 = vmatpush2.bf16.msra.mxu0 %v1314
  %1757 = vmatprep.mubr.bf16.mxu0 %v43
  %1758 = vmatmul.mubr.bf16.gmra.mxu0 %v42
  %v1759 = vpop.f32.mrf.mxu0
  %v1760 = vadd.f32 %v1719, %v1759
  %v1761 = vpop.f32.mrf.mxu0
  %v1762 = vadd.f32 %v1721, %v1761
  %v1763 = vpop.f32.mrf.mxu0
  %v1764 = vpop.f32.mrf.mxu0
  %1765 = vdwg.mxu0
  %1766 = vmatprep.subr.bf16.mxu0 %v1121
  %1767 = vmatpush1.bf16.msra.mxu0 %v1120
  %1768 = vmatprep.subr.bf16.mxu0 %v1117
  %1769 = vmatpush1.bf16.msra.mxu0 %v1116
  %1770 = vmatprep.subr.bf16.mxu0 %v1113
  %1771 = vmatpush1.bf16.msra.mxu0 %v1112
  %1772 = vmatprep.subr.bf16.mxu0 %v1109
  %1773 = vmatpush1.bf16.msra.mxu0 %v1108
  %1774 = vmatprep.subr.bf16.mxu0 %v1105
  %1775 = vmatpush1.bf16.msra.mxu0 %v1104
  %1776 = vmatprep.subr.bf16.mxu0 %v1101
  %1777 = vmatpush1.bf16.msra.mxu0 %v1100
  %1778 = vmatprep.subr.bf16.mxu0 %v1097
  %1779 = vmatpush1.bf16.msra.mxu0 %v1096
  %1780 = vmatprep.subr.bf16.mxu0 %v1093
  %1781 = vmatpush1.bf16.msra.mxu0 %v1092
  %1782 = vmatprep.subr.bf16.mxu0 %v1153
  %1783 = vmatpush2.bf16.msra.mxu0 %v1152
  %1784 = vmatprep.subr.bf16.mxu0 %v1149
  %1785 = vmatpush2.bf16.msra.mxu0 %v1148
  %1786 = vmatprep.subr.bf16.mxu0 %v1145
  %1787 = vmatpush2.bf16.msra.mxu0 %v1144
  %1788 = vmatprep.subr.bf16.mxu0 %v1141
  %1789 = vmatpush2.bf16.msra.mxu0 %v1140
  %1790 = vmatprep.subr.bf16.mxu0 %v1137
  %1791 = vmatpush2.bf16.msra.mxu0 %v1136
  %1792 = vmatprep.subr.bf16.mxu0 %v1133
  %1793 = vmatpush2.bf16.msra.mxu0 %v1132
  %1794 = vmatprep.subr.bf16.mxu0 %v1129
  %1795 = vmatpush2.bf16.msra.mxu0 %v1128
  %1796 = vmatprep.subr.bf16.mxu0 %v1125
  %1797 = vmatpush2.bf16.msra.mxu0 %v1124
  %1798 = vmatprep.mubr.bf16.mxu0 %v37
  %1799 = vmatmul.mubr.bf16.gmra.mxu0 %v36
  %v1800 = vpop.f32.mrf.mxu0
  %v1801 = vadd.f32 %v313, %v1800
  %v1802 = vpop.f32.mrf.mxu0
  %v1803 = vadd.f32 %v317, %v1802
  %v1804 = vpop.f32.mrf.mxu0
  %v1805 = vpop.f32.mrf.mxu0
  %1806 = vdwg.mxu0
  %1807 = vmatprep.subr.bf16.mxu0 %v1185
  %1808 = vmatpush1.bf16.msra.mxu0 %v1184
  %1809 = vmatprep.subr.bf16.mxu0 %v1181
  %1810 = vmatpush1.bf16.msra.mxu0 %v1180
  %1811 = vmatprep.subr.bf16.mxu0 %v1177
  %1812 = vmatpush1.bf16.msra.mxu0 %v1176
  %1813 = vmatprep.subr.bf16.mxu0 %v1173
  %1814 = vmatpush1.bf16.msra.mxu0 %v1172
  %1815 = vmatprep.subr.bf16.mxu0 %v1169
  %1816 = vmatpush1.bf16.msra.mxu0 %v1168
  %1817 = vmatprep.subr.bf16.mxu0 %v1165
  %1818 = vmatpush1.bf16.msra.mxu0 %v1164
  %1819 = vmatprep.subr.bf16.mxu0 %v1161
  %1820 = vmatpush1.bf16.msra.mxu0 %v1160
  %1821 = vmatprep.subr.bf16.mxu0 %v1157
  %1822 = vmatpush1.bf16.msra.mxu0 %v1156
  %1823 = vmatprep.subr.bf16.mxu0 %v1217
  %1824 = vmatpush2.bf16.msra.mxu0 %v1216
  %1825 = vmatprep.subr.bf16.mxu0 %v1213
  %1826 = vmatpush2.bf16.msra.mxu0 %v1212
  %1827 = vmatprep.subr.bf16.mxu0 %v1209
  %1828 = vmatpush2.bf16.msra.mxu0 %v1208
  %1829 = vmatprep.subr.bf16.mxu0 %v1205
  %1830 = vmatpush2.bf16.msra.mxu0 %v1204
  %1831 = vmatprep.subr.bf16.mxu0 %v1201
  %1832 = vmatpush2.bf16.msra.mxu0 %v1200
  %1833 = vmatprep.subr.bf16.mxu0 %v1197
  %1834 = vmatpush2.bf16.msra.mxu0 %v1196
  %1835 = vmatprep.subr.bf16.mxu0 %v1193
  %1836 = vmatpush2.bf16.msra.mxu0 %v1192
  %1837 = vmatprep.subr.bf16.mxu0 %v1189
  %1838 = vmatpush2.bf16.msra.mxu0 %v1188
  %1839 = vmatprep.mubr.bf16.mxu0 %v39
  %1840 = vmatmul.mubr.bf16.gmra.mxu0 %v38
  %v1841 = vpop.f32.mrf.mxu0
  %v1842 = vadd.f32 %v1801, %v1841
  %v1843 = vpop.f32.mrf.mxu0
  %v1844 = vadd.f32 %v1803, %v1843
  %v1845 = vpop.f32.mrf.mxu0
  %v1846 = vpop.f32.mrf.mxu0
  %1847 = vdwg.mxu0
  %1848 = vmatprep.subr.bf16.mxu0 %v1249
  %1849 = vmatpush1.bf16.msra.mxu0 %v1248
  %1850 = vmatprep.subr.bf16.mxu0 %v1245
  %1851 = vmatpush1.bf16.msra.mxu0 %v1244
  %1852 = vmatprep.subr.bf16.mxu0 %v1241
  %1853 = vmatpush1.bf16.msra.mxu0 %v1240
  %1854 = vmatprep.subr.bf16.mxu0 %v1237
  %1855 = vmatpush1.bf16.msra.mxu0 %v1236
  %1856 = vmatprep.subr.bf16.mxu0 %v1233
  %1857 = vmatpush1.bf16.msra.mxu0 %v1232
  %1858 = vmatprep.subr.bf16.mxu0 %v1229
  %1859 = vmatpush1.bf16.msra.mxu0 %v1228
  %1860 = vmatprep.subr.bf16.mxu0 %v1225
  %1861 = vmatpush1.bf16.msra.mxu0 %v1224
  %1862 = vmatprep.subr.bf16.mxu0 %v1221
  %1863 = vmatpush1.bf16.msra.mxu0 %v1220
  %1864 = vmatprep.subr.bf16.mxu0 %v1281
  %1865 = vmatpush2.bf16.msra.mxu0 %v1280
  %1866 = vmatprep.subr.bf16.mxu0 %v1277
  %1867 = vmatpush2.bf16.msra.mxu0 %v1276
  %1868 = vmatprep.subr.bf16.mxu0 %v1273
  %1869 = vmatpush2.bf16.msra.mxu0 %v1272
  %1870 = vmatprep.subr.bf16.mxu0 %v1269
  %1871 = vmatpush2.bf16.msra.mxu0 %v1268
  %1872 = vmatprep.subr.bf16.mxu0 %v1265
  %1873 = vmatpush2.bf16.msra.mxu0 %v1264
  %1874 = vmatprep.subr.bf16.mxu0 %v1261
  %1875 = vmatpush2.bf16.msra.mxu0 %v1260
  %1876 = vmatprep.subr.bf16.mxu0 %v1257
  %1877 = vmatpush2.bf16.msra.mxu0 %v1256
  %1878 = vmatprep.subr.bf16.mxu0 %v1253
  %1879 = vmatpush2.bf16.msra.mxu0 %v1252
  %1880 = vmatprep.mubr.bf16.mxu0 %v41
  %1881 = vmatmul.mubr.bf16.gmra.mxu0 %v40
  %v1882 = vpop.f32.mrf.mxu0
  %v1883 = vadd.f32 %v1842, %v1882
  %v1884 = vpop.f32.mrf.mxu0
  %v1885 = vadd.f32 %v1844, %v1884
  %v1886 = vpop.f32.mrf.mxu0
  %v1887 = vpop.f32.mrf.mxu0
  %1888 = vdwg.mxu0
  %1889 = vmatprep.subr.bf16.mxu0 %v1313
  %1890 = vmatpush1.bf16.msra.mxu0 %v1312
  %1891 = vmatprep.subr.bf16.mxu0 %v1309
  %1892 = vmatpush1.bf16.msra.mxu0 %v1308
  %1893 = vmatprep.subr.bf16.mxu0 %v1305
  %1894 = vmatpush1.bf16.msra.mxu0 %v1304
  %1895 = vmatprep.subr.bf16.mxu0 %v1301
  %1896 = vmatpush1.bf16.msra.mxu0 %v1300
  %1897 = vmatprep.subr.bf16.mxu0 %v1297
  %1898 = vmatpush1.bf16.msra.mxu0 %v1296
  %1899 = vmatprep.subr.bf16.mxu0 %v1293
  %1900 = vmatpush1.bf16.msra.mxu0 %v1292
  %1901 = vmatprep.subr.bf16.mxu0 %v1289
  %1902 = vmatpush1.bf16.msra.mxu0 %v1288
  %1903 = vmatprep.subr.bf16.mxu0 %v1285
  %1904 = vmatpush1.bf16.msra.mxu0 %v1284
  %1905 = vmatprep.subr.bf16.mxu0 %v1345
  %1906 = vmatpush2.bf16.msra.mxu0 %v1344
  %1907 = vmatprep.subr.bf16.mxu0 %v1341
  %1908 = vmatpush2.bf16.msra.mxu0 %v1340
  %1909 = vmatprep.subr.bf16.mxu0 %v1337
  %1910 = vmatpush2.bf16.msra.mxu0 %v1336
  %1911 = vmatprep.subr.bf16.mxu0 %v1333
  %1912 = vmatpush2.bf16.msra.mxu0 %v1332
  %1913 = vmatprep.subr.bf16.mxu0 %v1329
  %1914 = vmatpush2.bf16.msra.mxu0 %v1328
  %1915 = vmatprep.subr.bf16.mxu0 %v1325
  %1916 = vmatpush2.bf16.msra.mxu0 %v1324
  %1917 = vmatprep.subr.bf16.mxu0 %v1321
  %1918 = vmatpush2.bf16.msra.mxu0 %v1320
  %1919 = vmatprep.subr.bf16.mxu0 %v1317
  %1920 = vmatpush2.bf16.msra.mxu0 %v1316
  %1921 = vmatprep.mubr.bf16.mxu0 %v43
  %1922 = vmatmul.mubr.bf16.gmra.mxu0 %v42
  %v1923 = vpop.f32.mrf.mxu0
  %v1924 = vadd.f32 %v1883, %v1923
  %v1925 = vpop.f32.mrf.mxu0
  %v1926 = vadd.f32 %v1885, %v1925
  %v1927 = vpop.f32.mrf.mxu0
  %v1928 = vpop.f32.mrf.mxu0
  %1929 = vdwg.mxu0
  %v1930 = vmul.f32 %v1760, 0.2
  %v1931 = vmul.f32 %v1762, 0.2
  %v1932 = vmul.f32 %v1924, 0.2
  %v1933 = vmul.f32 %v1926, 0.2
  %v1934 = vmax.f32 %v1760, %v1930
  %v1935 = vmax.f32 %v1762, %v1931
  %v1936 = vmax.f32 %v1924, %v1932
  %v1937 = vmax.f32 %v1926, %v1933
  %v1938 = vpack.c.bf16 %v1934, %v1934
  %v1939 = vpack.c.bf16 %v1935, %v1935
  %v1940 = vpack.c.bf16 %v1936, %v1936
  %v1941 = vpack.c.bf16 %v1937, %v1937
  %v1942 = vld [vmem:[%s3] sm:$0xff]
  %v1943 = vld [vmem:[%s3 + $0x8] sm:$0xff]
  %v1944 = vld [vmem:[%s3 + $0x10] sm:$0xff]
  %v1945 = vld [vmem:[%s3 + $0x18] sm:$0xff]
  %v1946 = vld [vmem:[%s3 + $0x20] sm:$0xff]
  %v1947 = vld [vmem:[%s3 + $0x28] sm:$0xff]
  %v1948 = vld [vmem:[%s3 + $0x30] sm:$0xff]
  %v1949 = vld [vmem:[%s3 + $0x38] sm:$0xff]
  %v1950 = vld [vmem:[%s3 + $0x40] sm:$0xff]
  %v1951 = vld [vmem:[%s3 + $0x48] sm:$0xff]
  %v1952 = vld [vmem:[%s3 + $0x50] sm:$0xff]
  %v1953 = vld [vmem:[%s3 + $0x58] sm:$0xff]
  %v1954 = vld [vmem:[%s3 + $0x60] sm:$0xff]
  %v1955 = vld [vmem:[%s3 + $0x68] sm:$0xff]
  %v1956 = vld [vmem:[%s3 + $0x70] sm:$0xff]
  %v1957 = vld [vmem:[%s3 + $0x78] sm:$0xff]
  %v1958 = vld [vmem:[%s3 + $0x80] sm:$0xff]
  %v1959 = vld [vmem:[%s3 + $0x88] sm:$0xff]
  %v1960 = vld [vmem:[%s3 + $0x90] sm:$0xff]
  %v1961 = vld [vmem:[%s3 + $0x98] sm:$0xff]
  %v1962 = vld [vmem:[%s3 + $0xa0] sm:$0xff]
  %v1963 = vld [vmem:[%s3 + $0xa8] sm:$0xff]
  %v1964 = vld [vmem:[%s3 + $0xb0] sm:$0xff]
  %v1965 = vld [vmem:[%s3 + $0xb8] sm:$0xff]
  %v1966 = vld [vmem:[%s3 + $0xc0] sm:$0xff]
  %v1967 = vld [vmem:[%s3 + $0xc8] sm:$0xff]
  %v1968 = vld [vmem:[%s3 + $0xd0] sm:$0xff]
  %v1969 = vld [vmem:[%s3 + $0xd8] sm:$0xff]
  %v1970 = vld [vmem:[%s3 + $0xe0] sm:$0xff]
  %v1971 = vld [vmem:[%s3 + $0xe8] sm:$0xff]
  %v1972 = vld [vmem:[%s3 + $0xf0] sm:$0xff]
  %v1973 = vld [vmem:[%s3 + $0xf8] sm:$0xff]
  %v1974 = vld [vmem:[%s3 + $0x100] sm:$0xff]
  %v1975 = vld [vmem:[%s3 + $0x108] sm:$0xff]
  %v1976 = vld [vmem:[%s3 + $0x110] sm:$0xff]
  %v1977 = vld [vmem:[%s3 + $0x118] sm:$0xff]
  %v1978 = vld [vmem:[%s3 + $0x120] sm:$0xff]
  %v1979 = vld [vmem:[%s3 + $0x128] sm:$0xff]
  %v1980 = vld [vmem:[%s3 + $0x130] sm:$0xff]
  %v1981 = vld [vmem:[%s3 + $0x138] sm:$0xff]
  %v1982 = vld [vmem:[%s3 + $0x140] sm:$0xff]
  %v1983 = vld [vmem:[%s3 + $0x148] sm:$0xff]
  %v1984 = vld [vmem:[%s3 + $0x150] sm:$0xff]
  %v1985 = vld [vmem:[%s3 + $0x158] sm:$0xff]
  %v1986 = vld [vmem:[%s3 + $0x160] sm:$0xff]
  %v1987 = vld [vmem:[%s3 + $0x168] sm:$0xff]
  %v1988 = vld [vmem:[%s3 + $0x170] sm:$0xff]
  %v1989 = vld [vmem:[%s3 + $0x178] sm:$0xff]
  %v1990 = vld [vmem:[%s3 + $0x180] sm:$0xff]
  %v1991 = vld [vmem:[%s3 + $0x188] sm:$0xff]
  %v1992 = vld [vmem:[%s3 + $0x190] sm:$0xff]
  %v1993 = vld [vmem:[%s3 + $0x198] sm:$0xff]
  %v1994 = vld [vmem:[%s3 + $0x1a0] sm:$0xff]
  %v1995 = vld [vmem:[%s3 + $0x1a8] sm:$0xff]
  %v1996 = vld [vmem:[%s3 + $0x1b0] sm:$0xff]
  %v1997 = vld [vmem:[%s3 + $0x1b8] sm:$0xff]
  %v1998 = vld [vmem:[%s3 + $0x1c0] sm:$0xff]
  %v1999 = vld [vmem:[%s3 + $0x1c8] sm:$0xff]
  %v2000 = vld [vmem:[%s3 + $0x1d0] sm:$0xff]
  %v2001 = vld [vmem:[%s3 + $0x1d8] sm:$0xff]
  %v2002 = vld [vmem:[%s3 + $0x1e0] sm:$0xff]
  %v2003 = vld [vmem:[%s3 + $0x1e8] sm:$0xff]
  %v2004 = vld [vmem:[%s3 + $0x1f0] sm:$0xff]
  %v2005 = vld [vmem:[%s3 + $0x1f8] sm:$0xff]
  %v2006 = vld [vmem:[%s3 + $0x200] sm:$0xff]
  %v2007 = vld [vmem:[%s3 + $0x208] sm:$0xff]
  %v2008 = vld [vmem:[%s3 + $0x210] sm:$0xff]
  %v2009 = vld [vmem:[%s3 + $0x218] sm:$0xff]
  %v2010 = vld [vmem:[%s3 + $0x220] sm:$0xff]
  %v2011 = vld [vmem:[%s3 + $0x228] sm:$0xff]
  %v2012 = vld [vmem:[%s3 + $0x230] sm:$0xff]
  %v2013 = vld [vmem:[%s3 + $0x238] sm:$0xff]
  %v2014 = vld [vmem:[%s3 + $0x240] sm:$0xff]
  %v2015 = vld [vmem:[%s3 + $0x248] sm:$0xff]
  %v2016 = vld [vmem:[%s3 + $0x250] sm:$0xff]
  %v2017 = vld [vmem:[%s3 + $0x258] sm:$0xff]
  %v2018 = vld [vmem:[%s3 + $0x260] sm:$0xff]
  %v2019 = vld [vmem:[%s3 + $0x268] sm:$0xff]
  %v2020 = vld [vmem:[%s3 + $0x270] sm:$0xff]
  %v2021 = vld [vmem:[%s3 + $0x278] sm:$0xff]
  %v2022 = vld [vmem:[%s3 + $0x280] sm:$0xff]
  %v2023 = vld [vmem:[%s3 + $0x288] sm:$0xff]
  %v2024 = vld [vmem:[%s3 + $0x290] sm:$0xff]
  %v2025 = vld [vmem:[%s3 + $0x298] sm:$0xff]
  %v2026 = vld [vmem:[%s3 + $0x2a0] sm:$0xff]
  %v2027 = vld [vmem:[%s3 + $0x2a8] sm:$0xff]
  %v2028 = vld [vmem:[%s3 + $0x2b0] sm:$0xff]
  %v2029 = vld [vmem:[%s3 + $0x2b8] sm:$0xff]
  %v2030 = vld [vmem:[%s3 + $0x2c0] sm:$0xff]
  %v2031 = vld [vmem:[%s3 + $0x2c8] sm:$0xff]
  %v2032 = vld [vmem:[%s3 + $0x2d0] sm:$0xff]
  %v2033 = vld [vmem:[%s3 + $0x2d8] sm:$0xff]
  %v2034 = vld [vmem:[%s3 + $0x2e0] sm:$0xff]
  %v2035 = vld [vmem:[%s3 + $0x2e8] sm:$0xff]
  %v2036 = vld [vmem:[%s3 + $0x2f0] sm:$0xff]
  %v2037 = vld [vmem:[%s3 + $0x2f8] sm:$0xff]
  %v2038 = vld [vmem:[%s3 + $0x300] sm:$0xff]
  %v2039 = vld [vmem:[%s3 + $0x308] sm:$0xff]
  %v2040 = vld [vmem:[%s3 + $0x310] sm:$0xff]
  %v2041 = vld [vmem:[%s3 + $0x318] sm:$0xff]
  %v2042 = vld [vmem:[%s3 + $0x320] sm:$0xff]
  %v2043 = vld [vmem:[%s3 + $0x328] sm:$0xff]
  %v2044 = vld [vmem:[%s3 + $0x330] sm:$0xff]
  %v2045 = vld [vmem:[%s3 + $0x338] sm:$0xff]
  %v2046 = vld [vmem:[%s3 + $0x340] sm:$0xff]
  %v2047 = vld [vmem:[%s3 + $0x348] sm:$0xff]
  %v2048 = vld [vmem:[%s3 + $0x350] sm:$0xff]
  %v2049 = vld [vmem:[%s3 + $0x358] sm:$0xff]
  %v2050 = vld [vmem:[%s3 + $0x360] sm:$0xff]
  %v2051 = vld [vmem:[%s3 + $0x368] sm:$0xff]
  %v2052 = vld [vmem:[%s3 + $0x370] sm:$0xff]
  %v2053 = vld [vmem:[%s3 + $0x378] sm:$0xff]
  %v2054 = vld [vmem:[%s3 + $0x380] sm:$0xff]
  %v2055 = vld [vmem:[%s3 + $0x388] sm:$0xff]
  %v2056 = vld [vmem:[%s3 + $0x390] sm:$0xff]
  %v2057 = vld [vmem:[%s3 + $0x398] sm:$0xff]
  %v2058 = vld [vmem:[%s3 + $0x3a0] sm:$0xff]
  %v2059 = vld [vmem:[%s3 + $0x3a8] sm:$0xff]
  %v2060 = vld [vmem:[%s3 + $0x3b0] sm:$0xff]
  %v2061 = vld [vmem:[%s3 + $0x3b8] sm:$0xff]
  %v2062 = vld [vmem:[%s3 + $0x3c0] sm:$0xff]
  %v2063 = vld [vmem:[%s3 + $0x3c8] sm:$0xff]
  %v2064 = vld [vmem:[%s3 + $0x3d0] sm:$0xff]
  %v2065 = vld [vmem:[%s3 + $0x3d8] sm:$0xff]
  %v2066 = vld [vmem:[%s3 + $0x3e0] sm:$0xff]
  %v2067 = vld [vmem:[%s3 + $0x3e8] sm:$0xff]
  %v2068 = vld [vmem:[%s3 + $0x3f0] sm:$0xff]
  %v2069 = vld [vmem:[%s3 + $0x3f8] sm:$0xff]
  %v2198 = vunpack.c.l.b16 %v1942
  %v2199 = vunpack.c.h.b16 %v1942
  %v2200 = vunpack.c.l.b16 %v1943
  %v2201 = vunpack.c.h.b16 %v1943
  %v2202 = vunpack.c.l.b16 %v1944
  %v2203 = vunpack.c.h.b16 %v1944
  %v2204 = vunpack.c.l.b16 %v1945
  %v2205 = vunpack.c.h.b16 %v1945
  %v2206 = vunpack.c.l.b16 %v1946
  %v2207 = vunpack.c.h.b16 %v1946
  %v2208 = vunpack.c.l.b16 %v1947
  %v2209 = vunpack.c.h.b16 %v1947
  %v2210 = vunpack.c.l.b16 %v1948
  %v2211 = vunpack.c.h.b16 %v1948
  %v2212 = vunpack.c.l.b16 %v1949
  %v2213 = vunpack.c.h.b16 %v1949
  %v2214 = vunpack.c.l.b16 %v1950
  %v2215 = vunpack.c.h.b16 %v1950
  %v2216 = vunpack.c.l.b16 %v1951
  %v2217 = vunpack.c.h.b16 %v1951
  %v2218 = vunpack.c.l.b16 %v1952
  %v2219 = vunpack.c.h.b16 %v1952
  %v2220 = vunpack.c.l.b16 %v1953
  %v2221 = vunpack.c.h.b16 %v1953
  %v2222 = vunpack.c.l.b16 %v1954
  %v2223 = vunpack.c.h.b16 %v1954
  %v2224 = vunpack.c.l.b16 %v1955
  %v2225 = vunpack.c.h.b16 %v1955
  %v2226 = vunpack.c.l.b16 %v1956
  %v2227 = vunpack.c.h.b16 %v1956
  %v2228 = vunpack.c.l.b16 %v1957
  %v2229 = vunpack.c.h.b16 %v1957
  %v2230 = vunpack.c.l.b16 %v1958
  %v2231 = vunpack.c.h.b16 %v1958
  %v2232 = vunpack.c.l.b16 %v1959
  %v2233 = vunpack.c.h.b16 %v1959
  %v2234 = vunpack.c.l.b16 %v1960
  %v2235 = vunpack.c.h.b16 %v1960
  %v2236 = vunpack.c.l.b16 %v1961
  %v2237 = vunpack.c.h.b16 %v1961
  %v2238 = vunpack.c.l.b16 %v1962
  %v2239 = vunpack.c.h.b16 %v1962
  %v2240 = vunpack.c.l.b16 %v1963
  %v2241 = vunpack.c.h.b16 %v1963
  %v2242 = vunpack.c.l.b16 %v1964
  %v2243 = vunpack.c.h.b16 %v1964
  %v2244 = vunpack.c.l.b16 %v1965
  %v2245 = vunpack.c.h.b16 %v1965
  %v2246 = vunpack.c.l.b16 %v1966
  %v2247 = vunpack.c.h.b16 %v1966
  %v2248 = vunpack.c.l.b16 %v1967
  %v2249 = vunpack.c.h.b16 %v1967
  %v2250 = vunpack.c.l.b16 %v1968
  %v2251 = vunpack.c.h.b16 %v1968
  %v2252 = vunpack.c.l.b16 %v1969
  %v2253 = vunpack.c.h.b16 %v1969
  %v2254 = vunpack.c.l.b16 %v1970
  %v2255 = vunpack.c.h.b16 %v1970
  %v2256 = vunpack.c.l.b16 %v1971
  %v2257 = vunpack.c.h.b16 %v1971
  %v2258 = vunpack.c.l.b16 %v1972
  %v2259 = vunpack.c.h.b16 %v1972
  %v2260 = vunpack.c.l.b16 %v1973
  %v2261 = vunpack.c.h.b16 %v1973
  %v2262 = vunpack.c.l.b16 %v1974
  %v2263 = vunpack.c.h.b16 %v1974
  %v2264 = vunpack.c.l.b16 %v1975
  %v2265 = vunpack.c.h.b16 %v1975
  %v2266 = vunpack.c.l.b16 %v1976
  %v2267 = vunpack.c.h.b16 %v1976
  %v2268 = vunpack.c.l.b16 %v1977
  %v2269 = vunpack.c.h.b16 %v1977
  %v2270 = vunpack.c.l.b16 %v1978
  %v2271 = vunpack.c.h.b16 %v1978
  %v2272 = vunpack.c.l.b16 %v1979
  %v2273 = vunpack.c.h.b16 %v1979
  %v2274 = vunpack.c.l.b16 %v1980
  %v2275 = vunpack.c.h.b16 %v1980
  %v2276 = vunpack.c.l.b16 %v1981
  %v2277 = vunpack.c.h.b16 %v1981
  %v2278 = vunpack.c.l.b16 %v1982
  %v2279 = vunpack.c.h.b16 %v1982
  %v2280 = vunpack.c.l.b16 %v1983
  %v2281 = vunpack.c.h.b16 %v1983
  %v2282 = vunpack.c.l.b16 %v1984
  %v2283 = vunpack.c.h.b16 %v1984
  %v2284 = vunpack.c.l.b16 %v1985
  %v2285 = vunpack.c.h.b16 %v1985
  %v2286 = vunpack.c.l.b16 %v1986
  %v2287 = vunpack.c.h.b16 %v1986
  %v2288 = vunpack.c.l.b16 %v1987
  %v2289 = vunpack.c.h.b16 %v1987
  %v2290 = vunpack.c.l.b16 %v1988
  %v2291 = vunpack.c.h.b16 %v1988
  %v2292 = vunpack.c.l.b16 %v1989
  %v2293 = vunpack.c.h.b16 %v1989
  %v2294 = vunpack.c.l.b16 %v1990
  %v2295 = vunpack.c.h.b16 %v1990
  %v2296 = vunpack.c.l.b16 %v1991
  %v2297 = vunpack.c.h.b16 %v1991
  %v2298 = vunpack.c.l.b16 %v1992
  %v2299 = vunpack.c.h.b16 %v1992
  %v2300 = vunpack.c.l.b16 %v1993
  %v2301 = vunpack.c.h.b16 %v1993
  %v2302 = vunpack.c.l.b16 %v1994
  %v2303 = vunpack.c.h.b16 %v1994
  %v2304 = vunpack.c.l.b16 %v1995
  %v2305 = vunpack.c.h.b16 %v1995
  %v2306 = vunpack.c.l.b16 %v1996
  %v2307 = vunpack.c.h.b16 %v1996
  %v2308 = vunpack.c.l.b16 %v1997
  %v2309 = vunpack.c.h.b16 %v1997
  %v2310 = vunpack.c.l.b16 %v1998
  %v2311 = vunpack.c.h.b16 %v1998
  %v2312 = vunpack.c.l.b16 %v1999
  %v2313 = vunpack.c.h.b16 %v1999
  %v2314 = vunpack.c.l.b16 %v2000
  %v2315 = vunpack.c.h.b16 %v2000
  %v2316 = vunpack.c.l.b16 %v2001
  %v2317 = vunpack.c.h.b16 %v2001
  %v2318 = vunpack.c.l.b16 %v2002
  %v2319 = vunpack.c.h.b16 %v2002
  %v2320 = vunpack.c.l.b16 %v2003
  %v2321 = vunpack.c.h.b16 %v2003
  %v2322 = vunpack.c.l.b16 %v2004
  %v2323 = vunpack.c.h.b16 %v2004
  %v2324 = vunpack.c.l.b16 %v2005
  %v2325 = vunpack.c.h.b16 %v2005
  %v2326 = vunpack.c.l.b16 %v2006
  %v2327 = vunpack.c.h.b16 %v2006
  %v2328 = vunpack.c.l.b16 %v2007
  %v2329 = vunpack.c.h.b16 %v2007
  %v2330 = vunpack.c.l.b16 %v2008
  %v2331 = vunpack.c.h.b16 %v2008
  %v2332 = vunpack.c.l.b16 %v2009
  %v2333 = vunpack.c.h.b16 %v2009
  %v2334 = vunpack.c.l.b16 %v2010
  %v2335 = vunpack.c.h.b16 %v2010
  %v2336 = vunpack.c.l.b16 %v2011
  %v2337 = vunpack.c.h.b16 %v2011
  %v2338 = vunpack.c.l.b16 %v2012
  %v2339 = vunpack.c.h.b16 %v2012
  %v2340 = vunpack.c.l.b16 %v2013
  %v2341 = vunpack.c.h.b16 %v2013
  %v2342 = vunpack.c.l.b16 %v2014
  %v2343 = vunpack.c.h.b16 %v2014
  %v2344 = vunpack.c.l.b16 %v2015
  %v2345 = vunpack.c.h.b16 %v2015
  %v2346 = vunpack.c.l.b16 %v2016
  %v2347 = vunpack.c.h.b16 %v2016
  %v2348 = vunpack.c.l.b16 %v2017
  %v2349 = vunpack.c.h.b16 %v2017
  %v2350 = vunpack.c.l.b16 %v2018
  %v2351 = vunpack.c.h.b16 %v2018
  %v2352 = vunpack.c.l.b16 %v2019
  %v2353 = vunpack.c.h.b16 %v2019
  %v2354 = vunpack.c.l.b16 %v2020
  %v2355 = vunpack.c.h.b16 %v2020
  %v2356 = vunpack.c.l.b16 %v2021
  %v2357 = vunpack.c.h.b16 %v2021
  %v2358 = vunpack.c.l.b16 %v2022
  %v2359 = vunpack.c.h.b16 %v2022
  %v2360 = vunpack.c.l.b16 %v2023
  %v2361 = vunpack.c.h.b16 %v2023
  %v2362 = vunpack.c.l.b16 %v2024
  %v2363 = vunpack.c.h.b16 %v2024
  %v2364 = vunpack.c.l.b16 %v2025
  %v2365 = vunpack.c.h.b16 %v2025
  %v2366 = vunpack.c.l.b16 %v2026
  %v2367 = vunpack.c.h.b16 %v2026
  %v2368 = vunpack.c.l.b16 %v2027
  %v2369 = vunpack.c.h.b16 %v2027
  %v2370 = vunpack.c.l.b16 %v2028
  %v2371 = vunpack.c.h.b16 %v2028
  %v2372 = vunpack.c.l.b16 %v2029
  %v2373 = vunpack.c.h.b16 %v2029
  %v2374 = vunpack.c.l.b16 %v2030
  %v2375 = vunpack.c.h.b16 %v2030
  %v2376 = vunpack.c.l.b16 %v2031
  %v2377 = vunpack.c.h.b16 %v2031
  %v2378 = vunpack.c.l.b16 %v2032
  %v2379 = vunpack.c.h.b16 %v2032
  %v2380 = vunpack.c.l.b16 %v2033
  %v2381 = vunpack.c.h.b16 %v2033
  %v2382 = vunpack.c.l.b16 %v2034
  %v2383 = vunpack.c.h.b16 %v2034
  %v2384 = vunpack.c.l.b16 %v2035
  %v2385 = vunpack.c.h.b16 %v2035
  %v2386 = vunpack.c.l.b16 %v2036
  %v2387 = vunpack.c.h.b16 %v2036
  %v2388 = vunpack.c.l.b16 %v2037
  %v2389 = vunpack.c.h.b16 %v2037
  %v2390 = vunpack.c.l.b16 %v2038
  %v2391 = vunpack.c.h.b16 %v2038
  %v2392 = vunpack.c.l.b16 %v2039
  %v2393 = vunpack.c.h.b16 %v2039
  %v2394 = vunpack.c.l.b16 %v2040
  %v2395 = vunpack.c.h.b16 %v2040
  %v2396 = vunpack.c.l.b16 %v2041
  %v2397 = vunpack.c.h.b16 %v2041
  %v2398 = vunpack.c.l.b16 %v2042
  %v2399 = vunpack.c.h.b16 %v2042
  %v2400 = vunpack.c.l.b16 %v2043
  %v2401 = vunpack.c.h.b16 %v2043
  %v2402 = vunpack.c.l.b16 %v2044
  %v2403 = vunpack.c.h.b16 %v2044
  %v2404 = vunpack.c.l.b16 %v2045
  %v2405 = vunpack.c.h.b16 %v2045
  %v2406 = vunpack.c.l.b16 %v2046
  %v2407 = vunpack.c.h.b16 %v2046
  %v2408 = vunpack.c.l.b16 %v2047
  %v2409 = vunpack.c.h.b16 %v2047
  %v2410 = vunpack.c.l.b16 %v2048
  %v2411 = vunpack.c.h.b16 %v2048
  %v2412 = vunpack.c.l.b16 %v2049
  %v2413 = vunpack.c.h.b16 %v2049
  %v2414 = vunpack.c.l.b16 %v2050
  %v2415 = vunpack.c.h.b16 %v2050
  %v2416 = vunpack.c.l.b16 %v2051
  %v2417 = vunpack.c.h.b16 %v2051
  %v2418 = vunpack.c.l.b16 %v2052
  %v2419 = vunpack.c.h.b16 %v2052
  %v2420 = vunpack.c.l.b16 %v2053
  %v2421 = vunpack.c.h.b16 %v2053
  %v2422 = vunpack.c.l.b16 %v2054
  %v2423 = vunpack.c.h.b16 %v2054
  %v2424 = vunpack.c.l.b16 %v2055
  %v2425 = vunpack.c.h.b16 %v2055
  %v2426 = vunpack.c.l.b16 %v2056
  %v2427 = vunpack.c.h.b16 %v2056
  %v2428 = vunpack.c.l.b16 %v2057
  %v2429 = vunpack.c.h.b16 %v2057
  %v2430 = vunpack.c.l.b16 %v2058
  %v2431 = vunpack.c.h.b16 %v2058
  %v2432 = vunpack.c.l.b16 %v2059
  %v2433 = vunpack.c.h.b16 %v2059
  %v2434 = vunpack.c.l.b16 %v2060
  %v2435 = vunpack.c.h.b16 %v2060
  %v2436 = vunpack.c.l.b16 %v2061
  %v2437 = vunpack.c.h.b16 %v2061
  %v2438 = vunpack.c.l.b16 %v2062
  %v2439 = vunpack.c.h.b16 %v2062
  %v2440 = vunpack.c.l.b16 %v2063
  %v2441 = vunpack.c.h.b16 %v2063
  %v2442 = vunpack.c.l.b16 %v2064
  %v2443 = vunpack.c.h.b16 %v2064
  %v2444 = vunpack.c.l.b16 %v2065
  %v2445 = vunpack.c.h.b16 %v2065
  %v2446 = vunpack.c.l.b16 %v2066
  %v2447 = vunpack.c.h.b16 %v2066
  %v2448 = vunpack.c.l.b16 %v2067
  %v2449 = vunpack.c.h.b16 %v2067
  %v2450 = vunpack.c.l.b16 %v2068
  %v2451 = vunpack.c.h.b16 %v2068
  %v2452 = vunpack.c.l.b16 %v2069
  %v2453 = vunpack.c.h.b16 %v2069
  %v2454 = vpack.c.b16 %v2202, %v2198
  %v2455 = vpack.c.b16 %v2203, %v2199
  %v2456 = vpack.c.b16 %v2204, %v2200
  %v2457 = vpack.c.b16 %v2205, %v2201
  %v2458 = vpack.c.b16 %v2210, %v2206
  %v2459 = vpack.c.b16 %v2211, %v2207
  %v2460 = vpack.c.b16 %v2212, %v2208
  %v2461 = vpack.c.b16 %v2213, %v2209
  %v2462 = vpack.c.b16 %v2218, %v2214
  %v2463 = vpack.c.b16 %v2219, %v2215
  %v2464 = vpack.c.b16 %v2220, %v2216
  %v2465 = vpack.c.b16 %v2221, %v2217
  %v2466 = vpack.c.b16 %v2226, %v2222
  %v2467 = vpack.c.b16 %v2227, %v2223
  %v2468 = vpack.c.b16 %v2228, %v2224
  %v2469 = vpack.c.b16 %v2229, %v2225
  %v2470 = vpack.c.b16 %v2234, %v2230
  %v2471 = vpack.c.b16 %v2235, %v2231
  %v2472 = vpack.c.b16 %v2236, %v2232
  %v2473 = vpack.c.b16 %v2237, %v2233
  %v2474 = vpack.c.b16 %v2242, %v2238
  %v2475 = vpack.c.b16 %v2243, %v2239
  %v2476 = vpack.c.b16 %v2244, %v2240
  %v2477 = vpack.c.b16 %v2245, %v2241
  %v2478 = vpack.c.b16 %v2250, %v2246
  %v2479 = vpack.c.b16 %v2251, %v2247
  %v2480 = vpack.c.b16 %v2252, %v2248
  %v2481 = vpack.c.b16 %v2253, %v2249
  %v2482 = vpack.c.b16 %v2258, %v2254
  %v2483 = vpack.c.b16 %v2259, %v2255
  %v2484 = vpack.c.b16 %v2260, %v2256
  %v2485 = vpack.c.b16 %v2261, %v2257
  %v2486 = vpack.c.b16 %v2266, %v2262
  %v2487 = vpack.c.b16 %v2267, %v2263
  %v2488 = vpack.c.b16 %v2268, %v2264
  %v2489 = vpack.c.b16 %v2269, %v2265
  %v2490 = vpack.c.b16 %v2274, %v2270
  %v2491 = vpack.c.b16 %v2275, %v2271
  %v2492 = vpack.c.b16 %v2276, %v2272
  %v2493 = vpack.c.b16 %v2277, %v2273
  %v2494 = vpack.c.b16 %v2282, %v2278
  %v2495 = vpack.c.b16 %v2283, %v2279
  %v2496 = vpack.c.b16 %v2284, %v2280
  %v2497 = vpack.c.b16 %v2285, %v2281
  %v2498 = vpack.c.b16 %v2290, %v2286
  %v2499 = vpack.c.b16 %v2291, %v2287
  %v2500 = vpack.c.b16 %v2292, %v2288
  %v2501 = vpack.c.b16 %v2293, %v2289
  %v2502 = vpack.c.b16 %v2298, %v2294
  %v2503 = vpack.c.b16 %v2299, %v2295
  %v2504 = vpack.c.b16 %v2300, %v2296
  %v2505 = vpack.c.b16 %v2301, %v2297
  %v2506 = vpack.c.b16 %v2306, %v2302
  %v2507 = vpack.c.b16 %v2307, %v2303
  %v2508 = vpack.c.b16 %v2308, %v2304
  %v2509 = vpack.c.b16 %v2309, %v2305
  %v2510 = vpack.c.b16 %v2314, %v2310
  %v2511 = vpack.c.b16 %v2315, %v2311
  %v2512 = vpack.c.b16 %v2316, %v2312
  %v2513 = vpack.c.b16 %v2317, %v2313
  %v2514 = vpack.c.b16 %v2322, %v2318
  %v2515 = vpack.c.b16 %v2323, %v2319
  %v2516 = vpack.c.b16 %v2324, %v2320
  %v2517 = vpack.c.b16 %v2325, %v2321
  %v2518 = vpack.c.b16 %v2330, %v2326
  %v2519 = vpack.c.b16 %v2331, %v2327
  %v2520 = vpack.c.b16 %v2332, %v2328
  %v2521 = vpack.c.b16 %v2333, %v2329
  %v2522 = vpack.c.b16 %v2338, %v2334
  %v2523 = vpack.c.b16 %v2339, %v2335
  %v2524 = vpack.c.b16 %v2340, %v2336
  %v2525 = vpack.c.b16 %v2341, %v2337
  %v2526 = vpack.c.b16 %v2346, %v2342
  %v2527 = vpack.c.b16 %v2347, %v2343
  %v2528 = vpack.c.b16 %v2348, %v2344
  %v2529 = vpack.c.b16 %v2349, %v2345
  %v2530 = vpack.c.b16 %v2354, %v2350
  %v2531 = vpack.c.b16 %v2355, %v2351
  %v2532 = vpack.c.b16 %v2356, %v2352
  %v2533 = vpack.c.b16 %v2357, %v2353
  %v2534 = vpack.c.b16 %v2362, %v2358
  %v2535 = vpack.c.b16 %v2363, %v2359
  %v2536 = vpack.c.b16 %v2364, %v2360
  %v2537 = vpack.c.b16 %v2365, %v2361
  %v2538 = vpack.c.b16 %v2370, %v2366
  %v2539 = vpack.c.b16 %v2371, %v2367
  %v2540 = vpack.c.b16 %v2372, %v2368
  %v2541 = vpack.c.b16 %v2373, %v2369
  %v2542 = vpack.c.b16 %v2378, %v2374
  %v2543 = vpack.c.b16 %v2379, %v2375
  %v2544 = vpack.c.b16 %v2380, %v2376
  %v2545 = vpack.c.b16 %v2381, %v2377
  %v2546 = vpack.c.b16 %v2386, %v2382
  %v2547 = vpack.c.b16 %v2387, %v2383
  %v2548 = vpack.c.b16 %v2388, %v2384
  %v2549 = vpack.c.b16 %v2389, %v2385
  %v2550 = vpack.c.b16 %v2394, %v2390
  %v2551 = vpack.c.b16 %v2395, %v2391
  %v2552 = vpack.c.b16 %v2396, %v2392
  %v2553 = vpack.c.b16 %v2397, %v2393
  %v2554 = vpack.c.b16 %v2402, %v2398
  %v2555 = vpack.c.b16 %v2403, %v2399
  %v2556 = vpack.c.b16 %v2404, %v2400
  %v2557 = vpack.c.b16 %v2405, %v2401
  %v2558 = vpack.c.b16 %v2410, %v2406
  %v2559 = vpack.c.b16 %v2411, %v2407
  %v2560 = vpack.c.b16 %v2412, %v2408
  %v2561 = vpack.c.b16 %v2413, %v2409
  %v2562 = vpack.c.b16 %v2418, %v2414
  %v2563 = vpack.c.b16 %v2419, %v2415
  %v2564 = vpack.c.b16 %v2420, %v2416
  %v2565 = vpack.c.b16 %v2421, %v2417
  %v2566 = vpack.c.b16 %v2426, %v2422
  %v2567 = vpack.c.b16 %v2427, %v2423
  %v2568 = vpack.c.b16 %v2428, %v2424
  %v2569 = vpack.c.b16 %v2429, %v2425
  %v2570 = vpack.c.b16 %v2434, %v2430
  %v2571 = vpack.c.b16 %v2435, %v2431
  %v2572 = vpack.c.b16 %v2436, %v2432
  %v2573 = vpack.c.b16 %v2437, %v2433
  %v2574 = vpack.c.b16 %v2442, %v2438
  %v2575 = vpack.c.b16 %v2443, %v2439
  %v2576 = vpack.c.b16 %v2444, %v2440
  %v2577 = vpack.c.b16 %v2445, %v2441
  %v2578 = vpack.c.b16 %v2450, %v2446
  %v2579 = vpack.c.b16 %v2451, %v2447
  %v2580 = vpack.c.b16 %v2452, %v2448
  %v2581 = vpack.c.b16 %v2453, %v2449
  %2710 = vmatprep.subr.bf16.mxu0 %v2483
  %2711 = vmatpush1.bf16.msra.mxu0 %v2482
  %2712 = vmatprep.subr.bf16.mxu0 %v2479
  %2713 = vmatpush1.bf16.msra.mxu0 %v2478
  %2714 = vmatprep.subr.bf16.mxu0 %v2475
  %2715 = vmatpush1.bf16.msra.mxu0 %v2474
  %2716 = vmatprep.subr.bf16.mxu0 %v2471
  %2717 = vmatpush1.bf16.msra.mxu0 %v2470
  %2718 = vmatprep.subr.bf16.mxu0 %v2467
  %2719 = vmatpush1.bf16.msra.mxu0 %v2466
  %2720 = vmatprep.subr.bf16.mxu0 %v2463
  %2721 = vmatpush1.bf16.msra.mxu0 %v2462
  %2722 = vmatprep.subr.bf16.mxu0 %v2459
  %2723 = vmatpush1.bf16.msra.mxu0 %v2458
  %2724 = vmatprep.subr.bf16.mxu0 %v2455
  %2725 = vmatpush1.bf16.msra.mxu0 %v2454
  %2726 = vmatprep.subr.bf16.mxu0 %v2515
  %2727 = vmatpush2.bf16.msra.mxu0 %v2514
  %2728 = vmatprep.subr.bf16.mxu0 %v2511
  %2729 = vmatpush2.bf16.msra.mxu0 %v2510
  %2730 = vmatprep.subr.bf16.mxu0 %v2507
  %2731 = vmatpush2.bf16.msra.mxu0 %v2506
  %2732 = vmatprep.subr.bf16.mxu0 %v2503
  %2733 = vmatpush2.bf16.msra.mxu0 %v2502
  %2734 = vmatprep.subr.bf16.mxu0 %v2499
  %2735 = vmatpush2.bf16.msra.mxu0 %v2498
  %2736 = vmatprep.subr.bf16.mxu0 %v2495
  %2737 = vmatpush2.bf16.msra.mxu0 %v2494
  %2738 = vmatprep.subr.bf16.mxu0 %v2491
  %2739 = vmatpush2.bf16.msra.mxu0 %v2490
  %2740 = vmatprep.subr.bf16.mxu0 %v2487
  %2741 = vmatpush2.bf16.msra.mxu0 %v2486
  %2742 = vmatprep.mubr.bf16.mxu0 %v1939
  %2743 = vmatmul.mubr.bf16.gmra.mxu0 %v1938
  %v2744 = vpop.f32.mrf.mxu0
  %v2745 = vadd.f32 0.0, %v2744
  %v2746 = vpop.f32.mrf.mxu0
  %v2747 = vadd.f32 0.0, %v2746
  %v2748 = vpop.f32.mrf.mxu0
  %v2749 = vpop.f32.mrf.mxu0
  %2750 = vdwg.mxu0
  %2751 = vmatprep.subr.bf16.mxu0 %v2547
  %2752 = vmatpush1.bf16.msra.mxu0 %v2546
  %2753 = vmatprep.subr.bf16.mxu0 %v2543
  %2754 = vmatpush1.bf16.msra.mxu0 %v2542
  %2755 = vmatprep.subr.bf16.mxu0 %v2539
  %2756 = vmatpush1.bf16.msra.mxu0 %v2538
  %2757 = vmatprep.subr.bf16.mxu0 %v2535
  %2758 = vmatpush1.bf16.msra.mxu0 %v2534
  %2759 = vmatprep.subr.bf16.mxu0 %v2531
  %2760 = vmatpush1.bf16.msra.mxu0 %v2530
  %2761 = vmatprep.subr.bf16.mxu0 %v2527
  %2762 = vmatpush1.bf16.msra.mxu0 %v2526
  %2763 = vmatprep.subr.bf16.mxu0 %v2523
  %2764 = vmatpush1.bf16.msra.mxu0 %v2522
  %2765 = vmatprep.subr.bf16.mxu0 %v2519
  %2766 = vmatpush1.bf16.msra.mxu0 %v2518
  %2767 = vmatprep.subr.bf16.mxu0 %v2579
  %2768 = vmatpush2.bf16.msra.mxu0 %v2578
  %2769 = vmatprep.subr.bf16.mxu0 %v2575
  %2770 = vmatpush2.bf16.msra.mxu0 %v2574
  %2771 = vmatprep.subr.bf16.mxu0 %v2571
  %2772 = vmatpush2.bf16.msra.mxu0 %v2570
  %2773 = vmatprep.subr.bf16.mxu0 %v2567
  %2774 = vmatpush2.bf16.msra.mxu0 %v2566
  %2775 = vmatprep.subr.bf16.mxu0 %v2563
  %2776 = vmatpush2.bf16.msra.mxu0 %v2562
  %2777 = vmatprep.subr.bf16.mxu0 %v2559
  %2778 = vmatpush2.bf16.msra.mxu0 %v2558
  %2779 = vmatprep.subr.bf16.mxu0 %v2555
  %2780 = vmatpush2.bf16.msra.mxu0 %v2554
  %2781 = vmatprep.subr.bf16.mxu0 %v2551
  %2782 = vmatpush2.bf16.msra.mxu0 %v2550
  %2783 = vmatprep.mubr.bf16.mxu0 %v1941
  %2784 = vmatmul.mubr.bf16.gmra.mxu0 %v1940
  %v2785 = vpop.f32.mrf.mxu0
  %v2786 = vadd.f32 %v2745, %v2785
  %v2787 = vpop.f32.mrf.mxu0
  %v2788 = vadd.f32 %v2747, %v2787
  %v2789 = vpop.f32.mrf.mxu0
  %v2790 = vpop.f32.mrf.mxu0
  %2791 = vdwg.mxu0
  %2792 = vmatprep.subr.bf16.mxu0 %v2485
  %2793 = vmatpush1.bf16.msra.mxu0 %v2484
  %2794 = vmatprep.subr.bf16.mxu0 %v2481
  %2795 = vmatpush1.bf16.msra.mxu0 %v2480
  %2796 = vmatprep.subr.bf16.mxu0 %v2477
  %2797 = vmatpush1.bf16.msra.mxu0 %v2476
  %2798 = vmatprep.subr.bf16.mxu0 %v2473
  %2799 = vmatpush1.bf16.msra.mxu0 %v2472
  %2800 = vmatprep.subr.bf16.mxu0 %v2469
  %2801 = vmatpush1.bf16.msra.mxu0 %v2468
  %2802 = vmatprep.subr.bf16.mxu0 %v2465
  %2803 = vmatpush1.bf16.msra.mxu0 %v2464
  %2804 = vmatprep.subr.bf16.mxu0 %v2461
  %2805 = vmatpush1.bf16.msra.mxu0 %v2460
  %2806 = vmatprep.subr.bf16.mxu0 %v2457
  %2807 = vmatpush1.bf16.msra.mxu0 %v2456
  %2808 = vmatprep.subr.bf16.mxu0 %v2517
  %2809 = vmatpush2.bf16.msra.mxu0 %v2516
  %2810 = vmatprep.subr.bf16.mxu0 %v2513
  %2811 = vmatpush2.bf16.msra.mxu0 %v2512
  %2812 = vmatprep.subr.bf16.mxu0 %v2509
  %2813 = vmatpush2.bf16.msra.mxu0 %v2508
  %2814 = vmatprep.subr.bf16.mxu0 %v2505
  %2815 = vmatpush2.bf16.msra.mxu0 %v2504
  %2816 = vmatprep.subr.bf16.mxu0 %v2501
  %2817 = vmatpush2.bf16.msra.mxu0 %v2500
  %2818 = vmatprep.subr.bf16.mxu0 %v2497
  %2819 = vmatpush2.bf16.msra.mxu0 %v2496
  %2820 = vmatprep.subr.bf16.mxu0 %v2493
  %2821 = vmatpush2.bf16.msra.mxu0 %v2492
  %2822 = vmatprep.subr.bf16.mxu0 %v2489
  %2823 = vmatpush2.bf16.msra.mxu0 %v2488
  %2824 = vmatprep.mubr.bf16.mxu0 %v1939
  %2825 = vmatmul.mubr.bf16.gmra.mxu0 %v1938
  %v2826 = vpop.f32.mrf.mxu0
  %v2827 = vadd.f32 0.0, %v2826
  %v2828 = vpop.f32.mrf.mxu0
  %v2829 = vadd.f32 0.0, %v2828
  %v2830 = vpop.f32.mrf.mxu0
  %v2831 = vpop.f32.mrf.mxu0
  %2832 = vdwg.mxu0
  %2833 = vmatprep.subr.bf16.mxu0 %v2549
  %2834 = vmatpush1.bf16.msra.mxu0 %v2548
  %2835 = vmatprep.subr.bf16.mxu0 %v2545
  %2836 = vmatpush1.bf16.msra.mxu0 %v2544
  %2837 = vmatprep.subr.bf16.mxu0 %v2541
  %2838 = vmatpush1.bf16.msra.mxu0 %v2540
  %2839 = vmatprep.subr.bf16.mxu0 %v2537
  %2840 = vmatpush1.bf16.msra.mxu0 %v2536
  %2841 = vmatprep.subr.bf16.mxu0 %v2533
  %2842 = vmatpush1.bf16.msra.mxu0 %v2532
  %2843 = vmatprep.subr.bf16.mxu0 %v2529
  %2844 = vmatpush1.bf16.msra.mxu0 %v2528
  %2845 = vmatprep.subr.bf16.mxu0 %v2525
  %2846 = vmatpush1.bf16.msra.mxu0 %v2524
  %2847 = vmatprep.subr.bf16.mxu0 %v2521
  %2848 = vmatpush1.bf16.msra.mxu0 %v2520
  %2849 = vmatprep.subr.bf16.mxu0 %v2581
  %2850 = vmatpush2.bf16.msra.mxu0 %v2580
  %2851 = vmatprep.subr.bf16.mxu0 %v2577
  %2852 = vmatpush2.bf16.msra.mxu0 %v2576
  %2853 = vmatprep.subr.bf16.mxu0 %v2573
  %2854 = vmatpush2.bf16.msra.mxu0 %v2572
  %2855 = vmatprep.subr.bf16.mxu0 %v2569
  %2856 = vmatpush2.bf16.msra.mxu0 %v2568
  %2857 = vmatprep.subr.bf16.mxu0 %v2565
  %2858 = vmatpush2.bf16.msra.mxu0 %v2564
  %2859 = vmatprep.subr.bf16.mxu0 %v2561
  %2860 = vmatpush2.bf16.msra.mxu0 %v2560
  %2861 = vmatprep.subr.bf16.mxu0 %v2557
  %2862 = vmatpush2.bf16.msra.mxu0 %v2556
  %2863 = vmatprep.subr.bf16.mxu0 %v2553
  %2864 = vmatpush2.bf16.msra.mxu0 %v2552
  %2865 = vmatprep.mubr.bf16.mxu0 %v1941
  %2866 = vmatmul.mubr.bf16.gmra.mxu0 %v1940
  %v2867 = vpop.f32.mrf.mxu0
  %v2868 = vadd.f32 %v2827, %v2867
  %v2869 = vpop.f32.mrf.mxu0
  %v2870 = vadd.f32 %v2829, %v2869
  %v2871 = vpop.f32.mrf.mxu0
  %v2872 = vpop.f32.mrf.mxu0
  %2873 = vdwg.mxu0
  %v2878 = vcombine.low %v2786, %v2788
  %v2879 = vcombine.low %v2868, %v2870
  %2882 = vst [vmem:[%s4] sm:$0xff] %v2878
  %2883 = vst [vmem:[%s4 + $0x8] sm:$0xff] %v2879
  %p2884 = scmp.eq.s32.totalorder 0, 0
  // Predicated region
  $region18: #{encoder_forward.2} parent=0 // pred_check
    %p2885 = pneg %p2884
  $region19: #{encoder_forward.2} parent=0 // pred_check_branch
    %2887 = sbr.rel (%p2885) target = $region21
  $region20: #{encoder_forward.2} parent=0 // pred_region
    %v2888 = vlaneseq
    %vm2889 = vcmp.ge.s32.totalorder %v2888, 0
    %vm2890 = vcmp.lt.s32.totalorder %v2888, 512
    %vm2891 = vmand %vm2889, %vm2890
    %2892 = vst.msk [vmem:[%s5] sm:$0xf] %vm2891, 0.0
    %2893 = vst.msk [vmem:[%s6] sm:$0xf] %vm2891, 0.0
  $region21: #{encoder_forward.2} parent=0 // pred_fallthru
    _
  %v2894 = vld [vmem:[%s5] sm:$0xf]
  %vm2895 = vcmask 1043456
  %v2896 = vsel %vm2895, %v2786, 0.0
  %v2897 = vrot.slane %v2896, 4
  %v2898 = vadd.f32 %v2896, %v2897
  %v2899 = vrot.slane %v2898, 2
  %v2900 = vadd.f32 %v2898, %v2899
  %v2901 = vrot.slane %v2900, 1
  %v2902 = vadd.f32 %v2900, %v2901
  %v2903 = vsel %vm2895, %v2788, 0.0
  %v2904 = vrot.slane %v2903, 4
  %v2905 = vadd.f32 %v2903, %v2904
  %v2906 = vrot.slane %v2905, 2
  %v2907 = vadd.f32 %v2905, %v2906
  %v2908 = vrot.slane %v2907, 1
  %v2909 = vadd.f32 %v2907, %v2908
  %v2910 = vsel %vm2895, %v2868, 0.0
  %v2911 = vrot.slane %v2910, 4
  %v2912 = vadd.f32 %v2910, %v2911
  %v2913 = vrot.slane %v2912, 2
  %v2914 = vadd.f32 %v2912, %v2913
  %v2915 = vrot.slane %v2914, 1
  %v2916 = vadd.f32 %v2914, %v2915
  %v2917 = vsel %vm2895, %v2870, 0.0
  %v2918 = vrot.slane %v2917, 4
  %v2919 = vadd.f32 %v2917, %v2918
  %v2920 = vrot.slane %v2919, 2
  %v2921 = vadd.f32 %v2919, %v2920
  %v2922 = vrot.slane %v2921, 1
  %v2923 = vadd.f32 %v2921, %v2922
  %v2928 = vcombine.low %v2902, %v2909
  %v2929 = vcombine.low %v2916, %v2923
  %v2931 = vunpack.c.l.s4 1966171168
  %v2932 = vunpack.c.0.s8 %v2931
  %v2933 = vlaneseq
  %v2934 = vshrl.u32 %v2933, 7
  %v2935 = vsub.s32 %v2932, %v2934
  %v2936 = vrot.slane %v2928, %v2935
  %v2938 = vunpack.c.l.s4 1966171168
  %v2939 = vunpack.c.0.s8 %v2938
  %v2940 = vlaneseq
  %v2941 = vshrl.u32 %v2940, 7
  %v2942 = vsub.s32 %v2939, %v2941
  %v2943 = vrot.slane %v2929, %v2942
  %v2944 = vcombine.low %v2936, %v2943
  %v2946 = vunpack.c.l.s4 1966171168
  %v2947 = vunpack.c.0.s8 %v2946
  %v2948 = vlaneseq
  %v2949 = vshrl.u32 %v2948, 7
  %v2950 = vsub.s32 %v2947, %v2949
  %v2951 = vrot.slane %v2944, %v2950
  %v2953 = vadd.f32 %v2894, %v2951
  %v2954 = vlaneseq
  %vm2955 = vcmp.ge.s32.totalorder %v2954, 0
  %vm2956 = vcmp.lt.s32.totalorder %v2954, 512
  %vm2957 = vmand %vm2955, %vm2956
  %2958 = vst.msk [vmem:[%s5] sm:$0xf] %vm2957, %v2953
  %v2959 = vld [vmem:[%s6] sm:$0xf]
  %v2960 = vmul.f32 %v2786, %v2786
  %v2961 = vmul.f32 %v2788, %v2788
  %v2962 = vmul.f32 %v2868, %v2868
  %v2963 = vmul.f32 %v2870, %v2870
  %v2964 = vsel %vm2895, %v2960, 0.0
  %v2965 = vrot.slane %v2964, 4
  %v2966 = vadd.f32 %v2964, %v2965
  %v2967 = vrot.slane %v2966, 2
  %v2968 = vadd.f32 %v2966, %v2967
  %v2969 = vrot.slane %v2968, 1
  %v2970 = vadd.f32 %v2968, %v2969
  %v2971 = vsel %vm2895, %v2961, 0.0
  %v2972 = vrot.slane %v2971, 4
  %v2973 = vadd.f32 %v2971, %v2972
  %v2974 = vrot.slane %v2973, 2
  %v2975 = vadd.f32 %v2973, %v2974
  %v2976 = vrot.slane %v2975, 1
  %v2977 = vadd.f32 %v2975, %v2976
  %v2978 = vsel %vm2895, %v2962, 0.0
  %v2979 = vrot.slane %v2978, 4
  %v2980 = vadd.f32 %v2978, %v2979
  %v2981 = vrot.slane %v2980, 2
  %v2982 = vadd.f32 %v2980, %v2981
  %v2983 = vrot.slane %v2982, 1
  %v2984 = vadd.f32 %v2982, %v2983
  %v2985 = vsel %vm2895, %v2963, 0.0
  %v2986 = vrot.slane %v2985, 4
  %v2987 = vadd.f32 %v2985, %v2986
  %v2988 = vrot.slane %v2987, 2
  %v2989 = vadd.f32 %v2987, %v2988
  %v2990 = vrot.slane %v2989, 1
  %v2991 = vadd.f32 %v2989, %v2990
  %v2996 = vcombine.low %v2970, %v2977
  %v2997 = vcombine.low %v2984, %v2991
  %v2999 = vunpack.c.l.s4 1966171168
  %v3000 = vunpack.c.0.s8 %v2999
  %v3001 = vlaneseq
  %v3002 = vshrl.u32 %v3001, 7
  %v3003 = vsub.s32 %v3000, %v3002
  %v3004 = vrot.slane %v2996, %v3003
  %v3006 = vunpack.c.l.s4 1966171168
  %v3007 = vunpack.c.0.s8 %v3006
  %v3008 = vlaneseq
  %v3009 = vshrl.u32 %v3008, 7
  %v3010 = vsub.s32 %v3007, %v3009
  %v3011 = vrot.slane %v2997, %v3010
  %v3012 = vcombine.low %v3004, %v3011
  %v3014 = vunpack.c.l.s4 1966171168
  %v3015 = vunpack.c.0.s8 %v3014
  %v3016 = vlaneseq
  %v3017 = vshrl.u32 %v3016, 7
  %v3018 = vsub.s32 %v3015, %v3017
  %v3019 = vrot.slane %v3012, %v3018
  %v3021 = vadd.f32 %v2959, %v3019
  %3022 = vst.msk [vmem:[%s6] sm:$0xf] %vm2957, %v3021
  // Predicated region
  $region22: #{encoder_forward.2} parent=0 // pred_check
    _
  $region23: #{encoder_forward.2} parent=0 // pred_check_branch
    %3024 = sbr.rel (0) target = $region25
  $region24: #{encoder_forward.2} parent=0 // pred_region
    _
  $region25: #{encoder_forward.2} parent=0 // pred_fallthru
    _
  // Predicated region
  $region26: #{encoder_forward.2} parent=0 // pred_check
    _
  $region27: #{encoder_forward.2} parent=0 // pred_check_branch
    %3026 = sbr.rel (0) target = $region29
  $region28: #{encoder_forward.2} parent=0 // pred_region
    _
  $region29: #{encoder_forward.2} parent=0 // pred_fallthru
    _
  // Predicated region
  $region30: #{encoder_forward.2} parent=0 // pred_check
    _
  $region31: #{encoder_forward.2} parent=0 // pred_check_branch
    %3028 = sbr.rel (0) target = $region33
  $region32: #{encoder_forward.2} parent=0 // pred_region
    _
  $region33: #{encoder_forward.2} parent=0 // pred_fallthru
    _
  // Predicated region
  $region34: #{encoder_forward.2} parent=0 // pred_check
    _
  $region35: #{encoder_forward.2} parent=0 // pred_check_branch
    %3030 = sbr.rel (0) target = $region37
  $region36: #{encoder_forward.2} parent=0 // pred_region
    _
  $region37: #{encoder_forward.2} parent=0 // pred_fallthru
    _
  // Predicated region
  $region38: #{encoder_forward.2} parent=0 // pred_check
    _
  $region39: #{encoder_forward.2} parent=0 // pred_check_branch
    %3032 = sbr.rel (0) target = $region41
  $region40: #{encoder_forward.2} parent=0 // pred_region
    _
  $region41: #{encoder_forward.2} parent=0 // pred_fallthru
    _
  // Predicated region
  $region42: #{encoder_forward.2} parent=0 // pred_check
    _
  $region43: #{encoder_forward.2} parent=0 // pred_check_branch
    %3034 = sbr.rel (0) target = $region45
  $region44: #{encoder_forward.2} parent=0 // pred_region
    _
  $region45: #{encoder_forward.2} parent=0 // pred_fallthru
    _

// kernel: encoder_forward.3
$region0: #{encoder_forward.3}
  #allocation0 [shape = 'u32[]', space=smem, size = 0x4, offset = 0x4, fixed_abs, tag = 'smem constant byte address 0x4 - core index']
  #allocation1 [shape = 'u32[144,128]{1,0:T(1,128)}', space=vmem, size = 0x12000, scoped, tag = 'internal scratch']
  %s0 = inlined_call_operand.vmem [shape: f32[4,512], index: 0, kind: input, shape index: {}]
  %s1 = inlined_call_operand.vmem [shape: f32[1,512], index: 1, kind: input, shape index: {}]
  %s2 = inlined_call_operand.vmem [shape: f32[1,512], index: 2, kind: input, shape index: {}]
  %s3 = inlined_call_operand.vmem [shape: f32[1,512], index: 3, kind: input, shape index: {}]
  %s4 = inlined_call_operand.vmem [shape: f32[1,512], index: 4, kind: input, shape index: {}]
  %s5 = inlined_call_operand.vmem [shape: bf16[512,256], index: 5, kind: input, shape index: {}]
  %s6 = inlined_call_operand.vmem [shape: f32[1,256], index: 6, kind: input, shape index: {}]
  %s7 = inlined_call_operand.vmem [shape: f32[4,128], index: 7, kind: input, shape index: {}]
  %s8 = inlined_call_operand.hbm [shape: f32[4,128], index: 8, kind: output, shape index: {}]
  %s9 = sld [smem:[#allocation0]]
  $region42: #{encoder_forward.3} parent=0
    _
  %s11 = ssub.s32 1, %s9
  %s12 = scalar_select 0, %s11, %s9
  $region1: #{encoder_forward.3} parent=0
    #allocation2 [shape = 'u8[2048]{0}', space=vmem, size = 0x800, scoped, tag = 'output window, operand 0, single buffered']
    #allocation3 [shape = 's32[1]{0}', space=sflag, size = 0x4, scoped, tag = 'scoped memory for encoder_forward.3']
    %13 = vsyncpa [#allocation3], 0
    // Predicated region
    $region2: #{encoder_forward.3} parent=1 // pred_check
      _
    $region3: #{encoder_forward.3} parent=1 // pred_check_branch
      %15 = sbr.rel (0) target = $region5
    $region4: #{encoder_forward.3} parent=1 // pred_region
      _
    $region5: #{encoder_forward.3} parent=1 // pred_fallthru
      _
    // Predicated region
    $region6: #{encoder_forward.3} parent=1 // pred_check
      _
    $region7: #{encoder_forward.3} parent=1 // pred_check_branch
      %17 = sbr.rel (0) target = $region9
    $region8: #{encoder_forward.3} parent=1 // pred_region
      _
    $region9: #{encoder_forward.3} parent=1 // pred_fallthru
      _
    // Predicated region
    $region10: #{encoder_forward.3} parent=1 // pred_check
      _
    $region11: #{encoder_forward.3} parent=1 // pred_check_branch
      %19 = sbr.rel (0) target = $region13
    $region12: #{encoder_forward.3} parent=1 // pred_region
      _
    $region13: #{encoder_forward.3} parent=1 // pred_fallthru
      _
    // Predicated region
    $region14: #{encoder_forward.3} parent=1 // pred_check
      _
    $region15: #{encoder_forward.3} parent=1 // pred_check_branch
      %21 = sbr.rel (0) target = $region17
    $region16: #{encoder_forward.3} parent=1 // pred_region
      _
    $region17: #{encoder_forward.3} parent=1 // pred_fallthru
      _
    // Predicated region
    $region18: #{encoder_forward.3} parent=1 // pred_check
      _
    $region19: #{encoder_forward.3} parent=1 // pred_check_branch
      %23 = sbr.rel (0) target = $region21
    $region20: #{encoder_forward.3} parent=1 // pred_region
      _
    $region21: #{encoder_forward.3} parent=1 // pred_fallthru
      _
    // Predicated region
    $region22: #{encoder_forward.3} parent=1 // pred_check
      _
    $region23: #{encoder_forward.3} parent=1 // pred_check_branch
      %25 = sbr.rel (0) target = $region25
    $region24: #{encoder_forward.3} parent=1 // pred_region
      _
    $region25: #{encoder_forward.3} parent=1 // pred_fallthru
      _
    // Predicated region
    $region26: #{encoder_forward.3} parent=1 // pred_check
      _
    $region27: #{encoder_forward.3} parent=1 // pred_check_branch
      %27 = sbr.rel (0) target = $region29
    $region28: #{encoder_forward.3} parent=1 // pred_region
      _
    $region29: #{encoder_forward.3} parent=1 // pred_fallthru
      _
    // Predicated region
    $region30: #{encoder_forward.3} parent=1 // pred_check
      _
    $region31: #{encoder_forward.3} parent=1 // pred_check_branch
      %29 = sbr.rel (0) target = $region33
    $region32: #{encoder_forward.3} parent=1 // pred_region
      _
    $region33: #{encoder_forward.3} parent=1 // pred_fallthru
      _
    %v30 = vld [vmem:[%s1] sm:$0xf]
    %v31 = vmul.f32 %v30, 0.25
    %v32 = vld [vmem:[%s2] sm:$0xf]
    %v33 = vmul.f32 %v32, 0.25
    %v34 = vmul.f32 %v31, %v31
    %v35 = vsub.f32 %v33, %v34
    %v36 = vmax.f32 %v35, 0.0
    %v37 = vld [vmem:[%s3] sm:$0xf]
    %v38 = vadd.f32 %v36, 1e-05
    %v39 = vrsqrt.pop %v38
    %v40 = vmul.f32 %v37, %v39
    %v41 = vld [vmem:[%s4] sm:$0xf]
    %v42 = vmul.f32 %v31, %v40
    %v43 = vsub.f32 %v41, %v42
    %v44 = vld [vmem:[%s0] sm:$0xff]
    %v45 = vld [vmem:[%s0 + $0x8] sm:$0xff]
    %v47 = vlaneseq
    %v48 = vshrl.u32 %v47, 7
    %v49 = vsub.s32 0, %v48
    %v50 = vrot.slane %v40, %v49
    %v51 = vlaneseq
    %v52 = vshrl.u32 %v51, 7
    %v53 = vsub.s32 1, %v52
    %v54 = vrot.slane %v40, %v53
    %v55 = vlaneseq
    %v56 = vshrl.u32 %v55, 7
    %v57 = vsub.s32 2, %v56
    %v58 = vrot.slane %v40, %v57
    %v59 = vlaneseq
    %v60 = vshrl.u32 %v59, 7
    %v61 = vsub.s32 3, %v60
    %v62 = vrot.slane %v40, %v61
    %v63 = vcombine.low %v50, %v54
    %v64 = vcombine.low %v58, %v62
    %v67 = vmul.f32 %v44, %v63
    %v68 = vmul.f32 %v45, %v64
    %v70 = vlaneseq
    %v71 = vshrl.u32 %v70, 7
    %v72 = vsub.s32 0, %v71
    %v73 = vrot.slane %v43, %v72
    %v74 = vlaneseq
    %v75 = vshrl.u32 %v74, 7
    %v76 = vsub.s32 1, %v75
    %v77 = vrot.slane %v43, %v76
    %v78 = vlaneseq
    %v79 = vshrl.u32 %v78, 7
    %v80 = vsub.s32 2, %v79
    %v81 = vrot.slane %v43, %v80
    %v82 = vlaneseq
    %v83 = vshrl.u32 %v82, 7
    %v84 = vsub.s32 3, %v83
    %v85 = vrot.slane %v43, %v84
    %v86 = vcombine.low %v73, %v77
    %v87 = vcombine.low %v81, %v85
    %v90 = vadd.f32 %v67, %v86
    %v91 = vadd.f32 %v68, %v87
    %v92 = vmul.f32 %v90, 0.2
    %v93 = vmul.f32 %v91, 0.2
    %v94 = vmax.f32 %v90, %v92
    %v95 = vmax.f32 %v91, %v93
    %v98 = vcombine.high %v94, %v94
    %v99 = vcombine.high %v95, %v95
    %v102 = vpack.c.bf16 %v94, %v94
    %v103 = vpack.c.bf16 %v98, %v98
    %v104 = vpack.c.bf16 %v95, %v95
    %v105 = vpack.c.bf16 %v99, %v99
    %v106 = vld [vmem:[%s5] sm:$0xff]
    %v107 = vld [vmem:[%s5 + $0x8] sm:$0xff]
    %v108 = vld [vmem:[%s5 + $0x10] sm:$0xff]
    %v109 = vld [vmem:[%s5 + $0x18] sm:$0xff]
    %v110 = vld [vmem:[%s5 + $0x20] sm:$0xff]
    %v111 = vld [vmem:[%s5 + $0x28] sm:$0xff]
    %v112 = vld [vmem:[%s5 + $0x30] sm:$0xff]
    %v113 = vld [vmem:[%s5 + $0x38] sm:$0xff]
    %v114 = vld [vmem:[%s5 + $0x40] sm:$0xff]
    %v115 = vld [vmem:[%s5 + $0x48] sm:$0xff]
    %v116 = vld [vmem:[%s5 + $0x50] sm:$0xff]
    %v117 = vld [vmem:[%s5 + $0x58] sm:$0xff]
    %v118 = vld [vmem:[%s5 + $0x60] sm:$0xff]
    %v119 = vld [vmem:[%s5 + $0x68] sm:$0xff]
    %v120 = vld [vmem:[%s5 + $0x70] sm:$0xff]
    %v121 = vld [vmem:[%s5 + $0x78] sm:$0xff]
    %v122 = vld [vmem:[%s5 + $0x80] sm:$0xff]
    %v123 = vld [vmem:[%s5 + $0x88] sm:$0xff]
    %v124 = vld [vmem:[%s5 + $0x90] sm:$0xff]
    %v125 = vld [vmem:[%s5 + $0x98] sm:$0xff]
    %v126 = vld [vmem:[%s5 + $0xa0] sm:$0xff]
    %v127 = vld [vmem:[%s5 + $0xa8] sm:$0xff]
    %v128 = vld [vmem:[%s5 + $0xb0] sm:$0xff]
    %v129 = vld [vmem:[%s5 + $0xb8] sm:$0xff]
    %v130 = vld [vmem:[%s5 + $0xc0] sm:$0xff]
    %v131 = vld [vmem:[%s5 + $0xc8] sm:$0xff]
    %v132 = vld [vmem:[%s5 + $0xd0] sm:$0xff]
    %v133 = vld [vmem:[%s5 + $0xd8] sm:$0xff]
    %v134 = vld [vmem:[%s5 + $0xe0] sm:$0xff]
    %v135 = vld [vmem:[%s5 + $0xe8] sm:$0xff]
    %v136 = vld [vmem:[%s5 + $0xf0] sm:$0xff]
    %v137 = vld [vmem:[%s5 + $0xf8] sm:$0xff]
    %v138 = vld [vmem:[%s5 + $0x100] sm:$0xff]
    %v139 = vld [vmem:[%s5 + $0x108] sm:$0xff]
    %v140 = vld [vmem:[%s5 + $0x110] sm:$0xff]
    %v141 = vld [vmem:[%s5 + $0x118] sm:$0xff]
    %v142 = vld [vmem:[%s5 + $0x120] sm:$0xff]
    %v143 = vld [vmem:[%s5 + $0x128] sm:$0xff]
    %v144 = vld [vmem:[%s5 + $0x130] sm:$0xff]
    %v145 = vld [vmem:[%s5 + $0x138] sm:$0xff]
    %v146 = vld [vmem:[%s5 + $0x140] sm:$0xff]
    %v147 = vld [vmem:[%s5 + $0x148] sm:$0xff]
    %v148 = vld [vmem:[%s5 + $0x150] sm:$0xff]
    %v149 = vld [vmem:[%s5 + $0x158] sm:$0xff]
    %v150 = vld [vmem:[%s5 + $0x160] sm:$0xff]
    %v151 = vld [vmem:[%s5 + $0x168] sm:$0xff]
    %v152 = vld [vmem:[%s5 + $0x170] sm:$0xff]
    %v153 = vld [vmem:[%s5 + $0x178] sm:$0xff]
    %v154 = vld [vmem:[%s5 + $0x180] sm:$0xff]
    %v155 = vld [vmem:[%s5 + $0x188] sm:$0xff]
    %v156 = vld [vmem:[%s5 + $0x190] sm:$0xff]
    %v157 = vld [vmem:[%s5 + $0x198] sm:$0xff]
    %v158 = vld [vmem:[%s5 + $0x1a0] sm:$0xff]
    %v159 = vld [vmem:[%s5 + $0x1a8] sm:$0xff]
    %v160 = vld [vmem:[%s5 + $0x1b0] sm:$0xff]
    %v161 = vld [vmem:[%s5 + $0x1b8] sm:$0xff]
    %v162 = vld [vmem:[%s5 + $0x1c0] sm:$0xff]
    %v163 = vld [vmem:[%s5 + $0x1c8] sm:$0xff]
    %v164 = vld [vmem:[%s5 + $0x1d0] sm:$0xff]
    %v165 = vld [vmem:[%s5 + $0x1d8] sm:$0xff]
    %v166 = vld [vmem:[%s5 + $0x1e0] sm:$0xff]
    %v167 = vld [vmem:[%s5 + $0x1e8] sm:$0xff]
    %v168 = vld [vmem:[%s5 + $0x1f0] sm:$0xff]
    %v169 = vld [vmem:[%s5 + $0x1f8] sm:$0xff]
    %v170 = vld [vmem:[%s6] sm:$0x3]
    %v172 = vlaneseq
    %v173 = vshrl.u32 %v172, 7
    %v174 = vsub.s32 0, %v173
    %v175 = vrot.slane %v170, %v174
    %v176 = vlaneseq
    %v177 = vshrl.u32 %v176, 7
    %v178 = vsub.s32 1, %v177
    %v179 = vrot.slane %v170, %v178
    %v246 = vunpack.c.l.b16 %v106
    %v247 = vunpack.c.h.b16 %v106
    %v248 = vunpack.c.l.b16 %v107
    %v249 = vunpack.c.h.b16 %v107
    %v250 = vunpack.c.l.b16 %v108
    %v251 = vunpack.c.h.b16 %v108
    %v252 = vunpack.c.l.b16 %v109
    %v253 = vunpack.c.h.b16 %v109
    %v254 = vunpack.c.l.b16 %v110
    %v255 = vunpack.c.h.b16 %v110
    %v256 = vunpack.c.l.b16 %v111
    %v257 = vunpack.c.h.b16 %v111
    %v258 = vunpack.c.l.b16 %v112
    %v259 = vunpack.c.h.b16 %v112
    %v260 = vunpack.c.l.b16 %v113
    %v261 = vunpack.c.h.b16 %v113
    %v262 = vunpack.c.l.b16 %v114
    %v263 = vunpack.c.h.b16 %v114
    %v264 = vunpack.c.l.b16 %v115
    %v265 = vunpack.c.h.b16 %v115
    %v266 = vunpack.c.l.b16 %v116
    %v267 = vunpack.c.h.b16 %v116
    %v268 = vunpack.c.l.b16 %v117
    %v269 = vunpack.c.h.b16 %v117
    %v270 = vunpack.c.l.b16 %v118
    %v271 = vunpack.c.h.b16 %v118
    %v272 = vunpack.c.l.b16 %v119
    %v273 = vunpack.c.h.b16 %v119
    %v274 = vunpack.c.l.b16 %v120
    %v275 = vunpack.c.h.b16 %v120
    %v276 = vunpack.c.l.b16 %v121
    %v277 = vunpack.c.h.b16 %v121
    %v278 = vunpack.c.l.b16 %v122
    %v279 = vunpack.c.h.b16 %v122
    %v280 = vunpack.c.l.b16 %v123
    %v281 = vunpack.c.h.b16 %v123
    %v282 = vunpack.c.l.b16 %v124
    %v283 = vunpack.c.h.b16 %v124
    %v284 = vunpack.c.l.b16 %v125
    %v285 = vunpack.c.h.b16 %v125
    %v286 = vunpack.c.l.b16 %v126
    %v287 = vunpack.c.h.b16 %v126
    %v288 = vunpack.c.l.b16 %v127
    %v289 = vunpack.c.h.b16 %v127
    %v290 = vunpack.c.l.b16 %v128
    %v291 = vunpack.c.h.b16 %v128
    %v292 = vunpack.c.l.b16 %v129
    %v293 = vunpack.c.h.b16 %v129
    %v294 = vunpack.c.l.b16 %v130
    %v295 = vunpack.c.h.b16 %v130
    %v296 = vunpack.c.l.b16 %v131
    %v297 = vunpack.c.h.b16 %v131
    %v298 = vunpack.c.l.b16 %v132
    %v299 = vunpack.c.h.b16 %v132
    %v300 = vunpack.c.l.b16 %v133
    %v301 = vunpack.c.h.b16 %v133
    %v302 = vunpack.c.l.b16 %v134
    %v303 = vunpack.c.h.b16 %v134
    %v304 = vunpack.c.l.b16 %v135
    %v305 = vunpack.c.h.b16 %v135
    %v306 = vunpack.c.l.b16 %v136
    %v307 = vunpack.c.h.b16 %v136
    %v308 = vunpack.c.l.b16 %v137
    %v309 = vunpack.c.h.b16 %v137
    %v310 = vunpack.c.l.b16 %v138
    %v311 = vunpack.c.h.b16 %v138
    %v312 = vunpack.c.l.b16 %v139
    %v313 = vunpack.c.h.b16 %v139
    %v314 = vunpack.c.l.b16 %v140
    %v315 = vunpack.c.h.b16 %v140
    %v316 = vunpack.c.l.b16 %v141
    %v317 = vunpack.c.h.b16 %v141
    %v318 = vunpack.c.l.b16 %v142
    %v319 = vunpack.c.h.b16 %v142
    %v320 = vunpack.c.l.b16 %v143
    %v321 = vunpack.c.h.b16 %v143
    %v322 = vunpack.c.l.b16 %v144
    %v323 = vunpack.c.h.b16 %v144
    %v324 = vunpack.c.l.b16 %v145
    %v325 = vunpack.c.h.b16 %v145
    %v326 = vunpack.c.l.b16 %v146
    %v327 = vunpack.c.h.b16 %v146
    %v328 = vunpack.c.l.b16 %v147
    %v329 = vunpack.c.h.b16 %v147
    %v330 = vunpack.c.l.b16 %v148
    %v331 = vunpack.c.h.b16 %v148
    %v332 = vunpack.c.l.b16 %v149
    %v333 = vunpack.c.h.b16 %v149
    %v334 = vunpack.c.l.b16 %v150
    %v335 = vunpack.c.h.b16 %v150
    %v336 = vunpack.c.l.b16 %v151
    %v337 = vunpack.c.h.b16 %v151
    %v338 = vunpack.c.l.b16 %v152
    %v339 = vunpack.c.h.b16 %v152
    %v340 = vunpack.c.l.b16 %v153
    %v341 = vunpack.c.h.b16 %v153
    %v342 = vunpack.c.l.b16 %v154
    %v343 = vunpack.c.h.b16 %v154
    %v344 = vunpack.c.l.b16 %v155
    %v345 = vunpack.c.h.b16 %v155
    %v346 = vunpack.c.l.b16 %v156
    %v347 = vunpack.c.h.b16 %v156
    %v348 = vunpack.c.l.b16 %v157
    %v349 = vunpack.c.h.b16 %v157
    %v350 = vunpack.c.l.b16 %v158
    %v351 = vunpack.c.h.b16 %v158
    %v352 = vunpack.c.l.b16 %v159
    %v353 = vunpack.c.h.b16 %v159
    %v354 = vunpack.c.l.b16 %v160
    %v355 = vunpack.c.h.b16 %v160
    %v356 = vunpack.c.l.b16 %v161
    %v357 = vunpack.c.h.b16 %v161
    %v358 = vunpack.c.l.b16 %v162
    %v359 = vunpack.c.h.b16 %v162
    %v360 = vunpack.c.l.b16 %v163
    %v361 = vunpack.c.h.b16 %v163
    %v362 = vunpack.c.l.b16 %v164
    %v363 = vunpack.c.h.b16 %v164
    %v364 = vunpack.c.l.b16 %v165
    %v365 = vunpack.c.h.b16 %v165
    %v366 = vunpack.c.l.b16 %v166
    %v367 = vunpack.c.h.b16 %v166
    %v368 = vunpack.c.l.b16 %v167
    %v369 = vunpack.c.h.b16 %v167
    %v370 = vunpack.c.l.b16 %v168
    %v371 = vunpack.c.h.b16 %v168
    %v372 = vunpack.c.l.b16 %v169
    %v373 = vunpack.c.h.b16 %v169
    %v374 = vpack.c.b16 %v248, %v246
    %v375 = vpack.c.b16 %v249, %v247
    %v376 = vpack.c.b16 %v252, %v250
    %v377 = vpack.c.b16 %v253, %v251
    %v378 = vpack.c.b16 %v256, %v254
    %v379 = vpack.c.b16 %v257, %v255
    %v380 = vpack.c.b16 %v260, %v258
    %v381 = vpack.c.b16 %v261, %v259
    %v382 = vpack.c.b16 %v264, %v262
    %v383 = vpack.c.b16 %v265, %v263
    %v384 = vpack.c.b16 %v268, %v266
    %v385 = vpack.c.b16 %v269, %v267
    %v386 = vpack.c.b16 %v272, %v270
    %v387 = vpack.c.b16 %v273, %v271
    %v388 = vpack.c.b16 %v276, %v274
    %v389 = vpack.c.b16 %v277, %v275
    %v390 = vpack.c.b16 %v280, %v278
    %v391 = vpack.c.b16 %v281, %v279
    %v392 = vpack.c.b16 %v284, %v282
    %v393 = vpack.c.b16 %v285, %v283
    %v394 = vpack.c.b16 %v288, %v286
    %v395 = vpack.c.b16 %v289, %v287
    %v396 = vpack.c.b16 %v292, %v290
    %v397 = vpack.c.b16 %v293, %v291
    %v398 = vpack.c.b16 %v296, %v294
    %v399 = vpack.c.b16 %v297, %v295
    %v400 = vpack.c.b16 %v300, %v298
    %v401 = vpack.c.b16 %v301, %v299
    %v402 = vpack.c.b16 %v304, %v302
    %v403 = vpack.c.b16 %v305, %v303
    %v404 = vpack.c.b16 %v308, %v306
    %v405 = vpack.c.b16 %v309, %v307
    %v406 = vpack.c.b16 %v312, %v310
    %v407 = vpack.c.b16 %v313, %v311
    %v408 = vpack.c.b16 %v316, %v314
    %v409 = vpack.c.b16 %v317, %v315
    %v410 = vpack.c.b16 %v320, %v318
    %v411 = vpack.c.b16 %v321, %v319
    %v412 = vpack.c.b16 %v324, %v322
    %v413 = vpack.c.b16 %v325, %v323
    %v414 = vpack.c.b16 %v328, %v326
    %v415 = vpack.c.b16 %v329, %v327
    %v416 = vpack.c.b16 %v332, %v330
    %v417 = vpack.c.b16 %v333, %v331
    %v418 = vpack.c.b16 %v336, %v334
    %v419 = vpack.c.b16 %v337, %v335
    %v420 = vpack.c.b16 %v340, %v338
    %v421 = vpack.c.b16 %v341, %v339
    %v422 = vpack.c.b16 %v344, %v342
    %v423 = vpack.c.b16 %v345, %v343
    %v424 = vpack.c.b16 %v348, %v346
    %v425 = vpack.c.b16 %v349, %v347
    %v426 = vpack.c.b16 %v352, %v350
    %v427 = vpack.c.b16 %v353, %v351
    %v428 = vpack.c.b16 %v356, %v354
    %v429 = vpack.c.b16 %v357, %v355
    %v430 = vpack.c.b16 %v360, %v358
    %v431 = vpack.c.b16 %v361, %v359
    %v432 = vpack.c.b16 %v364, %v362
    %v433 = vpack.c.b16 %v365, %v363
    %v434 = vpack.c.b16 %v368, %v366
    %v435 = vpack.c.b16 %v369, %v367
    %v436 = vpack.c.b16 %v372, %v370
    %v437 = vpack.c.b16 %v373, %v371
    %502 = vmatprep.subr.bf16.mxu0 %v389
    %503 = vmatpush1.bf16.msra.mxu0 %v388
    %504 = vmatprep.subr.bf16.mxu0 %v387
    %505 = vmatpush1.bf16.msra.mxu0 %v386
    %506 = vmatprep.subr.bf16.mxu0 %v385
    %507 = vmatpush1.bf16.msra.mxu0 %v384
    %508 = vmatprep.subr.bf16.mxu0 %v383
    %509 = vmatpush1.bf16.msra.mxu0 %v382
    %510 = vmatprep.subr.bf16.mxu0 %v381
    %511 = vmatpush1.bf16.msra.mxu0 %v380
    %512 = vmatprep.subr.bf16.mxu0 %v379
    %513 = vmatpush1.bf16.msra.mxu0 %v378
    %514 = vmatprep.subr.bf16.mxu0 %v377
    %515 = vmatpush1.bf16.msra.mxu0 %v376
    %516 = vmatprep.subr.bf16.mxu0 %v375
    %517 = vmatpush1.bf16.msra.mxu0 %v374
    %518 = vmatprep.subr.bf16.mxu0 %v405
    %519 = vmatpush2.bf16.msra.mxu0 %v404
    %520 = vmatprep.subr.bf16.mxu0 %v403
    %521 = vmatpush2.bf16.msra.mxu0 %v402
    %522 = vmatprep.subr.bf16.mxu0 %v401
    %523 = vmatpush2.bf16.msra.mxu0 %v400
    %524 = vmatprep.subr.bf16.mxu0 %v399
    %525 = vmatpush2.bf16.msra.mxu0 %v398
    %526 = vmatprep.subr.bf16.mxu0 %v397
    %527 = vmatpush2.bf16.msra.mxu0 %v396
    %528 = vmatprep.subr.bf16.mxu0 %v395
    %529 = vmatpush2.bf16.msra.mxu0 %v394
    %530 = vmatprep.subr.bf16.mxu0 %v393
    %531 = vmatpush2.bf16.msra.mxu0 %v392
    %532 = vmatprep.subr.bf16.mxu0 %v391
    %533 = vmatpush2.bf16.msra.mxu0 %v390
    %534 = vmatprep.mubr.bf16.mxu0 %v103
    %535 = vmatmul.mubr.bf16.gmra.mxu0 %v102
    %v536 = vpop.f32.mrf.mxu0
    %v537 = vadd.f32 %v175, %v536
    %v538 = vpop.f32.mrf.mxu0
    %v539 = vadd.f32 %v179, %v538
    %v540 = vpop.f32.mrf.mxu0
    %v541 = vpop.f32.mrf.mxu0
    %542 = vdwg.mxu0
    %543 = vmatprep.subr.bf16.mxu0 %v421
    %544 = vmatpush1.bf16.msra.mxu0 %v420
    %545 = vmatprep.subr.bf16.mxu0 %v419
    %546 = vmatpush1.bf16.msra.mxu0 %v418
    %547 = vmatprep.subr.bf16.mxu0 %v417
    %548 = vmatpush1.bf16.msra.mxu0 %v416
    %549 = vmatprep.subr.bf16.mxu0 %v415
    %550 = vmatpush1.bf16.msra.mxu0 %v414
    %551 = vmatprep.subr.bf16.mxu0 %v413
    %552 = vmatpush1.bf16.msra.mxu0 %v412
    %553 = vmatprep.subr.bf16.mxu0 %v411
    %554 = vmatpush1.bf16.msra.mxu0 %v410
    %555 = vmatprep.subr.bf16.mxu0 %v409
    %556 = vmatpush1.bf16.msra.mxu0 %v408
    %557 = vmatprep.subr.bf16.mxu0 %v407
    %558 = vmatpush1.bf16.msra.mxu0 %v406
    %559 = vmatprep.subr.bf16.mxu0 %v437
    %560 = vmatpush2.bf16.msra.mxu0 %v436
    %561 = vmatprep.subr.bf16.mxu0 %v435
    %562 = vmatpush2.bf16.msra.mxu0 %v434
    %563 = vmatprep.subr.bf16.mxu0 %v433
    %564 = vmatpush2.bf16.msra.mxu0 %v432
    %565 = vmatprep.subr.bf16.mxu0 %v431
    %566 = vmatpush2.bf16.msra.mxu0 %v430
    %567 = vmatprep.subr.bf16.mxu0 %v429
    %568 = vmatpush2.bf16.msra.mxu0 %v428
    %569 = vmatprep.subr.bf16.mxu0 %v427
    %570 = vmatpush2.bf16.msra.mxu0 %v426
    %571 = vmatprep.subr.bf16.mxu0 %v425
    %572 = vmatpush2.bf16.msra.mxu0 %v424
    %573 = vmatprep.subr.bf16.mxu0 %v423
    %574 = vmatpush2.bf16.msra.mxu0 %v422
    %575 = vmatprep.mubr.bf16.mxu0 %v105
    %576 = vmatmul.mubr.bf16.gmra.mxu0 %v104
    %v577 = vpop.f32.mrf.mxu0
    %v578 = vadd.f32 %v537, %v577
    %v579 = vpop.f32.mrf.mxu0
    %v580 = vadd.f32 %v539, %v579
    %v581 = vpop.f32.mrf.mxu0
    %v582 = vpop.f32.mrf.mxu0
    %583 = vdwg.mxu0
    %v584 = vld [vmem:[%s7] sm:$0xf]
    %v585 = vmul.f32 %v580, 0.5
    %v586 = vmul.f32 %v585, 1.442695
    %v587 = vpow.pop %v586
    %v588 = vmul.f32 %v584, %v587
    %v589 = vadd.f32 %v588, %v578
    %590 = vst [vmem:[#allocation2] sm:$0xf] %v589
    // Predicated region
    $region34: #{encoder_forward.3} parent=1 // pred_check
      _
    $region35: #{encoder_forward.3} parent=1 // pred_check_branch
      %592 = sbr.rel (0) target = $region37
    $region36: #{encoder_forward.3} parent=1 // pred_region
      %s594 = ssub.s32 64, 64
      %595 = vsyncadd [#allocation3], %s594
      %s597 = sshll.u32 [#allocation2], 4
      %s598 = int_to_ptr.vmem [resolvable:$true] %s597
      %600 = dma.vmem_to_hbm [thread:$0]  %s598, 64, %s8, [#allocation3]
    $region37: #{encoder_forward.3} parent=1 // pred_fallthru
      _
    // Predicated region
    $region38: #{encoder_forward.3} parent=1 // pred_check
      _
    $region39: #{encoder_forward.3} parent=1 // pred_check_branch
      %602 = sbr.rel (0) target = $region41
    $region40: #{encoder_forward.3} parent=1 // pred_region
      %603 = dma.done [#allocation3], 64
    $region41: #{encoder_forward.3} parent=1 // pred_fallthru
      _
    %604 = vsyncpa [#allocation3], 1

</llo_original>
